<compile_context>
chip_gen: v7x
topology: tpu7x:2x2x1
jax: 0.10.0
libtpu: 0.0.40
codegen_flags: <defaults>
</compile_context>

<pallas_src>
import numpy as np
import jax
import jax.numpy as jnp
from jax.experimental import pallas as pl
from jax.experimental.pallas import tpu as pltpu  # noqa: F401 (kept for TPU-specific tuning hooks)

EPS = 1e-5

_ENC_NP = 10   # wqkv, wo, w1, b1, w2, b2, g1, bt1, g2, bt2
_DEC_NP = 14   # wqkv1, wo1, wqkv2, wo2, w1, b1, w2, b2, g1, bt1, g2, bt2, g3, bt3


# ---------------------------------------------------------------------------
# in-kernel math helpers (traced inside the fused Pallas kernel)
# ---------------------------------------------------------------------------
def _layernorm(x, g, b):
    mu = jnp.mean(x, axis=-1, keepdims=True)
    var = jnp.mean((x - mu) ** 2, axis=-1, keepdims=True)
    return (x - mu) * jax.lax.rsqrt(var + EPS) * g + b


def _softmax(x):
    m = jnp.max(x, axis=-1, keepdims=True)
    e = jnp.exp(x - m)
    denom = jnp.sum(e, axis=-1, keepdims=True)
    return e * pl.reciprocal(denom, approx=True)


def _elu(x):
    return jnp.where(x > 0, x, jnp.exp(jnp.minimum(x, 0.0)) - 1.0)


def _attention(xq2, xkv2, wqkv, wo, *, B, Sq, Skv, A, D, self_attn):
    """Single-head attention on batch-folded (B*S, D) activations.

    wqkv = concat([Wq (D,A), Wk (D,A), Wv (D,D)], axis=1) -> (D, 2A+D).
    Self-attention does one fused projection dot; cross-attention fuses K|V.
    """
    if self_attn:
        qkv = jnp.dot(xq2, wqkv, preferred_element_type=jnp.float32)      # (B*Sq, 2A+D)
        q2 = qkv[:, :A]
        k2 = qkv[:, A:2 * A]
        v2 = qkv[:, 2 * A:]
    else:
        q2 = jnp.dot(xq2, wqkv[:, :A], preferred_element_type=jnp.float32)   # (B*Sq, A)
        kv = jnp.dot(xkv2, wqkv[:, A:], preferred_element_type=jnp.float32)  # (B*Skv, A+D)
        k2 = kv[:, :A]
        v2 = kv[:, A:]

    # leading-dim-only reshapes (layout trivial) for per-batch attention
    q = q2.reshape(B, Sq, A)
    k = k2.reshape(B, Skv, A)
    v = v2.reshape(B, Skv, D)

    # QK^T via einsum contracting last axes (no explicit transpose)
    s = jnp.einsum('bqa,bka->bqk', q, k,
                   preferred_element_type=jnp.float32) * (1.0 / float(np.sqrt(A)))
    p = _softmax(s)
    a = jnp.einsum('bqk,bkd->bqd', p, v, preferred_element_type=jnp.float32)
    a2 = a.reshape(B * Sq, D)
    return jnp.dot(a2, wo, preferred_element_type=jnp.float32)            # (B*Sq, D)


def _encoder_layer(x2, prm, *, B, S, A, D):
    wqkv, wo, w1, b1, w2, b2, g1, bt1, g2, bt2 = prm
    a = _attention(x2, x2, wqkv, wo, B=B, Sq=S, Skv=S, A=A, D=D, self_attn=True)
    x2 = _layernorm(x2 + a, g1, bt1)
    h = _elu(jnp.dot(x2, w2, preferred_element_type=jnp.float32) + b2)
    a = jnp.dot(h, w1, preferred_element_type=jnp.float32) + b1
    return _layernorm(x2 + a, g2, bt2)


def _decoder_layer(x2, e2, prm, *, B, Sd, Se, A, D):
    (wqkv1, wo1, wqkv2, wo2, w1, b1, w2, b2,
     g1, bt1, g2, bt2, g3, bt3) = prm
    a = _attention(x2, x2, wqkv1, wo1, B=B, Sq=Sd, Skv=Sd, A=A, D=D, self_attn=True)
    x2 = _layernorm(x2 + a, g1, bt1)
    a = _attention(x2, e2, wqkv2, wo2, B=B, Sq=Sd, Skv=Se, A=A, D=D, self_attn=False)
    x2 = _layernorm(x2 + a, g2, bt2)
    h = _elu(jnp.dot(x2, w2, preferred_element_type=jnp.float32) + b2)
    a = jnp.dot(h, w1, preferred_element_type=jnp.float32) + b1
    return _layernorm(x2 + a, g3, bt3)


# ---------------------------------------------------------------------------
# single fused kernel for the whole forward pass
# ---------------------------------------------------------------------------
def make_fused_kernel(*, B, S_enc, S_dec, D, A, n_enc, n_dec):
    def kernel(*refs):
        o_ref = refs[-1]
        (x_enc_ref, x_dec_ref, pe_ref,
         enc_w_ref, enc_b_ref, dec_w_ref, dec_b_ref,
         out_w_ref, out_b_ref) = refs[:9]
        layer_refs = refs[9:-1]

        # --- encoder input projection + positional encoding (batch folded) ---
        xe = x_enc_ref[...].reshape(B * S_enc, -1)                      # (B*Se, Fe)
        e2 = (jnp.dot(xe, enc_w_ref[...], preferred_element_type=jnp.float32)
              + enc_b_ref[...] + pe_ref[...])                           # (B*Se, D)

        off = 0
        for _ in range(n_enc):
            prm = [layer_refs[off + i][...] for i in range(_ENC_NP)]
            off += _ENC_NP
            e2 = _encoder_layer(e2, prm, B=B, S=S_enc, A=A, D=D)

        # --- decoder input projection (no positional encoding, no zeros DMA) --
        xd = x_dec_ref[...].reshape(B * S_dec, -1)                      # (B*Sd, Fd_in)
        d2 = (jnp.dot(xd, dec_w_ref[...], preferred_element_type=jnp.float32)
              + dec_b_ref[...])                                         # (B*Sd, D)

        for _ in range(n_dec):
            prm = [layer_refs[off + i][...] for i in range(_DEC_NP)]
            off += _DEC_NP
            d2 = _decoder_layer(d2, e2, prm, B=B, Sd=S_dec, Se=S_enc, A=A, D=D)

        # --- flatten(start_dim=1) + out_fc, fused (no extra pallas_call) -----
        # out[b] = concat_s(d[b, s, :]) @ Wout + bout, computed as a fully
        # static sum of tiny row-block matmuls (avoids sublane->lane reshape).
        out_w = out_w_ref[...]                                          # (Sd*D, Fout)
        out_b = out_b_ref[...]                                          # (1, Fout)
        rows = []
        for b in range(B):
            acc = out_b
            for s in range(S_dec):
                r = b * S_dec + s
                acc = acc + jnp.dot(d2[r:r + 1, :],
                                    out_w[s * D:(s + 1) * D, :],
                                    preferred_element_type=jnp.float32)
            rows.append(acc)
        o_ref[...] = jnp.concatenate(rows, axis=0)                      # (B, Fout)

    return kernel


# ---------------------------------------------------------------------------
# wrapper: ONE pallas_call, everything VMEM-resident, no grid
# ---------------------------------------------------------------------------
def transformer_forward(params, x_enc, x_dec):
    B, S_enc, _ = x_enc.shape
    _, S_dec, _ = x_dec.shape
    D = params["enc_in_w"].shape[1]
    A = (params["encs"][0]["wqkv"].shape[1] - D) // 2
    n_enc = len(params["encs"])
    n_dec = len(params["decs"])
    F_out = params["out_w"].shape[1]

    # positional encoding, pre-tiled to the batch-folded (B*S_enc, D) layout
    pe_tiled = jnp.tile(_positional_encoding(S_enc, D), (B, 1))

    inputs = [x_enc, x_dec, pe_tiled,
              params["enc_in_w"], params["enc_in_b"],
              params["dec_in_w"], params["dec_in_b"],
              params["out_w"], params["out_b"]]
    for p in params["encs"]:
        inputs += [p["wqkv"], p["wo"], p["w1"], p["b1"], p["w2"], p["b2"],
                   p["g1"], p["beta1"], p["g2"], p["beta2"]]
    for p in params["decs"]:
        inputs += [p["a1"]["wqkv"], p["a1"]["wo"], p["a2"]["wqkv"], p["a2"]["wo"],
                   p["w1"], p["b1"], p["w2"], p["b2"],
                   p["g1"], p["beta1"], p["g2"], p["beta2"], p["g3"], p["beta3"]]

    kernel = make_fused_kernel(B=B, S_enc=S_enc, S_dec=S_dec, D=D, A=A,
                               n_enc=n_enc, n_dec=n_dec)

    # Single invocation: no grid; every operand is a whole-array VMEM block
    # (total resident footprint is far below VMEM on v5e/v6e/v7x).
    return pl.pallas_call(
        kernel,
        out_shape=jax.ShapeDtypeStruct((B, F_out), jnp.float32),
    )(*inputs)


# ---------------------------------------------------------------------------
# deterministic parameter initialization (torch-Linear-style uniform)
# ---------------------------------------------------------------------------
def _uniform(key, shape, fan_in):
    bound = 1.0 / np.sqrt(fan_in)
    return jax.random.uniform(key, shape, jnp.float32, -bound, bound)


def _init_attn(key, D, A):
    ks = jax.random.split(key, 4)
    wq = _uniform(ks[0], (D, A), D)   # Query: Linear(D, A, bias=False)
    wk = _uniform(ks[1], (D, A), D)   # Key
    wv = _uniform(ks[2], (D, D), D)   # Value: Linear(D, D, bias=False)
    wo = _uniform(ks[3], (D, D), D)   # MHA output fc (bias=False)
    return dict(wqkv=jnp.concatenate([wq, wk, wv], axis=1),  # fused (D, 2A+D)
                wo=wo)


def _init_enc_layer(key, D, A):
    ks = jax.random.split(key, 5)
    p = _init_attn(ks[0], D, A)
    p["w1"] = _uniform(ks[1], (D, D), D)
    p["b1"] = _uniform(ks[2], (1, D), D)
    p["w2"] = _uniform(ks[3], (D, D), D)
    p["b2"] = _uniform(ks[4], (1, D), D)
    p["g1"], p["beta1"] = jnp.ones((1, D)), jnp.zeros((1, D))
    p["g2"], p["beta2"] = jnp.ones((1, D)), jnp.zeros((1, D))
    return p


def _init_dec_layer(key, D, A):
    ks = jax.random.split(key, 6)
    p = dict(a1=_init_attn(ks[0], D, A), a2=_init_attn(ks[1], D, A))
    p["w1"] = _uniform(ks[2], (D, D), D)
    p["b1"] = _uniform(ks[3], (1, D), D)
    p["w2"] = _uniform(ks[4], (D, D), D)
    p["b2"] = _uniform(ks[5], (1, D), D)
    for i in (1, 2, 3):
        p[f"g{i}"], p[f"beta{i}"] = jnp.ones((1, D)), jnp.zeros((1, D))
    return p


def _positional_encoding(seq_len, d_model):
    pos = np.arange(seq_len, dtype=np.float32)[:, None]
    div = np.exp(np.arange(0, d_model, 2, dtype=np.float32)
                 * (-np.log(10000.0) / d_model))
    pe = np.zeros((seq_len, d_model), np.float32)
    pe[:, 0::2] = np.sin(pos * div)
    pe[:, 1::2] = np.cos(pos * div)
    return jnp.asarray(pe)


def init_transformer(key, dim_val, dim_attn, feat_enc, feat_dec, seq_len,
                     n_encoder_layers=1, n_decoder_layers=1):
    keys = jax.random.split(key, 6 + n_encoder_layers + n_decoder_layers)
    params = {}
    params["enc_in_w"] = _uniform(keys[0], (feat_enc, dim_val), feat_enc)
    params["enc_in_b"] = _uniform(keys[1], (1, dim_val), feat_enc)
    params["dec_in_w"] = _uniform(keys[2], (feat_dec, dim_val), feat_dec)
    params["dec_in_b"] = _uniform(keys[3], (1, dim_val), feat_dec)
    params["out_w"] = _uniform(keys[4], (seq_len * dim_val, feat_dec), seq_len * dim_val)
    params["out_b"] = _uniform(keys[5], (1, feat_dec), seq_len * dim_val)
    params["encs"] = [_init_enc_layer(keys[6 + i], dim_val, dim_attn)
                      for i in range(n_encoder_layers)]
    params["decs"] = [_init_dec_layer(keys[6 + n_encoder_layers + i], dim_val, dim_attn)
                      for i in range(n_decoder_layers)]
    return params


if __name__ == "__main__":
    dim_val, dim_attn = 32, 16
    input_feat_enc, input_feat_dec = 4, 4
    seq_len = 8
    batch = 2

    key = jax.random.PRNGKey(0)
    kp, ke, kd = jax.random.split(key, 3)
    params = init_transformer(kp, dim_val, dim_attn, input_feat_enc,
                              input_feat_dec, seq_len,
                              n_encoder_layers=1, n_decoder_layers=1)

    x_enc = jax.random.normal(ke, (batch, seq_len, input_feat_enc), jnp.float32)
    x_dec = jax.random.normal(kd, (batch, seq_len, input_feat_dec), jnp.float32)

    out = transformer_forward(params, x_enc, x_dec)
    out = jax.block_until_ready(out)

    assert out.shape == (batch, input_feat_dec), out.shape
    assert np.all(np.isfinite(np.asarray(out)))
    print("KERNEL_OK")
</pallas_src>

<mosaic_0001>
module attributes {stable_mosaic.version = 11 : i64} {
  func.func @kernel(%arg0: memref<2x8x4xf32, #tpu.memory_space<vmem>>, %arg1: memref<2x8x4xf32, #tpu.memory_space<vmem>>, %arg2: memref<16x32xf32, #tpu.memory_space<vmem>>, %arg3: memref<4x32xf32, #tpu.memory_space<vmem>>, %arg4: memref<1x32xf32, #tpu.memory_space<vmem>>, %arg5: memref<4x32xf32, #tpu.memory_space<vmem>>, %arg6: memref<1x32xf32, #tpu.memory_space<vmem>>, %arg7: memref<256x4xf32, #tpu.memory_space<vmem>>, %arg8: memref<1x4xf32, #tpu.memory_space<vmem>>, %arg9: memref<32x64xf32, #tpu.memory_space<vmem>>, %arg10: memref<32x32xf32, #tpu.memory_space<vmem>>, %arg11: memref<32x32xf32, #tpu.memory_space<vmem>>, %arg12: memref<1x32xf32, #tpu.memory_space<vmem>>, %arg13: memref<32x32xf32, #tpu.memory_space<vmem>>, %arg14: memref<1x32xf32, #tpu.memory_space<vmem>>, %arg15: memref<1x32xf32, #tpu.memory_space<vmem>>, %arg16: memref<1x32xf32, #tpu.memory_space<vmem>>, %arg17: memref<1x32xf32, #tpu.memory_space<vmem>>, %arg18: memref<1x32xf32, #tpu.memory_space<vmem>>, %arg19: memref<32x64xf32, #tpu.memory_space<vmem>>, %arg20: memref<32x32xf32, #tpu.memory_space<vmem>>, %arg21: memref<32x64xf32, #tpu.memory_space<vmem>>, %arg22: memref<32x32xf32, #tpu.memory_space<vmem>>, %arg23: memref<32x32xf32, #tpu.memory_space<vmem>>, %arg24: memref<1x32xf32, #tpu.memory_space<vmem>>, %arg25: memref<32x32xf32, #tpu.memory_space<vmem>>, %arg26: memref<1x32xf32, #tpu.memory_space<vmem>>, %arg27: memref<1x32xf32, #tpu.memory_space<vmem>>, %arg28: memref<1x32xf32, #tpu.memory_space<vmem>>, %arg29: memref<1x32xf32, #tpu.memory_space<vmem>>, %arg30: memref<1x32xf32, #tpu.memory_space<vmem>>, %arg31: memref<1x32xf32, #tpu.memory_space<vmem>>, %arg32: memref<1x32xf32, #tpu.memory_space<vmem>>, %arg33: memref<2x4xf32, #tpu.memory_space<vmem>>) attributes {dimension_semantics = [], scalar_prefetch = 0 : i64, scratch_operands = 0 : i64, tpu.core_type = #tpu.core_type<tc>} {
    %c0 = arith.constant 0 : index
    %c0_0 = arith.constant 0 : index
    %c0_1 = arith.constant 0 : index
    %0 = vector.load %arg0[%c0, %c0_0, %c0_1] : memref<2x8x4xf32, #tpu.memory_space<vmem>>, vector<2x8x4xf32>
    %1 = vector.shape_cast %0 : vector<2x8x4xf32> to vector<16x4xf32>
    %c0_2 = arith.constant 0 : index
    %c0_3 = arith.constant 0 : index
    %2 = vector.load %arg3[%c0_2, %c0_3] : memref<4x32xf32, #tpu.memory_space<vmem>>, vector<4x32xf32>
    %cst = arith.constant dense<0.000000e+00> : vector<16x32xf32>
    %3 = tpu.matmul %1, %2, %cst {dimension_numbers = #tpu.dot_dimension_numbers<[1], [0], [0], [1], [0, 0, 1, 1], [], []>} : vector<16x4xf32>, vector<4x32xf32>, vector<16x32xf32> -> vector<16x32xf32>
    %c0_4 = arith.constant 0 : index
    %c0_5 = arith.constant 0 : index
    %4 = vector.load %arg4[%c0_4, %c0_5] : memref<1x32xf32, #tpu.memory_space<vmem>>, vector<1x32xf32>
    %5 = vector.broadcast %4 : vector<1x32xf32> to vector<16x32xf32>
    %6 = arith.addf %3, %5 : vector<16x32xf32>
    %c0_6 = arith.constant 0 : index
    %c0_7 = arith.constant 0 : index
    %7 = vector.load %arg2[%c0_6, %c0_7] : memref<16x32xf32, #tpu.memory_space<vmem>>, vector<16x32xf32>
    %8 = arith.addf %6, %7 : vector<16x32xf32>
    %c0_8 = arith.constant 0 : index
    %c0_9 = arith.constant 0 : index
    %9 = vector.load %arg9[%c0_8, %c0_9] : memref<32x64xf32, #tpu.memory_space<vmem>>, vector<32x64xf32>
    %c0_10 = arith.constant 0 : index
    %c0_11 = arith.constant 0 : index
    %10 = vector.load %arg10[%c0_10, %c0_11] : memref<32x32xf32, #tpu.memory_space<vmem>>, vector<32x32xf32>
    %c0_12 = arith.constant 0 : index
    %c0_13 = arith.constant 0 : index
    %11 = vector.load %arg11[%c0_12, %c0_13] : memref<32x32xf32, #tpu.memory_space<vmem>>, vector<32x32xf32>
    %c0_14 = arith.constant 0 : index
    %c0_15 = arith.constant 0 : index
    %12 = vector.load %arg12[%c0_14, %c0_15] : memref<1x32xf32, #tpu.memory_space<vmem>>, vector<1x32xf32>
    %c0_16 = arith.constant 0 : index
    %c0_17 = arith.constant 0 : index
    %13 = vector.load %arg13[%c0_16, %c0_17] : memref<32x32xf32, #tpu.memory_space<vmem>>, vector<32x32xf32>
    %c0_18 = arith.constant 0 : index
    %c0_19 = arith.constant 0 : index
    %14 = vector.load %arg14[%c0_18, %c0_19] : memref<1x32xf32, #tpu.memory_space<vmem>>, vector<1x32xf32>
    %c0_20 = arith.constant 0 : index
    %c0_21 = arith.constant 0 : index
    %15 = vector.load %arg15[%c0_20, %c0_21] : memref<1x32xf32, #tpu.memory_space<vmem>>, vector<1x32xf32>
    %c0_22 = arith.constant 0 : index
    %c0_23 = arith.constant 0 : index
    %16 = vector.load %arg16[%c0_22, %c0_23] : memref<1x32xf32, #tpu.memory_space<vmem>>, vector<1x32xf32>
    %c0_24 = arith.constant 0 : index
    %c0_25 = arith.constant 0 : index
    %17 = vector.load %arg17[%c0_24, %c0_25] : memref<1x32xf32, #tpu.memory_space<vmem>>, vector<1x32xf32>
    %c0_26 = arith.constant 0 : index
    %c0_27 = arith.constant 0 : index
    %18 = vector.load %arg18[%c0_26, %c0_27] : memref<1x32xf32, #tpu.memory_space<vmem>>, vector<1x32xf32>
    %cst_28 = arith.constant dense<0.000000e+00> : vector<16x64xf32>
    %19 = tpu.matmul %8, %9, %cst_28 {dimension_numbers = #tpu.dot_dimension_numbers<[1], [0], [0], [1], [0, 0, 1, 1], [], []>} : vector<16x32xf32>, vector<32x64xf32>, vector<16x64xf32> -> vector<16x64xf32>
    %20 = vector.extract_strided_slice %19 {offsets = [0, 0], sizes = [16, 16], strides = [1, 1]} : vector<16x64xf32> to vector<16x16xf32>
    %21 = vector.extract_strided_slice %19 {offsets = [0, 16], sizes = [16, 16], strides = [1, 1]} : vector<16x64xf32> to vector<16x16xf32>
    %22 = vector.extract_strided_slice %19 {offsets = [0, 32], sizes = [16, 32], strides = [1, 1]} : vector<16x64xf32> to vector<16x32xf32>
    %23 = vector.shape_cast %20 : vector<16x16xf32> to vector<2x8x16xf32>
    %24 = vector.shape_cast %21 : vector<16x16xf32> to vector<2x8x16xf32>
    %25 = vector.shape_cast %22 : vector<16x32xf32> to vector<2x8x32xf32>
    "tpu.trace_start"() <{level = 10 : i32, message = "bqa,bka->bqk"}> : () -> ()
    %cst_29 = arith.constant dense<0.000000e+00> : vector<2x8x8xf32>
    %26 = tpu.matmul %23, %24, %cst_29 {dimension_numbers = #tpu.dot_dimension_numbers<[2], [2], [1], [1], [0, 0, 0, 1, 1, 1], [0], [0]>} : vector<2x8x16xf32>, vector<2x8x16xf32>, vector<2x8x8xf32> -> vector<2x8x8xf32>
    "tpu.trace_stop"() : () -> ()
    %cst_30 = arith.constant 2.500000e-01 : f32
    %27 = vector.broadcast %cst_30 : f32 to vector<2x8x8xf32>
    %28 = arith.mulf %26, %27 : vector<2x8x8xf32>
    %cst_31 = arith.constant dense<0xFF800000> : vector<2x8xf32>
    %29 = vector.multi_reduction <maximumf>, %28, %cst_31 [2] : vector<2x8x8xf32> to vector<2x8xf32>
    %30 = vector.shape_cast %29 : vector<2x8xf32> to vector<2x8x1xf32>
    %31 = vector.broadcast %30 : vector<2x8x1xf32> to vector<2x8x8xf32>
    %32 = arith.subf %28, %31 : vector<2x8x8xf32>
    %33 = math.exp %32 : vector<2x8x8xf32>
    %cst_32 = arith.constant dense<0.000000e+00> : vector<2x8xf32>
    %34 = vector.multi_reduction <add>, %33, %cst_32 [2] : vector<2x8x8xf32> to vector<2x8xf32>
    %35 = vector.shape_cast %34 : vector<2x8xf32> to vector<2x8x1xf32>
    %36 = tpu.reciprocal %35 {approx = true} : vector<2x8x1xf32> -> vector<2x8x1xf32>
    %37 = vector.broadcast %36 : vector<2x8x1xf32> to vector<2x8x8xf32>
    %38 = arith.mulf %33, %37 : vector<2x8x8xf32>
    "tpu.trace_start"() <{level = 10 : i32, message = "bqk,bkd->bqd"}> : () -> ()
    %cst_33 = arith.constant dense<0.000000e+00> : vector<2x8x32xf32>
    %39 = tpu.matmul %38, %25, %cst_33 {dimension_numbers = #tpu.dot_dimension_numbers<[2], [1], [1], [2], [0, 0, 0, 1, 1, 2], [0], [0]>} : vector<2x8x8xf32>, vector<2x8x32xf32>, vector<2x8x32xf32> -> vector<2x8x32xf32>
    "tpu.trace_stop"() : () -> ()
    %40 = vector.shape_cast %39 : vector<2x8x32xf32> to vector<16x32xf32>
    %cst_34 = arith.constant dense<0.000000e+00> : vector<16x32xf32>
    %41 = tpu.matmul %40, %10, %cst_34 {dimension_numbers = #tpu.dot_dimension_numbers<[1], [0], [0], [1], [0, 0, 1, 1], [], []>} : vector<16x32xf32>, vector<32x32xf32>, vector<16x32xf32> -> vector<16x32xf32>
    %42 = arith.addf %8, %41 : vector<16x32xf32>
    %cst_35 = arith.constant dense<0.000000e+00> : vector<16xf32>
    %43 = vector.multi_reduction <add>, %42, %cst_35 [1] : vector<16x32xf32> to vector<16xf32>
    %44 = vector.shape_cast %43 : vector<16xf32> to vector<16x1xf32>
    %cst_36 = arith.constant 3.200000e+01 : f32
    %45 = vector.broadcast %cst_36 : f32 to vector<16x1xf32>
    %46 = arith.divf %44, %45 : vector<16x1xf32>
    %47 = vector.broadcast %46 : vector<16x1xf32> to vector<16x32xf32>
    %48 = arith.subf %42, %47 : vector<16x32xf32>
    %49 = arith.mulf %48, %48 : vector<16x32xf32>
    %cst_37 = arith.constant dense<0.000000e+00> : vector<16xf32>
    %50 = vector.multi_reduction <add>, %49, %cst_37 [1] : vector<16x32xf32> to vector<16xf32>
    %51 = vector.shape_cast %50 : vector<16xf32> to vector<16x1xf32>
    %cst_38 = arith.constant 3.200000e+01 : f32
    %52 = vector.broadcast %cst_38 : f32 to vector<16x1xf32>
    %53 = arith.divf %51, %52 : vector<16x1xf32>
    %54 = vector.broadcast %46 : vector<16x1xf32> to vector<16x32xf32>
    %55 = arith.subf %42, %54 : vector<16x32xf32>
    %cst_39 = arith.constant 9.99999974E-6 : f32
    %56 = vector.broadcast %cst_39 : f32 to vector<16x1xf32>
    %57 = arith.addf %53, %56 : vector<16x1xf32>
    %58 = math.rsqrt %57 : vector<16x1xf32>
    %59 = vector.broadcast %58 : vector<16x1xf32> to vector<16x32xf32>
    %60 = arith.mulf %55, %59 : vector<16x32xf32>
    %61 = vector.broadcast %15 : vector<1x32xf32> to vector<16x32xf32>
    %62 = arith.mulf %60, %61 : vector<16x32xf32>
    %63 = vector.broadcast %16 : vector<1x32xf32> to vector<16x32xf32>
    %64 = arith.addf %62, %63 : vector<16x32xf32>
    %cst_40 = arith.constant dense<0.000000e+00> : vector<16x32xf32>
    %65 = tpu.matmul %64, %13, %cst_40 {dimension_numbers = #tpu.dot_dimension_numbers<[1], [0], [0], [1], [0, 0, 1, 1], [], []>} : vector<16x32xf32>, vector<32x32xf32>, vector<16x32xf32> -> vector<16x32xf32>
    %66 = vector.broadcast %14 : vector<1x32xf32> to vector<16x32xf32>
    %67 = arith.addf %65, %66 : vector<16x32xf32>
    %cst_41 = arith.constant 0.000000e+00 : f32
    %68 = vector.broadcast %cst_41 : f32 to vector<16x32xf32>
    %69 = arith.cmpf ogt, %67, %68 : vector<16x32xf32>
    %cst_42 = arith.constant 0.000000e+00 : f32
    %70 = vector.broadcast %cst_42 : f32 to vector<16x32xf32>
    %71 = arith.minimumf %67, %70 : vector<16x32xf32>
    %72 = math.exp %71 : vector<16x32xf32>
    %cst_43 = arith.constant 1.000000e+00 : f32
    %73 = vector.broadcast %cst_43 : f32 to vector<16x32xf32>
    %74 = arith.subf %72, %73 : vector<16x32xf32>
    %75 = arith.select %69, %67, %74 : vector<16x32xi1>, vector<16x32xf32>
    %cst_44 = arith.constant dense<0.000000e+00> : vector<16x32xf32>
    %76 = tpu.matmul %75, %11, %cst_44 {dimension_numbers = #tpu.dot_dimension_numbers<[1], [0], [0], [1], [0, 0, 1, 1], [], []>} : vector<16x32xf32>, vector<32x32xf32>, vector<16x32xf32> -> vector<16x32xf32>
    %77 = vector.broadcast %12 : vector<1x32xf32> to vector<16x32xf32>
    %78 = arith.addf %76, %77 : vector<16x32xf32>
    %79 = arith.addf %64, %78 : vector<16x32xf32>
    %cst_45 = arith.constant dense<0.000000e+00> : vector<16xf32>
    %80 = vector.multi_reduction <add>, %79, %cst_45 [1] : vector<16x32xf32> to vector<16xf32>
    %81 = vector.shape_cast %80 : vector<16xf32> to vector<16x1xf32>
    %cst_46 = arith.constant 3.200000e+01 : f32
    %82 = vector.broadcast %cst_46 : f32 to vector<16x1xf32>
    %83 = arith.divf %81, %82 : vector<16x1xf32>
    %84 = vector.broadcast %83 : vector<16x1xf32> to vector<16x32xf32>
    %85 = arith.subf %79, %84 : vector<16x32xf32>
    %86 = arith.mulf %85, %85 : vector<16x32xf32>
    %cst_47 = arith.constant dense<0.000000e+00> : vector<16xf32>
    %87 = vector.multi_reduction <add>, %86, %cst_47 [1] : vector<16x32xf32> to vector<16xf32>
    %88 = vector.shape_cast %87 : vector<16xf32> to vector<16x1xf32>
    %cst_48 = arith.constant 3.200000e+01 : f32
    %89 = vector.broadcast %cst_48 : f32 to vector<16x1xf32>
    %90 = arith.divf %88, %89 : vector<16x1xf32>
    %91 = vector.broadcast %83 : vector<16x1xf32> to vector<16x32xf32>
    %92 = arith.subf %79, %91 : vector<16x32xf32>
    %cst_49 = arith.constant 9.99999974E-6 : f32
    %93 = vector.broadcast %cst_49 : f32 to vector<16x1xf32>
    %94 = arith.addf %90, %93 : vector<16x1xf32>
    %95 = math.rsqrt %94 : vector<16x1xf32>
    %96 = vector.broadcast %95 : vector<16x1xf32> to vector<16x32xf32>
    %97 = arith.mulf %92, %96 : vector<16x32xf32>
    %98 = vector.broadcast %17 : vector<1x32xf32> to vector<16x32xf32>
    %99 = arith.mulf %97, %98 : vector<16x32xf32>
    %100 = vector.broadcast %18 : vector<1x32xf32> to vector<16x32xf32>
    %101 = arith.addf %99, %100 : vector<16x32xf32>
    %c0_50 = arith.constant 0 : index
    %c0_51 = arith.constant 0 : index
    %c0_52 = arith.constant 0 : index
    %102 = vector.load %arg1[%c0_50, %c0_51, %c0_52] : memref<2x8x4xf32, #tpu.memory_space<vmem>>, vector<2x8x4xf32>
    %103 = vector.shape_cast %102 : vector<2x8x4xf32> to vector<16x4xf32>
    %c0_53 = arith.constant 0 : index
    %c0_54 = arith.constant 0 : index
    %104 = vector.load %arg5[%c0_53, %c0_54] : memref<4x32xf32, #tpu.memory_space<vmem>>, vector<4x32xf32>
    %cst_55 = arith.constant dense<0.000000e+00> : vector<16x32xf32>
    %105 = tpu.matmul %103, %104, %cst_55 {dimension_numbers = #tpu.dot_dimension_numbers<[1], [0], [0], [1], [0, 0, 1, 1], [], []>} : vector<16x4xf32>, vector<4x32xf32>, vector<16x32xf32> -> vector<16x32xf32>
    %c0_56 = arith.constant 0 : index
    %c0_57 = arith.constant 0 : index
    %106 = vector.load %arg6[%c0_56, %c0_57] : memref<1x32xf32, #tpu.memory_space<vmem>>, vector<1x32xf32>
    %107 = vector.broadcast %106 : vector<1x32xf32> to vector<16x32xf32>
    %108 = arith.addf %105, %107 : vector<16x32xf32>
    %c0_58 = arith.constant 0 : index
    %c0_59 = arith.constant 0 : index
    %109 = vector.load %arg19[%c0_58, %c0_59] : memref<32x64xf32, #tpu.memory_space<vmem>>, vector<32x64xf32>
    %c0_60 = arith.constant 0 : index
    %c0_61 = arith.constant 0 : index
    %110 = vector.load %arg20[%c0_60, %c0_61] : memref<32x32xf32, #tpu.memory_space<vmem>>, vector<32x32xf32>
    %c0_62 = arith.constant 0 : index
    %c0_63 = arith.constant 0 : index
    %111 = vector.load %arg21[%c0_62, %c0_63] : memref<32x64xf32, #tpu.memory_space<vmem>>, vector<32x64xf32>
    %c0_64 = arith.constant 0 : index
    %c0_65 = arith.constant 0 : index
    %112 = vector.load %arg22[%c0_64, %c0_65] : memref<32x32xf32, #tpu.memory_space<vmem>>, vector<32x32xf32>
    %c0_66 = arith.constant 0 : index
    %c0_67 = arith.constant 0 : index
    %113 = vector.load %arg23[%c0_66, %c0_67] : memref<32x32xf32, #tpu.memory_space<vmem>>, vector<32x32xf32>
    %c0_68 = arith.constant 0 : index
    %c0_69 = arith.constant 0 : index
    %114 = vector.load %arg24[%c0_68, %c0_69] : memref<1x32xf32, #tpu.memory_space<vmem>>, vector<1x32xf32>
    %c0_70 = arith.constant 0 : index
    %c0_71 = arith.constant 0 : index
    %115 = vector.load %arg25[%c0_70, %c0_71] : memref<32x32xf32, #tpu.memory_space<vmem>>, vector<32x32xf32>
    %c0_72 = arith.constant 0 : index
    %c0_73 = arith.constant 0 : index
    %116 = vector.load %arg26[%c0_72, %c0_73] : memref<1x32xf32, #tpu.memory_space<vmem>>, vector<1x32xf32>
    %c0_74 = arith.constant 0 : index
    %c0_75 = arith.constant 0 : index
    %117 = vector.load %arg27[%c0_74, %c0_75] : memref<1x32xf32, #tpu.memory_space<vmem>>, vector<1x32xf32>
    %c0_76 = arith.constant 0 : index
    %c0_77 = arith.constant 0 : index
    %118 = vector.load %arg28[%c0_76, %c0_77] : memref<1x32xf32, #tpu.memory_space<vmem>>, vector<1x32xf32>
    %c0_78 = arith.constant 0 : index
    %c0_79 = arith.constant 0 : index
    %119 = vector.load %arg29[%c0_78, %c0_79] : memref<1x32xf32, #tpu.memory_space<vmem>>, vector<1x32xf32>
    %c0_80 = arith.constant 0 : index
    %c0_81 = arith.constant 0 : index
    %120 = vector.load %arg30[%c0_80, %c0_81] : memref<1x32xf32, #tpu.memory_space<vmem>>, vector<1x32xf32>
    %c0_82 = arith.constant 0 : index
    %c0_83 = arith.constant 0 : index
    %121 = vector.load %arg31[%c0_82, %c0_83] : memref<1x32xf32, #tpu.memory_space<vmem>>, vector<1x32xf32>
    %c0_84 = arith.constant 0 : index
    %c0_85 = arith.constant 0 : index
    %122 = vector.load %arg32[%c0_84, %c0_85] : memref<1x32xf32, #tpu.memory_space<vmem>>, vector<1x32xf32>
    %cst_86 = arith.constant dense<0.000000e+00> : vector<16x64xf32>
    %123 = tpu.matmul %108, %109, %cst_86 {dimension_numbers = #tpu.dot_dimension_numbers<[1], [0], [0], [1], [0, 0, 1, 1], [], []>} : vector<16x32xf32>, vector<32x64xf32>, vector<16x64xf32> -> vector<16x64xf32>
    %124 = vector.extract_strided_slice %123 {offsets = [0, 0], sizes = [16, 16], strides = [1, 1]} : vector<16x64xf32> to vector<16x16xf32>
    %125 = vector.extract_strided_slice %123 {offsets = [0, 16], sizes = [16, 16], strides = [1, 1]} : vector<16x64xf32> to vector<16x16xf32>
    %126 = vector.extract_strided_slice %123 {offsets = [0, 32], sizes = [16, 32], strides = [1, 1]} : vector<16x64xf32> to vector<16x32xf32>
    %127 = vector.shape_cast %124 : vector<16x16xf32> to vector<2x8x16xf32>
    %128 = vector.shape_cast %125 : vector<16x16xf32> to vector<2x8x16xf32>
    %129 = vector.shape_cast %126 : vector<16x32xf32> to vector<2x8x32xf32>
    "tpu.trace_start"() <{level = 10 : i32, message = "bqa,bka->bqk"}> : () -> ()
    %cst_87 = arith.constant dense<0.000000e+00> : vector<2x8x8xf32>
    %130 = tpu.matmul %127, %128, %cst_87 {dimension_numbers = #tpu.dot_dimension_numbers<[2], [2], [1], [1], [0, 0, 0, 1, 1, 1], [0], [0]>} : vector<2x8x16xf32>, vector<2x8x16xf32>, vector<2x8x8xf32> -> vector<2x8x8xf32>
    "tpu.trace_stop"() : () -> ()
    %cst_88 = arith.constant 2.500000e-01 : f32
    %131 = vector.broadcast %cst_88 : f32 to vector<2x8x8xf32>
    %132 = arith.mulf %130, %131 : vector<2x8x8xf32>
    %cst_89 = arith.constant dense<0xFF800000> : vector<2x8xf32>
    %133 = vector.multi_reduction <maximumf>, %132, %cst_89 [2] : vector<2x8x8xf32> to vector<2x8xf32>
    %134 = vector.shape_cast %133 : vector<2x8xf32> to vector<2x8x1xf32>
    %135 = vector.broadcast %134 : vector<2x8x1xf32> to vector<2x8x8xf32>
    %136 = arith.subf %132, %135 : vector<2x8x8xf32>
    %137 = math.exp %136 : vector<2x8x8xf32>
    %cst_90 = arith.constant dense<0.000000e+00> : vector<2x8xf32>
    %138 = vector.multi_reduction <add>, %137, %cst_90 [2] : vector<2x8x8xf32> to vector<2x8xf32>
    %139 = vector.shape_cast %138 : vector<2x8xf32> to vector<2x8x1xf32>
    %140 = tpu.reciprocal %139 {approx = true} : vector<2x8x1xf32> -> vector<2x8x1xf32>
    %141 = vector.broadcast %140 : vector<2x8x1xf32> to vector<2x8x8xf32>
    %142 = arith.mulf %137, %141 : vector<2x8x8xf32>
    "tpu.trace_start"() <{level = 10 : i32, message = "bqk,bkd->bqd"}> : () -> ()
    %cst_91 = arith.constant dense<0.000000e+00> : vector<2x8x32xf32>
    %143 = tpu.matmul %142, %129, %cst_91 {dimension_numbers = #tpu.dot_dimension_numbers<[2], [1], [1], [2], [0, 0, 0, 1, 1, 2], [0], [0]>} : vector<2x8x8xf32>, vector<2x8x32xf32>, vector<2x8x32xf32> -> vector<2x8x32xf32>
    "tpu.trace_stop"() : () -> ()
    %144 = vector.shape_cast %143 : vector<2x8x32xf32> to vector<16x32xf32>
    %cst_92 = arith.constant dense<0.000000e+00> : vector<16x32xf32>
    %145 = tpu.matmul %144, %110, %cst_92 {dimension_numbers = #tpu.dot_dimension_numbers<[1], [0], [0], [1], [0, 0, 1, 1], [], []>} : vector<16x32xf32>, vector<32x32xf32>, vector<16x32xf32> -> vector<16x32xf32>
    %146 = arith.addf %108, %145 : vector<16x32xf32>
    %cst_93 = arith.constant dense<0.000000e+00> : vector<16xf32>
    %147 = vector.multi_reduction <add>, %146, %cst_93 [1] : vector<16x32xf32> to vector<16xf32>
    %148 = vector.shape_cast %147 : vector<16xf32> to vector<16x1xf32>
    %cst_94 = arith.constant 3.200000e+01 : f32
    %149 = vector.broadcast %cst_94 : f32 to vector<16x1xf32>
    %150 = arith.divf %148, %149 : vector<16x1xf32>
    %151 = vector.broadcast %150 : vector<16x1xf32> to vector<16x32xf32>
    %152 = arith.subf %146, %151 : vector<16x32xf32>
    %153 = arith.mulf %152, %152 : vector<16x32xf32>
    %cst_95 = arith.constant dense<0.000000e+00> : vector<16xf32>
    %154 = vector.multi_reduction <add>, %153, %cst_95 [1] : vector<16x32xf32> to vector<16xf32>
    %155 = vector.shape_cast %154 : vector<16xf32> to vector<16x1xf32>
    %cst_96 = arith.constant 3.200000e+01 : f32
    %156 = vector.broadcast %cst_96 : f32 to vector<16x1xf32>
    %157 = arith.divf %155, %156 : vector<16x1xf32>
    %158 = vector.broadcast %150 : vector<16x1xf32> to vector<16x32xf32>
    %159 = arith.subf %146, %158 : vector<16x32xf32>
    %cst_97 = arith.constant 9.99999974E-6 : f32
    %160 = vector.broadcast %cst_97 : f32 to vector<16x1xf32>
    %161 = arith.addf %157, %160 : vector<16x1xf32>
    %162 = math.rsqrt %161 : vector<16x1xf32>
    %163 = vector.broadcast %162 : vector<16x1xf32> to vector<16x32xf32>
    %164 = arith.mulf %159, %163 : vector<16x32xf32>
    %165 = vector.broadcast %117 : vector<1x32xf32> to vector<16x32xf32>
    %166 = arith.mulf %164, %165 : vector<16x32xf32>
    %167 = vector.broadcast %118 : vector<1x32xf32> to vector<16x32xf32>
    %168 = arith.addf %166, %167 : vector<16x32xf32>
    %169 = vector.extract_strided_slice %111 {offsets = [0, 0], sizes = [32, 16], strides = [1, 1]} : vector<32x64xf32> to vector<32x16xf32>
    %cst_98 = arith.constant dense<0.000000e+00> : vector<16x16xf32>
    %170 = tpu.matmul %168, %169, %cst_98 {dimension_numbers = #tpu.dot_dimension_numbers<[1], [0], [0], [1], [0, 0, 1, 1], [], []>} : vector<16x32xf32>, vector<32x16xf32>, vector<16x16xf32> -> vector<16x16xf32>
    %171 = vector.extract_strided_slice %111 {offsets = [0, 16], sizes = [32, 48], strides = [1, 1]} : vector<32x64xf32> to vector<32x48xf32>
    %cst_99 = arith.constant dense<0.000000e+00> : vector<16x48xf32>
    %172 = tpu.matmul %101, %171, %cst_99 {dimension_numbers = #tpu.dot_dimension_numbers<[1], [0], [0], [1], [0, 0, 1, 1], [], []>} : vector<16x32xf32>, vector<32x48xf32>, vector<16x48xf32> -> vector<16x48xf32>
    %173 = vector.extract_strided_slice %172 {offsets = [0, 0], sizes = [16, 16], strides = [1, 1]} : vector<16x48xf32> to vector<16x16xf32>
    %174 = vector.extract_strided_slice %172 {offsets = [0, 16], sizes = [16, 32], strides = [1, 1]} : vector<16x48xf32> to vector<16x32xf32>
    %175 = vector.shape_cast %170 : vector<16x16xf32> to vector<2x8x16xf32>
    %176 = vector.shape_cast %173 : vector<16x16xf32> to vector<2x8x16xf32>
    %177 = vector.shape_cast %174 : vector<16x32xf32> to vector<2x8x32xf32>
    "tpu.trace_start"() <{level = 10 : i32, message = "bqa,bka->bqk"}> : () -> ()
    %cst_100 = arith.constant dense<0.000000e+00> : vector<2x8x8xf32>
    %178 = tpu.matmul %175, %176, %cst_100 {dimension_numbers = #tpu.dot_dimension_numbers<[2], [2], [1], [1], [0, 0, 0, 1, 1, 1], [0], [0]>} : vector<2x8x16xf32>, vector<2x8x16xf32>, vector<2x8x8xf32> -> vector<2x8x8xf32>
    "tpu.trace_stop"() : () -> ()
    %cst_101 = arith.constant 2.500000e-01 : f32
    %179 = vector.broadcast %cst_101 : f32 to vector<2x8x8xf32>
    %180 = arith.mulf %178, %179 : vector<2x8x8xf32>
    %cst_102 = arith.constant dense<0xFF800000> : vector<2x8xf32>
    %181 = vector.multi_reduction <maximumf>, %180, %cst_102 [2] : vector<2x8x8xf32> to vector<2x8xf32>
    %182 = vector.shape_cast %181 : vector<2x8xf32> to vector<2x8x1xf32>
    %183 = vector.broadcast %182 : vector<2x8x1xf32> to vector<2x8x8xf32>
    %184 = arith.subf %180, %183 : vector<2x8x8xf32>
    %185 = math.exp %184 : vector<2x8x8xf32>
    %cst_103 = arith.constant dense<0.000000e+00> : vector<2x8xf32>
    %186 = vector.multi_reduction <add>, %185, %cst_103 [2] : vector<2x8x8xf32> to vector<2x8xf32>
    %187 = vector.shape_cast %186 : vector<2x8xf32> to vector<2x8x1xf32>
    %188 = tpu.reciprocal %187 {approx = true} : vector<2x8x1xf32> -> vector<2x8x1xf32>
    %189 = vector.broadcast %188 : vector<2x8x1xf32> to vector<2x8x8xf32>
    %190 = arith.mulf %185, %189 : vector<2x8x8xf32>
    "tpu.trace_start"() <{level = 10 : i32, message = "bqk,bkd->bqd"}> : () -> ()
    %cst_104 = arith.constant dense<0.000000e+00> : vector<2x8x32xf32>
    %191 = tpu.matmul %190, %177, %cst_104 {dimension_numbers = #tpu.dot_dimension_numbers<[2], [1], [1], [2], [0, 0, 0, 1, 1, 2], [0], [0]>} : vector<2x8x8xf32>, vector<2x8x32xf32>, vector<2x8x32xf32> -> vector<2x8x32xf32>
    "tpu.trace_stop"() : () -> ()
    %192 = vector.shape_cast %191 : vector<2x8x32xf32> to vector<16x32xf32>
    %cst_105 = arith.constant dense<0.000000e+00> : vector<16x32xf32>
    %193 = tpu.matmul %192, %112, %cst_105 {dimension_numbers = #tpu.dot_dimension_numbers<[1], [0], [0], [1], [0, 0, 1, 1], [], []>} : vector<16x32xf32>, vector<32x32xf32>, vector<16x32xf32> -> vector<16x32xf32>
    %194 = arith.addf %168, %193 : vector<16x32xf32>
    %cst_106 = arith.constant dense<0.000000e+00> : vector<16xf32>
    %195 = vector.multi_reduction <add>, %194, %cst_106 [1] : vector<16x32xf32> to vector<16xf32>
    %196 = vector.shape_cast %195 : vector<16xf32> to vector<16x1xf32>
    %cst_107 = arith.constant 3.200000e+01 : f32
    %197 = vector.broadcast %cst_107 : f32 to vector<16x1xf32>
    %198 = arith.divf %196, %197 : vector<16x1xf32>
    %199 = vector.broadcast %198 : vector<16x1xf32> to vector<16x32xf32>
    %200 = arith.subf %194, %199 : vector<16x32xf32>
    %201 = arith.mulf %200, %200 : vector<16x32xf32>
    %cst_108 = arith.constant dense<0.000000e+00> : vector<16xf32>
    %202 = vector.multi_reduction <add>, %201, %cst_108 [1] : vector<16x32xf32> to vector<16xf32>
    %203 = vector.shape_cast %202 : vector<16xf32> to vector<16x1xf32>
    %cst_109 = arith.constant 3.200000e+01 : f32
    %204 = vector.broadcast %cst_109 : f32 to vector<16x1xf32>
    %205 = arith.divf %203, %204 : vector<16x1xf32>
    %206 = vector.broadcast %198 : vector<16x1xf32> to vector<16x32xf32>
    %207 = arith.subf %194, %206 : vector<16x32xf32>
    %cst_110 = arith.constant 9.99999974E-6 : f32
    %208 = vector.broadcast %cst_110 : f32 to vector<16x1xf32>
    %209 = arith.addf %205, %208 : vector<16x1xf32>
    %210 = math.rsqrt %209 : vector<16x1xf32>
    %211 = vector.broadcast %210 : vector<16x1xf32> to vector<16x32xf32>
    %212 = arith.mulf %207, %211 : vector<16x32xf32>
    %213 = vector.broadcast %119 : vector<1x32xf32> to vector<16x32xf32>
    %214 = arith.mulf %212, %213 : vector<16x32xf32>
    %215 = vector.broadcast %120 : vector<1x32xf32> to vector<16x32xf32>
    %216 = arith.addf %214, %215 : vector<16x32xf32>
    %cst_111 = arith.constant dense<0.000000e+00> : vector<16x32xf32>
    %217 = tpu.matmul %216, %115, %cst_111 {dimension_numbers = #tpu.dot_dimension_numbers<[1], [0], [0], [1], [0, 0, 1, 1], [], []>} : vector<16x32xf32>, vector<32x32xf32>, vector<16x32xf32> -> vector<16x32xf32>
    %218 = vector.broadcast %116 : vector<1x32xf32> to vector<16x32xf32>
    %219 = arith.addf %217, %218 : vector<16x32xf32>
    %cst_112 = arith.constant 0.000000e+00 : f32
    %220 = vector.broadcast %cst_112 : f32 to vector<16x32xf32>
    %221 = arith.cmpf ogt, %219, %220 : vector<16x32xf32>
    %cst_113 = arith.constant 0.000000e+00 : f32
    %222 = vector.broadcast %cst_113 : f32 to vector<16x32xf32>
    %223 = arith.minimumf %219, %222 : vector<16x32xf32>
    %224 = math.exp %223 : vector<16x32xf32>
    %cst_114 = arith.constant 1.000000e+00 : f32
    %225 = vector.broadcast %cst_114 : f32 to vector<16x32xf32>
    %226 = arith.subf %224, %225 : vector<16x32xf32>
    %227 = arith.select %221, %219, %226 : vector<16x32xi1>, vector<16x32xf32>
    %cst_115 = arith.constant dense<0.000000e+00> : vector<16x32xf32>
    %228 = tpu.matmul %227, %113, %cst_115 {dimension_numbers = #tpu.dot_dimension_numbers<[1], [0], [0], [1], [0, 0, 1, 1], [], []>} : vector<16x32xf32>, vector<32x32xf32>, vector<16x32xf32> -> vector<16x32xf32>
    %229 = vector.broadcast %114 : vector<1x32xf32> to vector<16x32xf32>
    %230 = arith.addf %228, %229 : vector<16x32xf32>
    %231 = arith.addf %216, %230 : vector<16x32xf32>
    %cst_116 = arith.constant dense<0.000000e+00> : vector<16xf32>
    %232 = vector.multi_reduction <add>, %231, %cst_116 [1] : vector<16x32xf32> to vector<16xf32>
    %233 = vector.shape_cast %232 : vector<16xf32> to vector<16x1xf32>
    %cst_117 = arith.constant 3.200000e+01 : f32
    %234 = vector.broadcast %cst_117 : f32 to vector<16x1xf32>
    %235 = arith.divf %233, %234 : vector<16x1xf32>
    %236 = vector.broadcast %235 : vector<16x1xf32> to vector<16x32xf32>
    %237 = arith.subf %231, %236 : vector<16x32xf32>
    %238 = arith.mulf %237, %237 : vector<16x32xf32>
    %cst_118 = arith.constant dense<0.000000e+00> : vector<16xf32>
    %239 = vector.multi_reduction <add>, %238, %cst_118 [1] : vector<16x32xf32> to vector<16xf32>
    %240 = vector.shape_cast %239 : vector<16xf32> to vector<16x1xf32>
    %cst_119 = arith.constant 3.200000e+01 : f32
    %241 = vector.broadcast %cst_119 : f32 to vector<16x1xf32>
    %242 = arith.divf %240, %241 : vector<16x1xf32>
    %243 = vector.broadcast %235 : vector<16x1xf32> to vector<16x32xf32>
    %244 = arith.subf %231, %243 : vector<16x32xf32>
    %cst_120 = arith.constant 9.99999974E-6 : f32
    %245 = vector.broadcast %cst_120 : f32 to vector<16x1xf32>
    %246 = arith.addf %242, %245 : vector<16x1xf32>
    %247 = math.rsqrt %246 : vector<16x1xf32>
    %248 = vector.broadcast %247 : vector<16x1xf32> to vector<16x32xf32>
    %249 = arith.mulf %244, %248 : vector<16x32xf32>
    %250 = vector.broadcast %121 : vector<1x32xf32> to vector<16x32xf32>
    %251 = arith.mulf %249, %250 : vector<16x32xf32>
    %252 = vector.broadcast %122 : vector<1x32xf32> to vector<16x32xf32>
    %253 = arith.addf %251, %252 : vector<16x32xf32>
    %c0_121 = arith.constant 0 : index
    %c0_122 = arith.constant 0 : index
    %254 = vector.load %arg7[%c0_121, %c0_122] : memref<256x4xf32, #tpu.memory_space<vmem>>, vector<256x4xf32>
    %c0_123 = arith.constant 0 : index
    %c0_124 = arith.constant 0 : index
    %255 = vector.load %arg8[%c0_123, %c0_124] : memref<1x4xf32, #tpu.memory_space<vmem>>, vector<1x4xf32>
    %256 = vector.extract_strided_slice %253 {offsets = [0, 0], sizes = [1, 32], strides = [1, 1]} : vector<16x32xf32> to vector<1x32xf32>
    %257 = vector.extract_strided_slice %254 {offsets = [0, 0], sizes = [32, 4], strides = [1, 1]} : vector<256x4xf32> to vector<32x4xf32>
    %cst_125 = arith.constant dense<0.000000e+00> : vector<1x4xf32>
    %258 = tpu.matmul %256, %257, %cst_125 {dimension_numbers = #tpu.dot_dimension_numbers<[1], [0], [0], [1], [0, 0, 1, 1], [], []>} : vector<1x32xf32>, vector<32x4xf32>, vector<1x4xf32> -> vector<1x4xf32>
    %259 = arith.addf %255, %258 : vector<1x4xf32>
    %260 = vector.extract_strided_slice %253 {offsets = [1, 0], sizes = [1, 32], strides = [1, 1]} : vector<16x32xf32> to vector<1x32xf32>
    %261 = vector.extract_strided_slice %254 {offsets = [32, 0], sizes = [32, 4], strides = [1, 1]} : vector<256x4xf32> to vector<32x4xf32>
    %cst_126 = arith.constant dense<0.000000e+00> : vector<1x4xf32>
    %262 = tpu.matmul %260, %261, %cst_126 {dimension_numbers = #tpu.dot_dimension_numbers<[1], [0], [0], [1], [0, 0, 1, 1], [], []>} : vector<1x32xf32>, vector<32x4xf32>, vector<1x4xf32> -> vector<1x4xf32>
    %263 = arith.addf %259, %262 : vector<1x4xf32>
    %264 = vector.extract_strided_slice %253 {offsets = [2, 0], sizes = [1, 32], strides = [1, 1]} : vector<16x32xf32> to vector<1x32xf32>
    %265 = vector.extract_strided_slice %254 {offsets = [64, 0], sizes = [32, 4], strides = [1, 1]} : vector<256x4xf32> to vector<32x4xf32>
    %cst_127 = arith.constant dense<0.000000e+00> : vector<1x4xf32>
    %266 = tpu.matmul %264, %265, %cst_127 {dimension_numbers = #tpu.dot_dimension_numbers<[1], [0], [0], [1], [0, 0, 1, 1], [], []>} : vector<1x32xf32>, vector<32x4xf32>, vector<1x4xf32> -> vector<1x4xf32>
    %267 = arith.addf %263, %266 : vector<1x4xf32>
    %268 = vector.extract_strided_slice %253 {offsets = [3, 0], sizes = [1, 32], strides = [1, 1]} : vector<16x32xf32> to vector<1x32xf32>
    %269 = vector.extract_strided_slice %254 {offsets = [96, 0], sizes = [32, 4], strides = [1, 1]} : vector<256x4xf32> to vector<32x4xf32>
    %cst_128 = arith.constant dense<0.000000e+00> : vector<1x4xf32>
    %270 = tpu.matmul %268, %269, %cst_128 {dimension_numbers = #tpu.dot_dimension_numbers<[1], [0], [0], [1], [0, 0, 1, 1], [], []>} : vector<1x32xf32>, vector<32x4xf32>, vector<1x4xf32> -> vector<1x4xf32>
    %271 = arith.addf %267, %270 : vector<1x4xf32>
    %272 = vector.extract_strided_slice %253 {offsets = [4, 0], sizes = [1, 32], strides = [1, 1]} : vector<16x32xf32> to vector<1x32xf32>
    %273 = vector.extract_strided_slice %254 {offsets = [128, 0], sizes = [32, 4], strides = [1, 1]} : vector<256x4xf32> to vector<32x4xf32>
    %cst_129 = arith.constant dense<0.000000e+00> : vector<1x4xf32>
    %274 = tpu.matmul %272, %273, %cst_129 {dimension_numbers = #tpu.dot_dimension_numbers<[1], [0], [0], [1], [0, 0, 1, 1], [], []>} : vector<1x32xf32>, vector<32x4xf32>, vector<1x4xf32> -> vector<1x4xf32>
    %275 = arith.addf %271, %274 : vector<1x4xf32>
    %276 = vector.extract_strided_slice %253 {offsets = [5, 0], sizes = [1, 32], strides = [1, 1]} : vector<16x32xf32> to vector<1x32xf32>
    %277 = vector.extract_strided_slice %254 {offsets = [160, 0], sizes = [32, 4], strides = [1, 1]} : vector<256x4xf32> to vector<32x4xf32>
    %cst_130 = arith.constant dense<0.000000e+00> : vector<1x4xf32>
    %278 = tpu.matmul %276, %277, %cst_130 {dimension_numbers = #tpu.dot_dimension_numbers<[1], [0], [0], [1], [0, 0, 1, 1], [], []>} : vector<1x32xf32>, vector<32x4xf32>, vector<1x4xf32> -> vector<1x4xf32>
    %279 = arith.addf %275, %278 : vector<1x4xf32>
    %280 = vector.extract_strided_slice %253 {offsets = [6, 0], sizes = [1, 32], strides = [1, 1]} : vector<16x32xf32> to vector<1x32xf32>
    %281 = vector.extract_strided_slice %254 {offsets = [192, 0], sizes = [32, 4], strides = [1, 1]} : vector<256x4xf32> to vector<32x4xf32>
    %cst_131 = arith.constant dense<0.000000e+00> : vector<1x4xf32>
    %282 = tpu.matmul %280, %281, %cst_131 {dimension_numbers = #tpu.dot_dimension_numbers<[1], [0], [0], [1], [0, 0, 1, 1], [], []>} : vector<1x32xf32>, vector<32x4xf32>, vector<1x4xf32> -> vector<1x4xf32>
    %283 = arith.addf %279, %282 : vector<1x4xf32>
    %284 = vector.extract_strided_slice %253 {offsets = [7, 0], sizes = [1, 32], strides = [1, 1]} : vector<16x32xf32> to vector<1x32xf32>
    %285 = vector.extract_strided_slice %254 {offsets = [224, 0], sizes = [32, 4], strides = [1, 1]} : vector<256x4xf32> to vector<32x4xf32>
    %cst_132 = arith.constant dense<0.000000e+00> : vector<1x4xf32>
    %286 = tpu.matmul %284, %285, %cst_132 {dimension_numbers = #tpu.dot_dimension_numbers<[1], [0], [0], [1], [0, 0, 1, 1], [], []>} : vector<1x32xf32>, vector<32x4xf32>, vector<1x4xf32> -> vector<1x4xf32>
    %287 = arith.addf %283, %286 : vector<1x4xf32>
    %288 = vector.extract_strided_slice %253 {offsets = [8, 0], sizes = [1, 32], strides = [1, 1]} : vector<16x32xf32> to vector<1x32xf32>
    %289 = vector.extract_strided_slice %254 {offsets = [0, 0], sizes = [32, 4], strides = [1, 1]} : vector<256x4xf32> to vector<32x4xf32>
    %cst_133 = arith.constant dense<0.000000e+00> : vector<1x4xf32>
    %290 = tpu.matmul %288, %289, %cst_133 {dimension_numbers = #tpu.dot_dimension_numbers<[1], [0], [0], [1], [0, 0, 1, 1], [], []>} : vector<1x32xf32>, vector<32x4xf32>, vector<1x4xf32> -> vector<1x4xf32>
    %291 = arith.addf %255, %290 : vector<1x4xf32>
    %292 = vector.extract_strided_slice %253 {offsets = [9, 0], sizes = [1, 32], strides = [1, 1]} : vector<16x32xf32> to vector<1x32xf32>
    %293 = vector.extract_strided_slice %254 {offsets = [32, 0], sizes = [32, 4], strides = [1, 1]} : vector<256x4xf32> to vector<32x4xf32>
    %cst_134 = arith.constant dense<0.000000e+00> : vector<1x4xf32>
    %294 = tpu.matmul %292, %293, %cst_134 {dimension_numbers = #tpu.dot_dimension_numbers<[1], [0], [0], [1], [0, 0, 1, 1], [], []>} : vector<1x32xf32>, vector<32x4xf32>, vector<1x4xf32> -> vector<1x4xf32>
    %295 = arith.addf %291, %294 : vector<1x4xf32>
    %296 = vector.extract_strided_slice %253 {offsets = [10, 0], sizes = [1, 32], strides = [1, 1]} : vector<16x32xf32> to vector<1x32xf32>
    %297 = vector.extract_strided_slice %254 {offsets = [64, 0], sizes = [32, 4], strides = [1, 1]} : vector<256x4xf32> to vector<32x4xf32>
    %cst_135 = arith.constant dense<0.000000e+00> : vector<1x4xf32>
    %298 = tpu.matmul %296, %297, %cst_135 {dimension_numbers = #tpu.dot_dimension_numbers<[1], [0], [0], [1], [0, 0, 1, 1], [], []>} : vector<1x32xf32>, vector<32x4xf32>, vector<1x4xf32> -> vector<1x4xf32>
    %299 = arith.addf %295, %298 : vector<1x4xf32>
    %300 = vector.extract_strided_slice %253 {offsets = [11, 0], sizes = [1, 32], strides = [1, 1]} : vector<16x32xf32> to vector<1x32xf32>
    %301 = vector.extract_strided_slice %254 {offsets = [96, 0], sizes = [32, 4], strides = [1, 1]} : vector<256x4xf32> to vector<32x4xf32>
    %cst_136 = arith.constant dense<0.000000e+00> : vector<1x4xf32>
    %302 = tpu.matmul %300, %301, %cst_136 {dimension_numbers = #tpu.dot_dimension_numbers<[1], [0], [0], [1], [0, 0, 1, 1], [], []>} : vector<1x32xf32>, vector<32x4xf32>, vector<1x4xf32> -> vector<1x4xf32>
    %303 = arith.addf %299, %302 : vector<1x4xf32>
    %304 = vector.extract_strided_slice %253 {offsets = [12, 0], sizes = [1, 32], strides = [1, 1]} : vector<16x32xf32> to vector<1x32xf32>
    %305 = vector.extract_strided_slice %254 {offsets = [128, 0], sizes = [32, 4], strides = [1, 1]} : vector<256x4xf32> to vector<32x4xf32>
    %cst_137 = arith.constant dense<0.000000e+00> : vector<1x4xf32>
    %306 = tpu.matmul %304, %305, %cst_137 {dimension_numbers = #tpu.dot_dimension_numbers<[1], [0], [0], [1], [0, 0, 1, 1], [], []>} : vector<1x32xf32>, vector<32x4xf32>, vector<1x4xf32> -> vector<1x4xf32>
    %307 = arith.addf %303, %306 : vector<1x4xf32>
    %308 = vector.extract_strided_slice %253 {offsets = [13, 0], sizes = [1, 32], strides = [1, 1]} : vector<16x32xf32> to vector<1x32xf32>
    %309 = vector.extract_strided_slice %254 {offsets = [160, 0], sizes = [32, 4], strides = [1, 1]} : vector<256x4xf32> to vector<32x4xf32>
    %cst_138 = arith.constant dense<0.000000e+00> : vector<1x4xf32>
    %310 = tpu.matmul %308, %309, %cst_138 {dimension_numbers = #tpu.dot_dimension_numbers<[1], [0], [0], [1], [0, 0, 1, 1], [], []>} : vector<1x32xf32>, vector<32x4xf32>, vector<1x4xf32> -> vector<1x4xf32>
    %311 = arith.addf %307, %310 : vector<1x4xf32>
    %312 = vector.extract_strided_slice %253 {offsets = [14, 0], sizes = [1, 32], strides = [1, 1]} : vector<16x32xf32> to vector<1x32xf32>
    %313 = vector.extract_strided_slice %254 {offsets = [192, 0], sizes = [32, 4], strides = [1, 1]} : vector<256x4xf32> to vector<32x4xf32>
    %cst_139 = arith.constant dense<0.000000e+00> : vector<1x4xf32>
    %314 = tpu.matmul %312, %313, %cst_139 {dimension_numbers = #tpu.dot_dimension_numbers<[1], [0], [0], [1], [0, 0, 1, 1], [], []>} : vector<1x32xf32>, vector<32x4xf32>, vector<1x4xf32> -> vector<1x4xf32>
    %315 = arith.addf %311, %314 : vector<1x4xf32>
    %316 = vector.extract_strided_slice %253 {offsets = [15, 0], sizes = [1, 32], strides = [1, 1]} : vector<16x32xf32> to vector<1x32xf32>
    %317 = vector.extract_strided_slice %254 {offsets = [224, 0], sizes = [32, 4], strides = [1, 1]} : vector<256x4xf32> to vector<32x4xf32>
    %cst_140 = arith.constant dense<0.000000e+00> : vector<1x4xf32>
    %318 = tpu.matmul %316, %317, %cst_140 {dimension_numbers = #tpu.dot_dimension_numbers<[1], [0], [0], [1], [0, 0, 1, 1], [], []>} : vector<1x32xf32>, vector<32x4xf32>, vector<1x4xf32> -> vector<1x4xf32>
    %319 = arith.addf %315, %318 : vector<1x4xf32>
    %320 = tpu.concatenate %287, %319 in 0 : vector<1x4xf32>, vector<1x4xf32> -> vector<2x4xf32>
    %c0_141 = arith.constant 0 : index
    %c0_142 = arith.constant 0 : index
    %321 = vector.load %arg33[%c0_141, %c0_142] : memref<2x4xf32, #tpu.memory_space<vmem>>, vector<2x4xf32>
    tpu.vector_store %arg33[%c0_141, %c0_142], %320 {strides = array<i32>} : memref<2x4xf32, #tpu.memory_space<vmem>>, vector<2x4xf32>,
    return
  }
}

</mosaic_0001>

<llo_original>
// kernel: tpu_custom_call.1
$region0: #{tpu_custom_call.1}
  #allocation0 [shape = 'u32[]', space=smem, size = 0x4, offset = 0x4, fixed_abs, tag = 'smem constant byte address 0x4 - core index']
  #allocation1 [shape = 'u32[144,128]{1,0:T(1,128)}', space=vmem, size = 0x12000, scoped, tag = 'internal scratch']
  %s0 = inlined_call_operand.smem [shape: u32[34], index: -1, kind: input, shape index: {}]
  %s1 = sld [smem:[%s0]]
  %s2 = scalar_lea.smem %s0, 1
  %s3 = sld [smem:[%s2]]
  %s4 = scalar_lea.smem %s0, 2
  %s5 = sld [smem:[%s4]]
  %s6 = scalar_lea.smem %s0, 3
  %s7 = sld [smem:[%s6]]
  %s8 = scalar_lea.smem %s0, 4
  %s9 = sld [smem:[%s8]]
  %s10 = scalar_lea.smem %s0, 5
  %s11 = sld [smem:[%s10]]
  %s12 = scalar_lea.smem %s0, 6
  %s13 = sld [smem:[%s12]]
  %s14 = scalar_lea.smem %s0, 7
  %s15 = sld [smem:[%s14]]
  %s16 = scalar_lea.smem %s0, 8
  %s17 = sld [smem:[%s16]]
  %s18 = scalar_lea.smem %s0, 9
  %s19 = sld [smem:[%s18]]
  %s20 = scalar_lea.smem %s0, 10
  %s21 = sld [smem:[%s20]]
  %s22 = scalar_lea.smem %s0, 11
  %s23 = sld [smem:[%s22]]
  %s24 = scalar_lea.smem %s0, 12
  %s25 = sld [smem:[%s24]]
  %s26 = scalar_lea.smem %s0, 13
  %s27 = sld [smem:[%s26]]
  %s28 = scalar_lea.smem %s0, 14
  %s29 = sld [smem:[%s28]]
  %s30 = scalar_lea.smem %s0, 15
  %s31 = sld [smem:[%s30]]
  %s32 = scalar_lea.smem %s0, 16
  %s33 = sld [smem:[%s32]]
  %s34 = scalar_lea.smem %s0, 17
  %s35 = sld [smem:[%s34]]
  %s36 = scalar_lea.smem %s0, 18
  %s37 = sld [smem:[%s36]]
  %s38 = scalar_lea.smem %s0, 19
  %s39 = sld [smem:[%s38]]
  %s40 = scalar_lea.smem %s0, 20
  %s41 = sld [smem:[%s40]]
  %s42 = scalar_lea.smem %s0, 21
  %s43 = sld [smem:[%s42]]
  %s44 = scalar_lea.smem %s0, 22
  %s45 = sld [smem:[%s44]]
  %s46 = scalar_lea.smem %s0, 23
  %s47 = sld [smem:[%s46]]
  %s48 = scalar_lea.smem %s0, 24
  %s49 = sld [smem:[%s48]]
  %s50 = scalar_lea.smem %s0, 25
  %s51 = sld [smem:[%s50]]
  %s52 = scalar_lea.smem %s0, 26
  %s53 = sld [smem:[%s52]]
  %s54 = scalar_lea.smem %s0, 27
  %s55 = sld [smem:[%s54]]
  %s56 = scalar_lea.smem %s0, 28
  %s57 = sld [smem:[%s56]]
  %s58 = scalar_lea.smem %s0, 29
  %s59 = sld [smem:[%s58]]
  %s60 = scalar_lea.smem %s0, 30
  %s61 = sld [smem:[%s60]]
  %s62 = scalar_lea.smem %s0, 31
  %s63 = sld [smem:[%s62]]
  %s64 = scalar_lea.smem %s0, 32
  %s65 = sld [smem:[%s64]]
  %s66 = scalar_lea.smem %s0, 33
  %s67 = sld [smem:[%s66]]
  %s68 = sld [smem:[#allocation0]]
  $region154: #{tpu_custom_call.1} parent=0
    _
  %s70 = ssub.s32 1, %s68
  %s71 = scalar_select 0, %s70, %s68
  $region1: #{tpu_custom_call.1} parent=0
    #allocation2 [shape = 'u8[8192]{0}', space=vmem, size = 0x2000, scoped, tag = 'input window, operand 2, single buffered']
    #allocation3 [shape = 's32[1]{0}', space=sflag, size = 0x4, scoped, tag = 'scoped memory for tpu_custom_call.1']
    #allocation4 [shape = 's32[1]{0}', space=sflag, size = 0x4, scoped, tag = 'scoped memory for tpu_custom_call.1']
    #allocation5 [shape = 'u8[2048]{0}', space=vmem, size = 0x800, scoped, tag = 'input window, operand 3, single buffered']
    #allocation6 [shape = 's32[1]{0}', space=sflag, size = 0x4, scoped, tag = 'scoped memory for tpu_custom_call.1']
    #allocation7 [shape = 'u8[2048]{0}', space=vmem, size = 0x800, scoped, tag = 'input window, operand 5, single buffered']
    #allocation8 [shape = 'u8[1024]{0}', space=vmem, size = 0x400, scoped, tag = 'output window, operand 0, single buffered']
    %72 = vsyncpa [#allocation3], 0
    %73 = vsyncpa [#allocation6], 0
    %74 = vsyncpa [#allocation4], 0
    // Predicated region
    $region2: #{tpu_custom_call.1} parent=1 // pred_check
      _
    $region3: #{tpu_custom_call.1} parent=1 // pred_check_branch
      %76 = sbr.rel (0) target = $region5
    $region4: #{tpu_custom_call.1} parent=1 // pred_region
      _
    $region5: #{tpu_custom_call.1} parent=1 // pred_fallthru
      _
    // Predicated region
    $region6: #{tpu_custom_call.1} parent=1 // pred_check
      _
    $region7: #{tpu_custom_call.1} parent=1 // pred_check_branch
      %78 = sbr.rel (0) target = $region9
    $region8: #{tpu_custom_call.1} parent=1 // pred_region
      _
    $region9: #{tpu_custom_call.1} parent=1 // pred_fallthru
      _
    // Predicated region
    $region10: #{tpu_custom_call.1} parent=1 // pred_check
      _
    $region11: #{tpu_custom_call.1} parent=1 // pred_check_branch
      %80 = sbr.rel (0) target = $region13
    $region12: #{tpu_custom_call.1} parent=1 // pred_region
      %s82 = ssub.s32 256, 256
      %83 = vsyncadd [#allocation3], %s82
      %s84 = sshll.u32 [#allocation2], 4
      %s85 = int_to_ptr.vmem [resolvable:$true] %s84
      %90 = dma.hbm_to_vmem [thread:$0]  %s5, 256, %s85, [#allocation3], 128, 128, 8
    $region13: #{tpu_custom_call.1} parent=1 // pred_fallthru
      _
    // Predicated region
    $region14: #{tpu_custom_call.1} parent=1 // pred_check
      _
    $region15: #{tpu_custom_call.1} parent=1 // pred_check_branch
      %92 = sbr.rel (0) target = $region17
    $region16: #{tpu_custom_call.1} parent=1 // pred_region
      %s94 = ssub.s32 64, 64
      %95 = vsyncadd [#allocation6], %s94
      %s97 = sshll.u32 [#allocation5], 4
      %s98 = int_to_ptr.vmem [resolvable:$true] %s97
      %100 = dma.hbm_to_vmem [thread:$0]  %s7, 64, %s98, [#allocation6]
    $region17: #{tpu_custom_call.1} parent=1 // pred_fallthru
      _
    // Predicated region
    $region18: #{tpu_custom_call.1} parent=1 // pred_check
      _
    $region19: #{tpu_custom_call.1} parent=1 // pred_check_branch
      %102 = sbr.rel (0) target = $region21
    $region20: #{tpu_custom_call.1} parent=1 // pred_region
      _
    $region21: #{tpu_custom_call.1} parent=1 // pred_fallthru
      _
    // Predicated region
    $region22: #{tpu_custom_call.1} parent=1 // pred_check
      _
    $region23: #{tpu_custom_call.1} parent=1 // pred_check_branch
      %104 = sbr.rel (0) target = $region25
    $region24: #{tpu_custom_call.1} parent=1 // pred_region
      %s106 = ssub.s32 64, 64
      %107 = vsyncadd [#allocation6], %s106
      %s109 = sshll.u32 [#allocation7], 4
      %s110 = int_to_ptr.vmem [resolvable:$true] %s109
      %112 = dma.hbm_to_vmem [thread:$0]  %s11, 64, %s110, [#allocation6]
    $region25: #{tpu_custom_call.1} parent=1 // pred_fallthru
      _
    // Predicated region
    $region26: #{tpu_custom_call.1} parent=1 // pred_check
      _
    $region27: #{tpu_custom_call.1} parent=1 // pred_check_branch
      %114 = sbr.rel (0) target = $region29
    $region28: #{tpu_custom_call.1} parent=1 // pred_region
      _
    $region29: #{tpu_custom_call.1} parent=1 // pred_fallthru
      _
    // Predicated region
    $region30: #{tpu_custom_call.1} parent=1 // pred_check
      _
    $region31: #{tpu_custom_call.1} parent=1 // pred_check_branch
      %116 = sbr.rel (0) target = $region33
    $region32: #{tpu_custom_call.1} parent=1 // pred_region
      _
    $region33: #{tpu_custom_call.1} parent=1 // pred_fallthru
      _
    // Predicated region
    $region34: #{tpu_custom_call.1} parent=1 // pred_check
      _
    $region35: #{tpu_custom_call.1} parent=1 // pred_check_branch
      %118 = sbr.rel (0) target = $region37
    $region36: #{tpu_custom_call.1} parent=1 // pred_region
      _
    $region37: #{tpu_custom_call.1} parent=1 // pred_fallthru
      _
    // Predicated region
    $region38: #{tpu_custom_call.1} parent=1 // pred_check
      _
    $region39: #{tpu_custom_call.1} parent=1 // pred_check_branch
      %120 = sbr.rel (0) target = $region41
    $region40: #{tpu_custom_call.1} parent=1 // pred_region
      _
    $region41: #{tpu_custom_call.1} parent=1 // pred_fallthru
      _
    // Predicated region
    $region42: #{tpu_custom_call.1} parent=1 // pred_check
      _
    $region43: #{tpu_custom_call.1} parent=1 // pred_check_branch
      %122 = sbr.rel (0) target = $region45
    $region44: #{tpu_custom_call.1} parent=1 // pred_region
      _
    $region45: #{tpu_custom_call.1} parent=1 // pred_fallthru
      _
    // Predicated region
    $region46: #{tpu_custom_call.1} parent=1 // pred_check
      _
    $region47: #{tpu_custom_call.1} parent=1 // pred_check_branch
      %124 = sbr.rel (0) target = $region49
    $region48: #{tpu_custom_call.1} parent=1 // pred_region
      _
    $region49: #{tpu_custom_call.1} parent=1 // pred_fallthru
      _
    // Predicated region
    $region50: #{tpu_custom_call.1} parent=1 // pred_check
      _
    $region51: #{tpu_custom_call.1} parent=1 // pred_check_branch
      %126 = sbr.rel (0) target = $region53
    $region52: #{tpu_custom_call.1} parent=1 // pred_region
      _
    $region53: #{tpu_custom_call.1} parent=1 // pred_fallthru
      _
    // Predicated region
    $region54: #{tpu_custom_call.1} parent=1 // pred_check
      _
    $region55: #{tpu_custom_call.1} parent=1 // pred_check_branch
      %128 = sbr.rel (0) target = $region57
    $region56: #{tpu_custom_call.1} parent=1 // pred_region
      _
    $region57: #{tpu_custom_call.1} parent=1 // pred_fallthru
      _
    // Predicated region
    $region58: #{tpu_custom_call.1} parent=1 // pred_check
      _
    $region59: #{tpu_custom_call.1} parent=1 // pred_check_branch
      %130 = sbr.rel (0) target = $region61
    $region60: #{tpu_custom_call.1} parent=1 // pred_region
      _
    $region61: #{tpu_custom_call.1} parent=1 // pred_fallthru
      _
    // Predicated region
    $region62: #{tpu_custom_call.1} parent=1 // pred_check
      _
    $region63: #{tpu_custom_call.1} parent=1 // pred_check_branch
      %132 = sbr.rel (0) target = $region65
    $region64: #{tpu_custom_call.1} parent=1 // pred_region
      _
    $region65: #{tpu_custom_call.1} parent=1 // pred_fallthru
      _
    // Predicated region
    $region66: #{tpu_custom_call.1} parent=1 // pred_check
      _
    $region67: #{tpu_custom_call.1} parent=1 // pred_check_branch
      %134 = sbr.rel (0) target = $region69
    $region68: #{tpu_custom_call.1} parent=1 // pred_region
      _
    $region69: #{tpu_custom_call.1} parent=1 // pred_fallthru
      _
    // Predicated region
    $region70: #{tpu_custom_call.1} parent=1 // pred_check
      _
    $region71: #{tpu_custom_call.1} parent=1 // pred_check_branch
      %136 = sbr.rel (0) target = $region73
    $region72: #{tpu_custom_call.1} parent=1 // pred_region
      _
    $region73: #{tpu_custom_call.1} parent=1 // pred_fallthru
      _
    // Predicated region
    $region74: #{tpu_custom_call.1} parent=1 // pred_check
      _
    $region75: #{tpu_custom_call.1} parent=1 // pred_check_branch
      %138 = sbr.rel (0) target = $region77
    $region76: #{tpu_custom_call.1} parent=1 // pred_region
      _
    $region77: #{tpu_custom_call.1} parent=1 // pred_fallthru
      _
    // Predicated region
    $region78: #{tpu_custom_call.1} parent=1 // pred_check
      _
    $region79: #{tpu_custom_call.1} parent=1 // pred_check_branch
      %140 = sbr.rel (0) target = $region81
    $region80: #{tpu_custom_call.1} parent=1 // pred_region
      _
    $region81: #{tpu_custom_call.1} parent=1 // pred_fallthru
      _
    // Predicated region
    $region82: #{tpu_custom_call.1} parent=1 // pred_check
      _
    $region83: #{tpu_custom_call.1} parent=1 // pred_check_branch
      %142 = sbr.rel (0) target = $region85
    $region84: #{tpu_custom_call.1} parent=1 // pred_region
      _
    $region85: #{tpu_custom_call.1} parent=1 // pred_fallthru
      _
    // Predicated region
    $region86: #{tpu_custom_call.1} parent=1 // pred_check
      _
    $region87: #{tpu_custom_call.1} parent=1 // pred_check_branch
      %144 = sbr.rel (0) target = $region89
    $region88: #{tpu_custom_call.1} parent=1 // pred_region
      _
    $region89: #{tpu_custom_call.1} parent=1 // pred_fallthru
      _
    // Predicated region
    $region90: #{tpu_custom_call.1} parent=1 // pred_check
      _
    $region91: #{tpu_custom_call.1} parent=1 // pred_check_branch
      %146 = sbr.rel (0) target = $region93
    $region92: #{tpu_custom_call.1} parent=1 // pred_region
      _
    $region93: #{tpu_custom_call.1} parent=1 // pred_fallthru
      _
    // Predicated region
    $region94: #{tpu_custom_call.1} parent=1 // pred_check
      _
    $region95: #{tpu_custom_call.1} parent=1 // pred_check_branch
      %148 = sbr.rel (0) target = $region97
    $region96: #{tpu_custom_call.1} parent=1 // pred_region
      _
    $region97: #{tpu_custom_call.1} parent=1 // pred_fallthru
      _
    // Predicated region
    $region98: #{tpu_custom_call.1} parent=1 // pred_check
      _
    $region99: #{tpu_custom_call.1} parent=1 // pred_check_branch
      %150 = sbr.rel (0) target = $region101
    $region100: #{tpu_custom_call.1} parent=1 // pred_region
      _
    $region101: #{tpu_custom_call.1} parent=1 // pred_fallthru
      _
    // Predicated region
    $region102: #{tpu_custom_call.1} parent=1 // pred_check
      _
    $region103: #{tpu_custom_call.1} parent=1 // pred_check_branch
      %152 = sbr.rel (0) target = $region105
    $region104: #{tpu_custom_call.1} parent=1 // pred_region
      _
    $region105: #{tpu_custom_call.1} parent=1 // pred_fallthru
      _
    // Predicated region
    $region106: #{tpu_custom_call.1} parent=1 // pred_check
      _
    $region107: #{tpu_custom_call.1} parent=1 // pred_check_branch
      %154 = sbr.rel (0) target = $region109
    $region108: #{tpu_custom_call.1} parent=1 // pred_region
      _
    $region109: #{tpu_custom_call.1} parent=1 // pred_fallthru
      _
    // Predicated region
    $region110: #{tpu_custom_call.1} parent=1 // pred_check
      _
    $region111: #{tpu_custom_call.1} parent=1 // pred_check_branch
      %156 = sbr.rel (0) target = $region113
    $region112: #{tpu_custom_call.1} parent=1 // pred_region
      _
    $region113: #{tpu_custom_call.1} parent=1 // pred_fallthru
      _
    // Predicated region
    $region114: #{tpu_custom_call.1} parent=1 // pred_check
      _
    $region115: #{tpu_custom_call.1} parent=1 // pred_check_branch
      %158 = sbr.rel (0) target = $region117
    $region116: #{tpu_custom_call.1} parent=1 // pred_region
      _
    $region117: #{tpu_custom_call.1} parent=1 // pred_fallthru
      _
    // Predicated region
    $region118: #{tpu_custom_call.1} parent=1 // pred_check
      _
    $region119: #{tpu_custom_call.1} parent=1 // pred_check_branch
      %160 = sbr.rel (0) target = $region121
    $region120: #{tpu_custom_call.1} parent=1 // pred_region
      _
    $region121: #{tpu_custom_call.1} parent=1 // pred_fallthru
      _
    // Predicated region
    $region122: #{tpu_custom_call.1} parent=1 // pred_check
      _
    $region123: #{tpu_custom_call.1} parent=1 // pred_check_branch
      %162 = sbr.rel (0) target = $region125
    $region124: #{tpu_custom_call.1} parent=1 // pred_region
      _
    $region125: #{tpu_custom_call.1} parent=1 // pred_fallthru
      _
    // Predicated region
    $region126: #{tpu_custom_call.1} parent=1 // pred_check
      _
    $region127: #{tpu_custom_call.1} parent=1 // pred_check_branch
      %164 = sbr.rel (0) target = $region129
    $region128: #{tpu_custom_call.1} parent=1 // pred_region
      _
    $region129: #{tpu_custom_call.1} parent=1 // pred_fallthru
      _
    // Predicated region
    $region130: #{tpu_custom_call.1} parent=1 // pred_check
      _
    $region131: #{tpu_custom_call.1} parent=1 // pred_check_branch
      %166 = sbr.rel (0) target = $region133
    $region132: #{tpu_custom_call.1} parent=1 // pred_region
      _
    $region133: #{tpu_custom_call.1} parent=1 // pred_fallthru
      _
    // Predicated region
    $region134: #{tpu_custom_call.1} parent=1 // pred_check
      _
    $region135: #{tpu_custom_call.1} parent=1 // pred_check_branch
      %168 = sbr.rel (0) target = $region137
    $region136: #{tpu_custom_call.1} parent=1 // pred_region
      %169 = dma.done [#allocation3], 256
    $region137: #{tpu_custom_call.1} parent=1 // pred_fallthru
      _
    // Predicated region
    $region138: #{tpu_custom_call.1} parent=1 // pred_check
      _
    $region139: #{tpu_custom_call.1} parent=1 // pred_check_branch
      %171 = sbr.rel (0) target = $region141
    $region140: #{tpu_custom_call.1} parent=1 // pred_region
      %172 = dma.done [#allocation6], 64
    $region141: #{tpu_custom_call.1} parent=1 // pred_fallthru
      _
    // Predicated region
    $region142: #{tpu_custom_call.1} parent=1 // pred_check
      _
    $region143: #{tpu_custom_call.1} parent=1 // pred_check_branch
      %174 = sbr.rel (0) target = $region145
    $region144: #{tpu_custom_call.1} parent=1 // pred_region
      %175 = dma.done [#allocation6], 64
    $region145: #{tpu_custom_call.1} parent=1 // pred_fallthru
      _
    %v176 = vld [vmem:[%s1] sm:$0xff]
    %v177 = vld [vmem:[%s1 + $0x8] sm:$0xff]
    %v178 = vld [vmem:[#allocation5] sm:$0xf]
    %v179 = vld [vmem:[%s9] sm:$0x1]
    %v181 = vlaneseq
    %v182 = vshrl.u32 %v181, 7
    %v183 = vsub.s32 0, %v182
    %v184 = vrot.slane %v179, %v183
    %vm186 = vcmask 31744
    %v188 = vsel %vm186, %v176, 0
    %v191 = vsel %vm186, %v177, 0
    %vm193 = vcmask 1043456
    %v195 = vsel %vm193, %v178, 0
    %197 = vmatprep.subr.mxu0 0.0
    %198 = vmatpush1.msra.mxu0 %v195
    %199 = vmatprep.subr.mxu0 0.0
    %200 = vmatpush1.msra.mxu0 0.0
    %201 = vmatprep.subr.mxu0 0.0
    %202 = vmatpush1.msra.mxu0 0.0
    %203 = vmatprep.subr.mxu0 0.0
    %204 = vmatpush1.msra.mxu0 0.0
    %205 = vmatprep.subr.mxu0 0.0
    %206 = vmatpush1.msra.mxu0 0.0
    %207 = vmatprep.subr.mxu0 0.0
    %208 = vmatpush1.msra.mxu0 0.0
    %209 = vmatprep.subr.mxu0 0.0
    %210 = vmatpush1.msra.mxu0 0.0
    %211 = vmatprep.subr.mxu0 0.0
    %212 = vmatpush1.msra.mxu0 0.0
    %213 = vmatprep.subr.mxu0 0.0
    %214 = vmatpush1.msra.mxu0 0.0
    %215 = vmatprep.subr.mxu0 0.0
    %216 = vmatpush1.msra.mxu0 0.0
    %217 = vmatprep.subr.mxu0 0.0
    %218 = vmatpush1.msra.mxu0 0.0
    %219 = vmatprep.subr.mxu0 0.0
    %220 = vmatpush1.msra.mxu0 0.0
    %221 = vmatprep.subr.mxu0 0.0
    %222 = vmatpush1.msra.mxu0 0.0
    %223 = vmatprep.subr.mxu0 0.0
    %224 = vmatpush1.msra.mxu0 0.0
    %225 = vmatprep.subr.mxu0 0.0
    %226 = vmatpush1.msra.mxu0 0.0
    %227 = vmatprep.subr.mxu0 0.0
    %228 = vmatpush1.msra.mxu0 0.0
    %229 = vmatprep.subr.mxu0 0.0
    %230 = vmatpush1.msra.mxu0 0.0
    %231 = vmatprep.subr.mxu0 0.0
    %232 = vmatpush1.msra.mxu0 0.0
    %233 = vmatprep.subr.mxu0 0.0
    %234 = vmatpush1.msra.mxu0 0.0
    %235 = vmatprep.subr.mxu0 0.0
    %236 = vmatpush1.msra.mxu0 0.0
    %237 = vmatprep.subr.mxu0 0.0
    %238 = vmatpush1.msra.mxu0 0.0
    %239 = vmatprep.subr.mxu0 0.0
    %240 = vmatpush1.msra.mxu0 0.0
    %241 = vmatprep.subr.mxu0 0.0
    %242 = vmatpush1.msra.mxu0 0.0
    %243 = vmatprep.subr.mxu0 0.0
    %244 = vmatpush1.msra.mxu0 0.0
    %245 = vmatprep.subr.mxu0 0.0
    %246 = vmatpush1.msra.mxu0 0.0
    %247 = vmatprep.subr.mxu0 0.0
    %248 = vmatpush1.msra.mxu0 0.0
    %249 = vmatprep.subr.mxu0 0.0
    %250 = vmatpush1.msra.mxu0 0.0
    %251 = vmatprep.subr.mxu0 0.0
    %252 = vmatpush1.msra.mxu0 0.0
    %253 = vmatprep.subr.mxu0 0.0
    %254 = vmatpush1.msra.mxu0 0.0
    %255 = vmatprep.subr.mxu0 0.0
    %256 = vmatpush1.msra.mxu0 0.0
    %257 = vmatprep.subr.mxu0 0.0
    %258 = vmatpush1.msra.mxu0 0.0
    %259 = vmatprep.subr.mxu0 0.0
    %260 = vmatpush1.msra.mxu0 0.0
    %261 = vmatprep.mubr.f32.mxu0 0.0
    %262 = vmatmul.mubr.f32.gmra.mrb[0].mxu0 %v188
    %v263 = vpop.f32.mrb[0].mxu0
    %v264 = vadd.f32 %v184, %v263
    %v265 = vpop.f32.mrb[0].mxu0
    %266 = vmatprep.mubr.f32.mxu0 0.0
    %267 = vmatmul.mubr.f32.gmra.mrb[0].mxu0 %v191
    %v268 = vpop.f32.mrb[0].mxu0
    %v269 = vadd.f32 %v184, %v268
    %v270 = vpop.f32.mrb[0].mxu0
    %271 = vdwg.mxu0
    %v272 = vld [vmem:[#allocation2] sm:$0xff]
    %v273 = vld [vmem:[#allocation2 + $0x8] sm:$0xff]
    %v274 = vadd.f32 %v264, %v272
    %v275 = vadd.f32 %v269, %v273
    %v276 = vld [vmem:[%s19] sm:$0xff]
    %v277 = vld [vmem:[%s19 + $0x8] sm:$0xff]
    %v278 = vld [vmem:[%s19 + $0x10] sm:$0xff]
    %v279 = vld [vmem:[%s19 + $0x18] sm:$0xff]
    %v280 = vld [vmem:[%s21] sm:$0xff]
    %v281 = vld [vmem:[%s21 + $0x8] sm:$0xff]
    %v282 = vld [vmem:[%s21 + $0x10] sm:$0xff]
    %v283 = vld [vmem:[%s21 + $0x18] sm:$0xff]
    %v284 = vld [vmem:[%s23] sm:$0xff]
    %v285 = vld [vmem:[%s23 + $0x8] sm:$0xff]
    %v286 = vld [vmem:[%s23 + $0x10] sm:$0xff]
    %v287 = vld [vmem:[%s23 + $0x18] sm:$0xff]
    %v288 = vld [vmem:[%s25] sm:$0x1]
    %v289 = vld [vmem:[%s27] sm:$0xff]
    %v290 = vld [vmem:[%s27 + $0x8] sm:$0xff]
    %v291 = vld [vmem:[%s27 + $0x10] sm:$0xff]
    %v292 = vld [vmem:[%s27 + $0x18] sm:$0xff]
    %v293 = vld [vmem:[%s29] sm:$0x1]
    %v294 = vld [vmem:[%s31] sm:$0x1]
    %v295 = vld [vmem:[%s33] sm:$0x1]
    %v296 = vld [vmem:[%s35] sm:$0x1]
    %v297 = vld [vmem:[%s37] sm:$0x1]
    %vm298 = vcmask 261120
    %v300 = vsel %vm298, %v274, 0
    %v303 = vsel %vm298, %v275, 0
    %305 = vmatprep.subr.mxu0 0.0
    %306 = vmatpush1.msra.mxu0 %v276
    %307 = vmatprep.subr.mxu0 0.0
    %308 = vmatpush1.msra.mxu0 %v277
    %309 = vmatprep.subr.mxu0 0.0
    %310 = vmatpush1.msra.mxu0 %v278
    %311 = vmatprep.subr.mxu0 0.0
    %312 = vmatpush1.msra.mxu0 %v279
    %313 = vmatprep.subr.mxu0 0.0
    %314 = vmatpush1.msra.mxu0 0.0
    %315 = vmatprep.subr.mxu0 0.0
    %316 = vmatpush1.msra.mxu0 0.0
    %317 = vmatprep.subr.mxu0 0.0
    %318 = vmatpush1.msra.mxu0 0.0
    %319 = vmatprep.subr.mxu0 0.0
    %320 = vmatpush1.msra.mxu0 0.0
    %321 = vmatprep.subr.mxu0 0.0
    %322 = vmatpush1.msra.mxu0 0.0
    %323 = vmatprep.subr.mxu0 0.0
    %324 = vmatpush1.msra.mxu0 0.0
    %325 = vmatprep.subr.mxu0 0.0
    %326 = vmatpush1.msra.mxu0 0.0
    %327 = vmatprep.subr.mxu0 0.0
    %328 = vmatpush1.msra.mxu0 0.0
    %329 = vmatprep.subr.mxu0 0.0
    %330 = vmatpush1.msra.mxu0 0.0
    %331 = vmatprep.subr.mxu0 0.0
    %332 = vmatpush1.msra.mxu0 0.0
    %333 = vmatprep.subr.mxu0 0.0
    %334 = vmatpush1.msra.mxu0 0.0
    %335 = vmatprep.subr.mxu0 0.0
    %336 = vmatpush1.msra.mxu0 0.0
    %337 = vmatprep.subr.mxu0 0.0
    %338 = vmatpush1.msra.mxu0 0.0
    %339 = vmatprep.subr.mxu0 0.0
    %340 = vmatpush1.msra.mxu0 0.0
    %341 = vmatprep.subr.mxu0 0.0
    %342 = vmatpush1.msra.mxu0 0.0
    %343 = vmatprep.subr.mxu0 0.0
    %344 = vmatpush1.msra.mxu0 0.0
    %345 = vmatprep.subr.mxu0 0.0
    %346 = vmatpush1.msra.mxu0 0.0
    %347 = vmatprep.subr.mxu0 0.0
    %348 = vmatpush1.msra.mxu0 0.0
    %349 = vmatprep.subr.mxu0 0.0
    %350 = vmatpush1.msra.mxu0 0.0
    %351 = vmatprep.subr.mxu0 0.0
    %352 = vmatpush1.msra.mxu0 0.0
    %353 = vmatprep.subr.mxu0 0.0
    %354 = vmatpush1.msra.mxu0 0.0
    %355 = vmatprep.subr.mxu0 0.0
    %356 = vmatpush1.msra.mxu0 0.0
    %357 = vmatprep.subr.mxu0 0.0
    %358 = vmatpush1.msra.mxu0 0.0
    %359 = vmatprep.subr.mxu0 0.0
    %360 = vmatpush1.msra.mxu0 0.0
    %361 = vmatprep.subr.mxu0 0.0
    %362 = vmatpush1.msra.mxu0 0.0
    %363 = vmatprep.subr.mxu0 0.0
    %364 = vmatpush1.msra.mxu0 0.0
    %365 = vmatprep.subr.mxu0 0.0
    %366 = vmatpush1.msra.mxu0 0.0
    %367 = vmatprep.subr.mxu0 0.0
    %368 = vmatpush1.msra.mxu0 0.0
    %369 = vmatprep.mubr.f32.mxu0 0.0
    %370 = vmatmul.mubr.f32.gmra.mrb[0].mxu0 %v300
    %v371 = vpop.f32.mrb[0].mxu0
    %v372 = vadd.f32 0.0, %v371
    %v373 = vpop.f32.mrb[0].mxu0
    %374 = vmatprep.mubr.f32.mxu0 0.0
    %375 = vmatmul.mubr.f32.gmra.mrb[0].mxu0 %v303
    %v376 = vpop.f32.mrb[0].mxu0
    %v377 = vadd.f32 0.0, %v376
    %v378 = vpop.f32.mrb[0].mxu0
    %379 = vdwg.mxu0
    %381 = vrot.lane.b32.xlu0 %v372, 112
    %v382 = vpop.permute.xlu0 %381
    %vm383 = vcmask 130048
    %v384 = vsel %vm383, %v372, 0
    %v386 = vsel %vm383, %v382, 0
    %388 = vmatprep.subr.mxu0 0.0
    %389 = vmatpush1.xpose.msra.mxu0 %v386
    %390 = vmatprep.subr.mxu0 0.0
    %391 = vmatpush1.xpose.msra.mxu0 0.0
    %392 = vmatprep.subr.mxu0 0.0
    %393 = vmatpush1.xpose.msra.mxu0 0.0
    %394 = vmatprep.subr.mxu0 0.0
    %395 = vmatpush1.xpose.msra.mxu0 0.0
    %396 = vmatprep.subr.mxu0 0.0
    %397 = vmatpush1.xpose.msra.mxu0 0.0
    %398 = vmatprep.subr.mxu0 0.0
    %399 = vmatpush1.xpose.msra.mxu0 0.0
    %400 = vmatprep.subr.mxu0 0.0
    %401 = vmatpush1.xpose.msra.mxu0 0.0
    %402 = vmatprep.subr.mxu0 0.0
    %403 = vmatpush1.xpose.msra.mxu0 0.0
    %404 = vmatprep.subr.mxu0 0.0
    %405 = vmatpush1.xpose.msra.mxu0 0.0
    %406 = vmatprep.subr.mxu0 0.0
    %407 = vmatpush1.xpose.msra.mxu0 0.0
    %408 = vmatprep.subr.mxu0 0.0
    %409 = vmatpush1.xpose.msra.mxu0 0.0
    %410 = vmatprep.subr.mxu0 0.0
    %411 = vmatpush1.xpose.msra.mxu0 0.0
    %412 = vmatprep.subr.mxu0 0.0
    %413 = vmatpush1.xpose.msra.mxu0 0.0
    %414 = vmatprep.subr.mxu0 0.0
    %415 = vmatpush1.xpose.msra.mxu0 0.0
    %416 = vmatprep.subr.mxu0 0.0
    %417 = vmatpush1.xpose.msra.mxu0 0.0
    %418 = vmatprep.subr.mxu0 0.0
    %419 = vmatpush1.xpose.msra.mxu0 0.0
    %420 = vmatprep.subr.mxu0 0.0
    %421 = vmatpush1.xpose.msra.mxu0 0.0
    %422 = vmatprep.subr.mxu0 0.0
    %423 = vmatpush1.xpose.msra.mxu0 0.0
    %424 = vmatprep.subr.mxu0 0.0
    %425 = vmatpush1.xpose.msra.mxu0 0.0
    %426 = vmatprep.subr.mxu0 0.0
    %427 = vmatpush1.xpose.msra.mxu0 0.0
    %428 = vmatprep.subr.mxu0 0.0
    %429 = vmatpush1.xpose.msra.mxu0 0.0
    %430 = vmatprep.subr.mxu0 0.0
    %431 = vmatpush1.xpose.msra.mxu0 0.0
    %432 = vmatprep.subr.mxu0 0.0
    %433 = vmatpush1.xpose.msra.mxu0 0.0
    %434 = vmatprep.subr.mxu0 0.0
    %435 = vmatpush1.xpose.msra.mxu0 0.0
    %436 = vmatprep.subr.mxu0 0.0
    %437 = vmatpush1.xpose.msra.mxu0 0.0
    %438 = vmatprep.subr.mxu0 0.0
    %439 = vmatpush1.xpose.msra.mxu0 0.0
    %440 = vmatprep.subr.mxu0 0.0
    %441 = vmatpush1.xpose.msra.mxu0 0.0
    %442 = vmatprep.subr.mxu0 0.0
    %443 = vmatpush1.xpose.msra.mxu0 0.0
    %444 = vmatprep.subr.mxu0 0.0
    %445 = vmatpush1.xpose.msra.mxu0 0.0
    %446 = vmatprep.subr.mxu0 0.0
    %447 = vmatpush1.xpose.msra.mxu0 0.0
    %448 = vmatprep.subr.mxu0 0.0
    %449 = vmatpush1.xpose.msra.mxu0 0.0
    %450 = vmatprep.subr.mxu0 0.0
    %451 = vmatpush1.xpose.msra.mxu0 0.0
    %452 = vmatprep.mubr.f32.mxu0 0.0
    %453 = vmatmul.mubr.f32.gmra.mrb[0].mxu0 %v384
    %v454 = vpop.f32.mrb[0].mxu0
    %v455 = vadd.f32 0.0, %v454
    %v456 = vpop.f32.mrb[0].mxu0
    %457 = vdwg.mxu0
    %459 = vrot.lane.b32.xlu0 %v377, 112
    %v460 = vpop.permute.xlu0 %459
    %v461 = vsel %vm383, %v377, 0
    %v463 = vsel %vm383, %v460, 0
    %465 = vmatprep.subr.mxu0 0.0
    %466 = vmatpush1.xpose.msra.mxu0 %v463
    %467 = vmatprep.subr.mxu0 0.0
    %468 = vmatpush1.xpose.msra.mxu0 0.0
    %469 = vmatprep.subr.mxu0 0.0
    %470 = vmatpush1.xpose.msra.mxu0 0.0
    %471 = vmatprep.subr.mxu0 0.0
    %472 = vmatpush1.xpose.msra.mxu0 0.0
    %473 = vmatprep.subr.mxu0 0.0
    %474 = vmatpush1.xpose.msra.mxu0 0.0
    %475 = vmatprep.subr.mxu0 0.0
    %476 = vmatpush1.xpose.msra.mxu0 0.0
    %477 = vmatprep.subr.mxu0 0.0
    %478 = vmatpush1.xpose.msra.mxu0 0.0
    %479 = vmatprep.subr.mxu0 0.0
    %480 = vmatpush1.xpose.msra.mxu0 0.0
    %481 = vmatprep.subr.mxu0 0.0
    %482 = vmatpush1.xpose.msra.mxu0 0.0
    %483 = vmatprep.subr.mxu0 0.0
    %484 = vmatpush1.xpose.msra.mxu0 0.0
    %485 = vmatprep.subr.mxu0 0.0
    %486 = vmatpush1.xpose.msra.mxu0 0.0
    %487 = vmatprep.subr.mxu0 0.0
    %488 = vmatpush1.xpose.msra.mxu0 0.0
    %489 = vmatprep.subr.mxu0 0.0
    %490 = vmatpush1.xpose.msra.mxu0 0.0
    %491 = vmatprep.subr.mxu0 0.0
    %492 = vmatpush1.xpose.msra.mxu0 0.0
    %493 = vmatprep.subr.mxu0 0.0
    %494 = vmatpush1.xpose.msra.mxu0 0.0
    %495 = vmatprep.subr.mxu0 0.0
    %496 = vmatpush1.xpose.msra.mxu0 0.0
    %497 = vmatprep.subr.mxu0 0.0
    %498 = vmatpush1.xpose.msra.mxu0 0.0
    %499 = vmatprep.subr.mxu0 0.0
    %500 = vmatpush1.xpose.msra.mxu0 0.0
    %501 = vmatprep.subr.mxu0 0.0
    %502 = vmatpush1.xpose.msra.mxu0 0.0
    %503 = vmatprep.subr.mxu0 0.0
    %504 = vmatpush1.xpose.msra.mxu0 0.0
    %505 = vmatprep.subr.mxu0 0.0
    %506 = vmatpush1.xpose.msra.mxu0 0.0
    %507 = vmatprep.subr.mxu0 0.0
    %508 = vmatpush1.xpose.msra.mxu0 0.0
    %509 = vmatprep.subr.mxu0 0.0
    %510 = vmatpush1.xpose.msra.mxu0 0.0
    %511 = vmatprep.subr.mxu0 0.0
    %512 = vmatpush1.xpose.msra.mxu0 0.0
    %513 = vmatprep.subr.mxu0 0.0
    %514 = vmatpush1.xpose.msra.mxu0 0.0
    %515 = vmatprep.subr.mxu0 0.0
    %516 = vmatpush1.xpose.msra.mxu0 0.0
    %517 = vmatprep.subr.mxu0 0.0
    %518 = vmatpush1.xpose.msra.mxu0 0.0
    %519 = vmatprep.subr.mxu0 0.0
    %520 = vmatpush1.xpose.msra.mxu0 0.0
    %521 = vmatprep.subr.mxu0 0.0
    %522 = vmatpush1.xpose.msra.mxu0 0.0
    %523 = vmatprep.subr.mxu0 0.0
    %524 = vmatpush1.xpose.msra.mxu0 0.0
    %525 = vmatprep.subr.mxu0 0.0
    %526 = vmatpush1.xpose.msra.mxu0 0.0
    %527 = vmatprep.subr.mxu0 0.0
    %528 = vmatpush1.xpose.msra.mxu0 0.0
    %529 = vmatprep.mubr.f32.mxu0 0.0
    %530 = vmatmul.mubr.f32.gmra.mrb[0].mxu0 %v461
    %v531 = vpop.f32.mrb[0].mxu0
    %v532 = vadd.f32 0.0, %v531
    %v533 = vpop.f32.mrb[0].mxu0
    %534 = vdwg.mxu0
    %v535 = vmul.f32 %v455, 0.25
    %v536 = vmul.f32 %v532, 0.25
    %vm537 = vcmask 64512
    %v538 = vsel %vm537, %v535, -inf
    %539 = vmax.xlane.f32.xlu0 %v538
    %v540 = vpop.xlane.xlu0 %539
    %v541 = vsel %vm537, %v536, -inf
    %542 = vmax.xlane.f32.xlu0 %v541
    %v543 = vpop.xlane.xlu0 %542
    %v544 = vsub.f32 %v535, %v540
    %v545 = vsub.f32 %v536, %v543
    %v546 = vmul.f32 %v544, 1.442695
    %v547 = vpow.pop %v546
    %v548 = vmul.f32 %v545, 1.442695
    %v549 = vpow.pop %v548
    %v550 = vsel %vm537, %v547, 0.0
    %551 = vadd.xlane.f32.xlu0 %v550
    %v552 = vpop.xlane.xlu0 %551
    %v553 = vsel %vm537, %v549, 0.0
    %554 = vadd.xlane.f32.xlu0 %v553
    %v555 = vpop.xlane.xlu0 %554
    %v556 = vrcp.pop %v552
    %v557 = vrcp.pop %v555
    %v558 = vmul.f32 %v547, %v556
    %v559 = vmul.f32 %v549, %v557
    %560 = vrot.lane.b32.xlu0 %v372, 96
    %v561 = vpop.permute.xlu0 %560
    %v564 = vsel %vm537, %v558, 0
    %566 = vmatprep.subr.mxu0 0.0
    %567 = vmatpush1.msra.mxu0 %v561
    %568 = vmatprep.subr.mxu0 0.0
    %569 = vmatpush1.msra.mxu0 0.0
    %570 = vmatprep.subr.mxu0 0.0
    %571 = vmatpush1.msra.mxu0 0.0
    %572 = vmatprep.subr.mxu0 0.0
    %573 = vmatpush1.msra.mxu0 0.0
    %574 = vmatprep.subr.mxu0 0.0
    %575 = vmatpush1.msra.mxu0 0.0
    %576 = vmatprep.subr.mxu0 0.0
    %577 = vmatpush1.msra.mxu0 0.0
    %578 = vmatprep.subr.mxu0 0.0
    %579 = vmatpush1.msra.mxu0 0.0
    %580 = vmatprep.subr.mxu0 0.0
    %581 = vmatpush1.msra.mxu0 0.0
    %582 = vmatprep.subr.mxu0 0.0
    %583 = vmatpush1.msra.mxu0 0.0
    %584 = vmatprep.subr.mxu0 0.0
    %585 = vmatpush1.msra.mxu0 0.0
    %586 = vmatprep.subr.mxu0 0.0
    %587 = vmatpush1.msra.mxu0 0.0
    %588 = vmatprep.subr.mxu0 0.0
    %589 = vmatpush1.msra.mxu0 0.0
    %590 = vmatprep.subr.mxu0 0.0
    %591 = vmatpush1.msra.mxu0 0.0
    %592 = vmatprep.subr.mxu0 0.0
    %593 = vmatpush1.msra.mxu0 0.0
    %594 = vmatprep.subr.mxu0 0.0
    %595 = vmatpush1.msra.mxu0 0.0
    %596 = vmatprep.subr.mxu0 0.0
    %597 = vmatpush1.msra.mxu0 0.0
    %598 = vmatprep.subr.mxu0 0.0
    %599 = vmatpush1.msra.mxu0 0.0
    %600 = vmatprep.subr.mxu0 0.0
    %601 = vmatpush1.msra.mxu0 0.0
    %602 = vmatprep.subr.mxu0 0.0
    %603 = vmatpush1.msra.mxu0 0.0
    %604 = vmatprep.subr.mxu0 0.0
    %605 = vmatpush1.msra.mxu0 0.0
    %606 = vmatprep.subr.mxu0 0.0
    %607 = vmatpush1.msra.mxu0 0.0
    %608 = vmatprep.subr.mxu0 0.0
    %609 = vmatpush1.msra.mxu0 0.0
    %610 = vmatprep.subr.mxu0 0.0
    %611 = vmatpush1.msra.mxu0 0.0
    %612 = vmatprep.subr.mxu0 0.0
    %613 = vmatpush1.msra.mxu0 0.0
    %614 = vmatprep.subr.mxu0 0.0
    %615 = vmatpush1.msra.mxu0 0.0
    %616 = vmatprep.subr.mxu0 0.0
    %617 = vmatpush1.msra.mxu0 0.0
    %618 = vmatprep.subr.mxu0 0.0
    %619 = vmatpush1.msra.mxu0 0.0
    %620 = vmatprep.subr.mxu0 0.0
    %621 = vmatpush1.msra.mxu0 0.0
    %622 = vmatprep.subr.mxu0 0.0
    %623 = vmatpush1.msra.mxu0 0.0
    %624 = vmatprep.subr.mxu0 0.0
    %625 = vmatpush1.msra.mxu0 0.0
    %626 = vmatprep.subr.mxu0 0.0
    %627 = vmatpush1.msra.mxu0 0.0
    %628 = vmatprep.subr.mxu0 0.0
    %629 = vmatpush1.msra.mxu0 0.0
    %630 = vmatprep.mubr.f32.mxu0 0.0
    %631 = vmatmul.mubr.f32.gmra.mrb[0].mxu0 %v564
    %v632 = vpop.f32.mrb[0].mxu0
    %v633 = vadd.f32 0.0, %v632
    %v634 = vpop.f32.mrb[0].mxu0
    %635 = vdwg.mxu0
    %636 = vrot.lane.b32.xlu0 %v377, 96
    %v637 = vpop.permute.xlu0 %636
    %v640 = vsel %vm537, %v559, 0
    %642 = vmatprep.subr.mxu0 0.0
    %643 = vmatpush1.msra.mxu0 %v637
    %644 = vmatprep.subr.mxu0 0.0
    %645 = vmatpush1.msra.mxu0 0.0
    %646 = vmatprep.subr.mxu0 0.0
    %647 = vmatpush1.msra.mxu0 0.0
    %648 = vmatprep.subr.mxu0 0.0
    %649 = vmatpush1.msra.mxu0 0.0
    %650 = vmatprep.subr.mxu0 0.0
    %651 = vmatpush1.msra.mxu0 0.0
    %652 = vmatprep.subr.mxu0 0.0
    %653 = vmatpush1.msra.mxu0 0.0
    %654 = vmatprep.subr.mxu0 0.0
    %655 = vmatpush1.msra.mxu0 0.0
    %656 = vmatprep.subr.mxu0 0.0
    %657 = vmatpush1.msra.mxu0 0.0
    %658 = vmatprep.subr.mxu0 0.0
    %659 = vmatpush1.msra.mxu0 0.0
    %660 = vmatprep.subr.mxu0 0.0
    %661 = vmatpush1.msra.mxu0 0.0
    %662 = vmatprep.subr.mxu0 0.0
    %663 = vmatpush1.msra.mxu0 0.0
    %664 = vmatprep.subr.mxu0 0.0
    %665 = vmatpush1.msra.mxu0 0.0
    %666 = vmatprep.subr.mxu0 0.0
    %667 = vmatpush1.msra.mxu0 0.0
    %668 = vmatprep.subr.mxu0 0.0
    %669 = vmatpush1.msra.mxu0 0.0
    %670 = vmatprep.subr.mxu0 0.0
    %671 = vmatpush1.msra.mxu0 0.0
    %672 = vmatprep.subr.mxu0 0.0
    %673 = vmatpush1.msra.mxu0 0.0
    %674 = vmatprep.subr.mxu0 0.0
    %675 = vmatpush1.msra.mxu0 0.0
    %676 = vmatprep.subr.mxu0 0.0
    %677 = vmatpush1.msra.mxu0 0.0
    %678 = vmatprep.subr.mxu0 0.0
    %679 = vmatpush1.msra.mxu0 0.0
    %680 = vmatprep.subr.mxu0 0.0
    %681 = vmatpush1.msra.mxu0 0.0
    %682 = vmatprep.subr.mxu0 0.0
    %683 = vmatpush1.msra.mxu0 0.0
    %684 = vmatprep.subr.mxu0 0.0
    %685 = vmatpush1.msra.mxu0 0.0
    %686 = vmatprep.subr.mxu0 0.0
    %687 = vmatpush1.msra.mxu0 0.0
    %688 = vmatprep.subr.mxu0 0.0
    %689 = vmatpush1.msra.mxu0 0.0
    %690 = vmatprep.subr.mxu0 0.0
    %691 = vmatpush1.msra.mxu0 0.0
    %692 = vmatprep.subr.mxu0 0.0
    %693 = vmatpush1.msra.mxu0 0.0
    %694 = vmatprep.subr.mxu0 0.0
    %695 = vmatpush1.msra.mxu0 0.0
    %696 = vmatprep.subr.mxu0 0.0
    %697 = vmatpush1.msra.mxu0 0.0
    %698 = vmatprep.subr.mxu0 0.0
    %699 = vmatpush1.msra.mxu0 0.0
    %700 = vmatprep.subr.mxu0 0.0
    %701 = vmatpush1.msra.mxu0 0.0
    %702 = vmatprep.subr.mxu0 0.0
    %703 = vmatpush1.msra.mxu0 0.0
    %704 = vmatprep.subr.mxu0 0.0
    %705 = vmatpush1.msra.mxu0 0.0
    %706 = vmatprep.mubr.f32.mxu0 0.0
    %707 = vmatmul.mubr.f32.gmra.mrb[0].mxu0 %v640
    %v708 = vpop.f32.mrb[0].mxu0
    %v709 = vadd.f32 0.0, %v708
    %v710 = vpop.f32.mrb[0].mxu0
    %711 = vdwg.mxu0
    %v713 = vsel %vm298, %v633, 0
    %v716 = vsel %vm298, %v709, 0
    %718 = vmatprep.subr.mxu0 0.0
    %719 = vmatpush1.msra.mxu0 %v280
    %720 = vmatprep.subr.mxu0 0.0
    %721 = vmatpush1.msra.mxu0 %v281
    %722 = vmatprep.subr.mxu0 0.0
    %723 = vmatpush1.msra.mxu0 %v282
    %724 = vmatprep.subr.mxu0 0.0
    %725 = vmatpush1.msra.mxu0 %v283
    %726 = vmatprep.subr.mxu0 0.0
    %727 = vmatpush1.msra.mxu0 0.0
    %728 = vmatprep.subr.mxu0 0.0
    %729 = vmatpush1.msra.mxu0 0.0
    %730 = vmatprep.subr.mxu0 0.0
    %731 = vmatpush1.msra.mxu0 0.0
    %732 = vmatprep.subr.mxu0 0.0
    %733 = vmatpush1.msra.mxu0 0.0
    %734 = vmatprep.subr.mxu0 0.0
    %735 = vmatpush1.msra.mxu0 0.0
    %736 = vmatprep.subr.mxu0 0.0
    %737 = vmatpush1.msra.mxu0 0.0
    %738 = vmatprep.subr.mxu0 0.0
    %739 = vmatpush1.msra.mxu0 0.0
    %740 = vmatprep.subr.mxu0 0.0
    %741 = vmatpush1.msra.mxu0 0.0
    %742 = vmatprep.subr.mxu0 0.0
    %743 = vmatpush1.msra.mxu0 0.0
    %744 = vmatprep.subr.mxu0 0.0
    %745 = vmatpush1.msra.mxu0 0.0
    %746 = vmatprep.subr.mxu0 0.0
    %747 = vmatpush1.msra.mxu0 0.0
    %748 = vmatprep.subr.mxu0 0.0
    %749 = vmatpush1.msra.mxu0 0.0
    %750 = vmatprep.subr.mxu0 0.0
    %751 = vmatpush1.msra.mxu0 0.0
    %752 = vmatprep.subr.mxu0 0.0
    %753 = vmatpush1.msra.mxu0 0.0
    %754 = vmatprep.subr.mxu0 0.0
    %755 = vmatpush1.msra.mxu0 0.0
    %756 = vmatprep.subr.mxu0 0.0
    %757 = vmatpush1.msra.mxu0 0.0
    %758 = vmatprep.subr.mxu0 0.0
    %759 = vmatpush1.msra.mxu0 0.0
    %760 = vmatprep.subr.mxu0 0.0
    %761 = vmatpush1.msra.mxu0 0.0
    %762 = vmatprep.subr.mxu0 0.0
    %763 = vmatpush1.msra.mxu0 0.0
    %764 = vmatprep.subr.mxu0 0.0
    %765 = vmatpush1.msra.mxu0 0.0
    %766 = vmatprep.subr.mxu0 0.0
    %767 = vmatpush1.msra.mxu0 0.0
    %768 = vmatprep.subr.mxu0 0.0
    %769 = vmatpush1.msra.mxu0 0.0
    %770 = vmatprep.subr.mxu0 0.0
    %771 = vmatpush1.msra.mxu0 0.0
    %772 = vmatprep.subr.mxu0 0.0
    %773 = vmatpush1.msra.mxu0 0.0
    %774 = vmatprep.subr.mxu0 0.0
    %775 = vmatpush1.msra.mxu0 0.0
    %776 = vmatprep.subr.mxu0 0.0
    %777 = vmatpush1.msra.mxu0 0.0
    %778 = vmatprep.subr.mxu0 0.0
    %779 = vmatpush1.msra.mxu0 0.0
    %780 = vmatprep.subr.mxu0 0.0
    %781 = vmatpush1.msra.mxu0 0.0
    %782 = vmatprep.mubr.f32.mxu0 0.0
    %783 = vmatmul.mubr.f32.gmra.mrb[0].mxu0 %v713
    %v784 = vpop.f32.mrb[0].mxu0
    %v785 = vadd.f32 0.0, %v784
    %v786 = vpop.f32.mrb[0].mxu0
    %787 = vmatprep.mubr.f32.mxu0 0.0
    %788 = vmatmul.mubr.f32.gmra.mrb[0].mxu0 %v716
    %v789 = vpop.f32.mrb[0].mxu0
    %v790 = vadd.f32 0.0, %v789
    %v791 = vpop.f32.mrb[0].mxu0
    %792 = vdwg.mxu0
    %v793 = vadd.f32 %v274, %v785
    %v794 = vadd.f32 %v275, %v790
    %v795 = vsel %vm298, %v793, 0.0
    %796 = vadd.xlane.f32.xlu0 %v795
    %v797 = vpop.xlane.xlu0 %796
    %v798 = vsel %vm298, %v794, 0.0
    %799 = vadd.xlane.f32.xlu0 %v798
    %v800 = vpop.xlane.xlu0 %799
    %v801 = vrcp.pop 32.0
    %v802 = vmul.f32 %v797, %v801
    %v803 = vmul.f32 %v800, %v801
    %v804 = vsub.f32 %v793, %v802
    %v805 = vsub.f32 %v794, %v803
    %v806 = vmul.f32 %v804, %v804
    %v807 = vmul.f32 %v805, %v805
    %v808 = vsel %vm298, %v806, 0.0
    %809 = vadd.xlane.f32.xlu0 %v808
    %v810 = vpop.xlane.xlu0 %809
    %v811 = vsel %vm298, %v807, 0.0
    %812 = vadd.xlane.f32.xlu0 %v811
    %v813 = vpop.xlane.xlu0 %812
    %v814 = vmul.f32 %v810, %v801
    %v815 = vmul.f32 %v813, %v801
    %v816 = vadd.f32 %v814, 1e-05
    %v817 = vadd.f32 %v815, 1e-05
    %v818 = vrsqrt.pop %v816
    %v819 = vrsqrt.pop %v817
    %v820 = vmul.f32 %v804, %v818
    %v821 = vmul.f32 %v805, %v819
    %v823 = vlaneseq
    %v824 = vshrl.u32 %v823, 7
    %v825 = vsub.s32 0, %v824
    %v826 = vrot.slane %v294, %v825
    %v828 = vmul.f32 %v820, %v826
    %v829 = vmul.f32 %v821, %v826
    %v831 = vlaneseq
    %v832 = vshrl.u32 %v831, 7
    %v833 = vsub.s32 0, %v832
    %v834 = vrot.slane %v295, %v833
    %v836 = vadd.f32 %v828, %v834
    %v837 = vadd.f32 %v829, %v834
    %v839 = vlaneseq
    %v840 = vshrl.u32 %v839, 7
    %v841 = vsub.s32 0, %v840
    %v842 = vrot.slane %v293, %v841
    %v845 = vsel %vm298, %v836, 0
    %v848 = vsel %vm298, %v837, 0
    %850 = vmatprep.subr.mxu0 0.0
    %851 = vmatpush1.msra.mxu0 %v289
    %852 = vmatprep.subr.mxu0 0.0
    %853 = vmatpush1.msra.mxu0 %v290
    %854 = vmatprep.subr.mxu0 0.0
    %855 = vmatpush1.msra.mxu0 %v291
    %856 = vmatprep.subr.mxu0 0.0
    %857 = vmatpush1.msra.mxu0 %v292
    %858 = vmatprep.subr.mxu0 0.0
    %859 = vmatpush1.msra.mxu0 0.0
    %860 = vmatprep.subr.mxu0 0.0
    %861 = vmatpush1.msra.mxu0 0.0
    %862 = vmatprep.subr.mxu0 0.0
    %863 = vmatpush1.msra.mxu0 0.0
    %864 = vmatprep.subr.mxu0 0.0
    %865 = vmatpush1.msra.mxu0 0.0
    %866 = vmatprep.subr.mxu0 0.0
    %867 = vmatpush1.msra.mxu0 0.0
    %868 = vmatprep.subr.mxu0 0.0
    %869 = vmatpush1.msra.mxu0 0.0
    %870 = vmatprep.subr.mxu0 0.0
    %871 = vmatpush1.msra.mxu0 0.0
    %872 = vmatprep.subr.mxu0 0.0
    %873 = vmatpush1.msra.mxu0 0.0
    %874 = vmatprep.subr.mxu0 0.0
    %875 = vmatpush1.msra.mxu0 0.0
    %876 = vmatprep.subr.mxu0 0.0
    %877 = vmatpush1.msra.mxu0 0.0
    %878 = vmatprep.subr.mxu0 0.0
    %879 = vmatpush1.msra.mxu0 0.0
    %880 = vmatprep.subr.mxu0 0.0
    %881 = vmatpush1.msra.mxu0 0.0
    %882 = vmatprep.subr.mxu0 0.0
    %883 = vmatpush1.msra.mxu0 0.0
    %884 = vmatprep.subr.mxu0 0.0
    %885 = vmatpush1.msra.mxu0 0.0
    %886 = vmatprep.subr.mxu0 0.0
    %887 = vmatpush1.msra.mxu0 0.0
    %888 = vmatprep.subr.mxu0 0.0
    %889 = vmatpush1.msra.mxu0 0.0
    %890 = vmatprep.subr.mxu0 0.0
    %891 = vmatpush1.msra.mxu0 0.0
    %892 = vmatprep.subr.mxu0 0.0
    %893 = vmatpush1.msra.mxu0 0.0
    %894 = vmatprep.subr.mxu0 0.0
    %895 = vmatpush1.msra.mxu0 0.0
    %896 = vmatprep.subr.mxu0 0.0
    %897 = vmatpush1.msra.mxu0 0.0
    %898 = vmatprep.subr.mxu0 0.0
    %899 = vmatpush1.msra.mxu0 0.0
    %900 = vmatprep.subr.mxu0 0.0
    %901 = vmatpush1.msra.mxu0 0.0
    %902 = vmatprep.subr.mxu0 0.0
    %903 = vmatpush1.msra.mxu0 0.0
    %904 = vmatprep.subr.mxu0 0.0
    %905 = vmatpush1.msra.mxu0 0.0
    %906 = vmatprep.subr.mxu0 0.0
    %907 = vmatpush1.msra.mxu0 0.0
    %908 = vmatprep.subr.mxu0 0.0
    %909 = vmatpush1.msra.mxu0 0.0
    %910 = vmatprep.subr.mxu0 0.0
    %911 = vmatpush1.msra.mxu0 0.0
    %912 = vmatprep.subr.mxu0 0.0
    %913 = vmatpush1.msra.mxu0 0.0
    %914 = vmatprep.mubr.f32.mxu0 0.0
    %915 = vmatmul.mubr.f32.gmra.mrb[0].mxu0 %v845
    %v916 = vpop.f32.mrb[0].mxu0
    %v917 = vadd.f32 %v842, %v916
    %v918 = vpop.f32.mrb[0].mxu0
    %919 = vmatprep.mubr.f32.mxu0 0.0
    %920 = vmatmul.mubr.f32.gmra.mrb[0].mxu0 %v848
    %v921 = vpop.f32.mrb[0].mxu0
    %v922 = vadd.f32 %v842, %v921
    %v923 = vpop.f32.mrb[0].mxu0
    %924 = vdwg.mxu0
    %vm925 = vcmp.gt.f32.partialorder %v917, 0.0
    %vm926 = vcmp.gt.f32.partialorder %v922, 0.0
    %v927 = vmin.f32 %v917, 0.0
    %v928 = vmin.f32 %v922, 0.0
    %v929 = vmul.f32 %v927, 1.442695
    %v930 = vpow.pop %v929
    %v931 = vmul.f32 %v928, 1.442695
    %v932 = vpow.pop %v931
    %v933 = vsub.f32 %v930, 1.0
    %v934 = vsub.f32 %v932, 1.0
    %v935 = vsel %vm925, %v917, %v933
    %v936 = vsel %vm926, %v922, %v934
    %v938 = vlaneseq
    %v939 = vshrl.u32 %v938, 7
    %v940 = vsub.s32 0, %v939
    %v941 = vrot.slane %v288, %v940
    %v944 = vsel %vm298, %v935, 0
    %v947 = vsel %vm298, %v936, 0
    %949 = vmatprep.subr.mxu0 0.0
    %950 = vmatpush1.msra.mxu0 %v284
    %951 = vmatprep.subr.mxu0 0.0
    %952 = vmatpush1.msra.mxu0 %v285
    %953 = vmatprep.subr.mxu0 0.0
    %954 = vmatpush1.msra.mxu0 %v286
    %955 = vmatprep.subr.mxu0 0.0
    %956 = vmatpush1.msra.mxu0 %v287
    %957 = vmatprep.subr.mxu0 0.0
    %958 = vmatpush1.msra.mxu0 0.0
    %959 = vmatprep.subr.mxu0 0.0
    %960 = vmatpush1.msra.mxu0 0.0
    %961 = vmatprep.subr.mxu0 0.0
    %962 = vmatpush1.msra.mxu0 0.0
    %963 = vmatprep.subr.mxu0 0.0
    %964 = vmatpush1.msra.mxu0 0.0
    %965 = vmatprep.subr.mxu0 0.0
    %966 = vmatpush1.msra.mxu0 0.0
    %967 = vmatprep.subr.mxu0 0.0
    %968 = vmatpush1.msra.mxu0 0.0
    %969 = vmatprep.subr.mxu0 0.0
    %970 = vmatpush1.msra.mxu0 0.0
    %971 = vmatprep.subr.mxu0 0.0
    %972 = vmatpush1.msra.mxu0 0.0
    %973 = vmatprep.subr.mxu0 0.0
    %974 = vmatpush1.msra.mxu0 0.0
    %975 = vmatprep.subr.mxu0 0.0
    %976 = vmatpush1.msra.mxu0 0.0
    %977 = vmatprep.subr.mxu0 0.0
    %978 = vmatpush1.msra.mxu0 0.0
    %979 = vmatprep.subr.mxu0 0.0
    %980 = vmatpush1.msra.mxu0 0.0
    %981 = vmatprep.subr.mxu0 0.0
    %982 = vmatpush1.msra.mxu0 0.0
    %983 = vmatprep.subr.mxu0 0.0
    %984 = vmatpush1.msra.mxu0 0.0
    %985 = vmatprep.subr.mxu0 0.0
    %986 = vmatpush1.msra.mxu0 0.0
    %987 = vmatprep.subr.mxu0 0.0
    %988 = vmatpush1.msra.mxu0 0.0
    %989 = vmatprep.subr.mxu0 0.0
    %990 = vmatpush1.msra.mxu0 0.0
    %991 = vmatprep.subr.mxu0 0.0
    %992 = vmatpush1.msra.mxu0 0.0
    %993 = vmatprep.subr.mxu0 0.0
    %994 = vmatpush1.msra.mxu0 0.0
    %995 = vmatprep.subr.mxu0 0.0
    %996 = vmatpush1.msra.mxu0 0.0
    %997 = vmatprep.subr.mxu0 0.0
    %998 = vmatpush1.msra.mxu0 0.0
    %999 = vmatprep.subr.mxu0 0.0
    %1000 = vmatpush1.msra.mxu0 0.0
    %1001 = vmatprep.subr.mxu0 0.0
    %1002 = vmatpush1.msra.mxu0 0.0
    %1003 = vmatprep.subr.mxu0 0.0
    %1004 = vmatpush1.msra.mxu0 0.0
    %1005 = vmatprep.subr.mxu0 0.0
    %1006 = vmatpush1.msra.mxu0 0.0
    %1007 = vmatprep.subr.mxu0 0.0
    %1008 = vmatpush1.msra.mxu0 0.0
    %1009 = vmatprep.subr.mxu0 0.0
    %1010 = vmatpush1.msra.mxu0 0.0
    %1011 = vmatprep.subr.mxu0 0.0
    %1012 = vmatpush1.msra.mxu0 0.0
    %1013 = vmatprep.mubr.f32.mxu0 0.0
    %1014 = vmatmul.mubr.f32.gmra.mrb[0].mxu0 %v944
    %v1015 = vpop.f32.mrb[0].mxu0
    %v1016 = vadd.f32 %v941, %v1015
    %v1017 = vpop.f32.mrb[0].mxu0
    %1018 = vmatprep.mubr.f32.mxu0 0.0
    %1019 = vmatmul.mubr.f32.gmra.mrb[0].mxu0 %v947
    %v1020 = vpop.f32.mrb[0].mxu0
    %v1021 = vadd.f32 %v941, %v1020
    %v1022 = vpop.f32.mrb[0].mxu0
    %1023 = vdwg.mxu0
    %v1024 = vadd.f32 %v836, %v1016
    %v1025 = vadd.f32 %v837, %v1021
    %v1026 = vsel %vm298, %v1024, 0.0
    %1027 = vadd.xlane.f32.xlu0 %v1026
    %v1028 = vpop.xlane.xlu0 %1027
    %v1029 = vsel %vm298, %v1025, 0.0
    %1030 = vadd.xlane.f32.xlu0 %v1029
    %v1031 = vpop.xlane.xlu0 %1030
    %v1032 = vmul.f32 %v1028, %v801
    %v1033 = vmul.f32 %v1031, %v801
    %v1034 = vsub.f32 %v1024, %v1032
    %v1035 = vsub.f32 %v1025, %v1033
    %v1036 = vmul.f32 %v1034, %v1034
    %v1037 = vmul.f32 %v1035, %v1035
    %v1038 = vsel %vm298, %v1036, 0.0
    %1039 = vadd.xlane.f32.xlu0 %v1038
    %v1040 = vpop.xlane.xlu0 %1039
    %v1041 = vsel %vm298, %v1037, 0.0
    %1042 = vadd.xlane.f32.xlu0 %v1041
    %v1043 = vpop.xlane.xlu0 %1042
    %v1044 = vmul.f32 %v1040, %v801
    %v1045 = vmul.f32 %v1043, %v801
    %v1046 = vadd.f32 %v1044, 1e-05
    %v1047 = vadd.f32 %v1045, 1e-05
    %v1048 = vrsqrt.pop %v1046
    %v1049 = vrsqrt.pop %v1047
    %v1050 = vmul.f32 %v1034, %v1048
    %v1051 = vmul.f32 %v1035, %v1049
    %v1053 = vlaneseq
    %v1054 = vshrl.u32 %v1053, 7
    %v1055 = vsub.s32 0, %v1054
    %v1056 = vrot.slane %v296, %v1055
    %v1058 = vmul.f32 %v1050, %v1056
    %v1059 = vmul.f32 %v1051, %v1056
    %v1061 = vlaneseq
    %v1062 = vshrl.u32 %v1061, 7
    %v1063 = vsub.s32 0, %v1062
    %v1064 = vrot.slane %v297, %v1063
    %v1066 = vadd.f32 %v1058, %v1064
    %v1067 = vadd.f32 %v1059, %v1064
    %v1068 = vld [vmem:[%s3] sm:$0xff]
    %v1069 = vld [vmem:[%s3 + $0x8] sm:$0xff]
    %v1070 = vld [vmem:[#allocation7] sm:$0xf]
    %v1071 = vld [vmem:[%s13] sm:$0x1]
    %v1073 = vlaneseq
    %v1074 = vshrl.u32 %v1073, 7
    %v1075 = vsub.s32 0, %v1074
    %v1076 = vrot.slane %v1071, %v1075
    %v1079 = vsel %vm186, %v1068, 0
    %v1082 = vsel %vm186, %v1069, 0
    %v1085 = vsel %vm193, %v1070, 0
    %1087 = vmatprep.subr.mxu0 0.0
    %1088 = vmatpush1.msra.mxu0 %v1085
    %1089 = vmatprep.subr.mxu0 0.0
    %1090 = vmatpush1.msra.mxu0 0.0
    %1091 = vmatprep.subr.mxu0 0.0
    %1092 = vmatpush1.msra.mxu0 0.0
    %1093 = vmatprep.subr.mxu0 0.0
    %1094 = vmatpush1.msra.mxu0 0.0
    %1095 = vmatprep.subr.mxu0 0.0
    %1096 = vmatpush1.msra.mxu0 0.0
    %1097 = vmatprep.subr.mxu0 0.0
    %1098 = vmatpush1.msra.mxu0 0.0
    %1099 = vmatprep.subr.mxu0 0.0
    %1100 = vmatpush1.msra.mxu0 0.0
    %1101 = vmatprep.subr.mxu0 0.0
    %1102 = vmatpush1.msra.mxu0 0.0
    %1103 = vmatprep.subr.mxu0 0.0
    %1104 = vmatpush1.msra.mxu0 0.0
    %1105 = vmatprep.subr.mxu0 0.0
    %1106 = vmatpush1.msra.mxu0 0.0
    %1107 = vmatprep.subr.mxu0 0.0
    %1108 = vmatpush1.msra.mxu0 0.0
    %1109 = vmatprep.subr.mxu0 0.0
    %1110 = vmatpush1.msra.mxu0 0.0
    %1111 = vmatprep.subr.mxu0 0.0
    %1112 = vmatpush1.msra.mxu0 0.0
    %1113 = vmatprep.subr.mxu0 0.0
    %1114 = vmatpush1.msra.mxu0 0.0
    %1115 = vmatprep.subr.mxu0 0.0
    %1116 = vmatpush1.msra.mxu0 0.0
    %1117 = vmatprep.subr.mxu0 0.0
    %1118 = vmatpush1.msra.mxu0 0.0
    %1119 = vmatprep.subr.mxu0 0.0
    %1120 = vmatpush1.msra.mxu0 0.0
    %1121 = vmatprep.subr.mxu0 0.0
    %1122 = vmatpush1.msra.mxu0 0.0
    %1123 = vmatprep.subr.mxu0 0.0
    %1124 = vmatpush1.msra.mxu0 0.0
    %1125 = vmatprep.subr.mxu0 0.0
    %1126 = vmatpush1.msra.mxu0 0.0
    %1127 = vmatprep.subr.mxu0 0.0
    %1128 = vmatpush1.msra.mxu0 0.0
    %1129 = vmatprep.subr.mxu0 0.0
    %1130 = vmatpush1.msra.mxu0 0.0
    %1131 = vmatprep.subr.mxu0 0.0
    %1132 = vmatpush1.msra.mxu0 0.0
    %1133 = vmatprep.subr.mxu0 0.0
    %1134 = vmatpush1.msra.mxu0 0.0
    %1135 = vmatprep.subr.mxu0 0.0
    %1136 = vmatpush1.msra.mxu0 0.0
    %1137 = vmatprep.subr.mxu0 0.0
    %1138 = vmatpush1.msra.mxu0 0.0
    %1139 = vmatprep.subr.mxu0 0.0
    %1140 = vmatpush1.msra.mxu0 0.0
    %1141 = vmatprep.subr.mxu0 0.0
    %1142 = vmatpush1.msra.mxu0 0.0
    %1143 = vmatprep.subr.mxu0 0.0
    %1144 = vmatpush1.msra.mxu0 0.0
    %1145 = vmatprep.subr.mxu0 0.0
    %1146 = vmatpush1.msra.mxu0 0.0
    %1147 = vmatprep.subr.mxu0 0.0
    %1148 = vmatpush1.msra.mxu0 0.0
    %1149 = vmatprep.subr.mxu0 0.0
    %1150 = vmatpush1.msra.mxu0 0.0
    %1151 = vmatprep.mubr.f32.mxu0 0.0
    %1152 = vmatmul.mubr.f32.gmra.mrb[0].mxu0 %v1079
    %v1153 = vpop.f32.mrb[0].mxu0
    %v1154 = vadd.f32 %v1076, %v1153
    %v1155 = vpop.f32.mrb[0].mxu0
    %1156 = vmatprep.mubr.f32.mxu0 0.0
    %1157 = vmatmul.mubr.f32.gmra.mrb[0].mxu0 %v1082
    %v1158 = vpop.f32.mrb[0].mxu0
    %v1159 = vadd.f32 %v1076, %v1158
    %v1160 = vpop.f32.mrb[0].mxu0
    %1161 = vdwg.mxu0
    %v1162 = vld [vmem:[%s39] sm:$0xff]
    %v1163 = vld [vmem:[%s39 + $0x8] sm:$0xff]
    %v1164 = vld [vmem:[%s39 + $0x10] sm:$0xff]
    %v1165 = vld [vmem:[%s39 + $0x18] sm:$0xff]
    %v1166 = vld [vmem:[%s41] sm:$0xff]
    %v1167 = vld [vmem:[%s41 + $0x8] sm:$0xff]
    %v1168 = vld [vmem:[%s41 + $0x10] sm:$0xff]
    %v1169 = vld [vmem:[%s41 + $0x18] sm:$0xff]
    %v1170 = vld [vmem:[%s43] sm:$0xff]
    %v1171 = vld [vmem:[%s43 + $0x8] sm:$0xff]
    %v1172 = vld [vmem:[%s43 + $0x10] sm:$0xff]
    %v1173 = vld [vmem:[%s43 + $0x18] sm:$0xff]
    %v1174 = vld [vmem:[%s45] sm:$0xff]
    %v1175 = vld [vmem:[%s45 + $0x8] sm:$0xff]
    %v1176 = vld [vmem:[%s45 + $0x10] sm:$0xff]
    %v1177 = vld [vmem:[%s45 + $0x18] sm:$0xff]
    %v1178 = vld [vmem:[%s47] sm:$0xff]
    %v1179 = vld [vmem:[%s47 + $0x8] sm:$0xff]
    %v1180 = vld [vmem:[%s47 + $0x10] sm:$0xff]
    %v1181 = vld [vmem:[%s47 + $0x18] sm:$0xff]
    %v1182 = vld [vmem:[%s49] sm:$0x1]
    %v1183 = vld [vmem:[%s51] sm:$0xff]
    %v1184 = vld [vmem:[%s51 + $0x8] sm:$0xff]
    %v1185 = vld [vmem:[%s51 + $0x10] sm:$0xff]
    %v1186 = vld [vmem:[%s51 + $0x18] sm:$0xff]
    %v1187 = vld [vmem:[%s53] sm:$0x1]
    %v1188 = vld [vmem:[%s55] sm:$0x1]
    %v1189 = vld [vmem:[%s57] sm:$0x1]
    %v1190 = vld [vmem:[%s59] sm:$0x1]
    %v1191 = vld [vmem:[%s61] sm:$0x1]
    %v1192 = vld [vmem:[%s63] sm:$0x1]
    %v1193 = vld [vmem:[%s65] sm:$0x1]
    %v1195 = vsel %vm298, %v1154, 0
    %v1198 = vsel %vm298, %v1159, 0
    %1200 = vmatprep.subr.mxu0 0.0
    %1201 = vmatpush1.msra.mxu0 %v1162
    %1202 = vmatprep.subr.mxu0 0.0
    %1203 = vmatpush1.msra.mxu0 %v1163
    %1204 = vmatprep.subr.mxu0 0.0
    %1205 = vmatpush1.msra.mxu0 %v1164
    %1206 = vmatprep.subr.mxu0 0.0
    %1207 = vmatpush1.msra.mxu0 %v1165
    %1208 = vmatprep.subr.mxu0 0.0
    %1209 = vmatpush1.msra.mxu0 0.0
    %1210 = vmatprep.subr.mxu0 0.0
    %1211 = vmatpush1.msra.mxu0 0.0
    %1212 = vmatprep.subr.mxu0 0.0
    %1213 = vmatpush1.msra.mxu0 0.0
    %1214 = vmatprep.subr.mxu0 0.0
    %1215 = vmatpush1.msra.mxu0 0.0
    %1216 = vmatprep.subr.mxu0 0.0
    %1217 = vmatpush1.msra.mxu0 0.0
    %1218 = vmatprep.subr.mxu0 0.0
    %1219 = vmatpush1.msra.mxu0 0.0
    %1220 = vmatprep.subr.mxu0 0.0
    %1221 = vmatpush1.msra.mxu0 0.0
    %1222 = vmatprep.subr.mxu0 0.0
    %1223 = vmatpush1.msra.mxu0 0.0
    %1224 = vmatprep.subr.mxu0 0.0
    %1225 = vmatpush1.msra.mxu0 0.0
    %1226 = vmatprep.subr.mxu0 0.0
    %1227 = vmatpush1.msra.mxu0 0.0
    %1228 = vmatprep.subr.mxu0 0.0
    %1229 = vmatpush1.msra.mxu0 0.0
    %1230 = vmatprep.subr.mxu0 0.0
    %1231 = vmatpush1.msra.mxu0 0.0
    %1232 = vmatprep.subr.mxu0 0.0
    %1233 = vmatpush1.msra.mxu0 0.0
    %1234 = vmatprep.subr.mxu0 0.0
    %1235 = vmatpush1.msra.mxu0 0.0
    %1236 = vmatprep.subr.mxu0 0.0
    %1237 = vmatpush1.msra.mxu0 0.0
    %1238 = vmatprep.subr.mxu0 0.0
    %1239 = vmatpush1.msra.mxu0 0.0
    %1240 = vmatprep.subr.mxu0 0.0
    %1241 = vmatpush1.msra.mxu0 0.0
    %1242 = vmatprep.subr.mxu0 0.0
    %1243 = vmatpush1.msra.mxu0 0.0
    %1244 = vmatprep.subr.mxu0 0.0
    %1245 = vmatpush1.msra.mxu0 0.0
    %1246 = vmatprep.subr.mxu0 0.0
    %1247 = vmatpush1.msra.mxu0 0.0
    %1248 = vmatprep.subr.mxu0 0.0
    %1249 = vmatpush1.msra.mxu0 0.0
    %1250 = vmatprep.subr.mxu0 0.0
    %1251 = vmatpush1.msra.mxu0 0.0
    %1252 = vmatprep.subr.mxu0 0.0
    %1253 = vmatpush1.msra.mxu0 0.0
    %1254 = vmatprep.subr.mxu0 0.0
    %1255 = vmatpush1.msra.mxu0 0.0
    %1256 = vmatprep.subr.mxu0 0.0
    %1257 = vmatpush1.msra.mxu0 0.0
    %1258 = vmatprep.subr.mxu0 0.0
    %1259 = vmatpush1.msra.mxu0 0.0
    %1260 = vmatprep.subr.mxu0 0.0
    %1261 = vmatpush1.msra.mxu0 0.0
    %1262 = vmatprep.subr.mxu0 0.0
    %1263 = vmatpush1.msra.mxu0 0.0
    %1264 = vmatprep.mubr.f32.mxu0 0.0
    %1265 = vmatmul.mubr.f32.gmra.mrb[0].mxu0 %v1195
    %v1266 = vpop.f32.mrb[0].mxu0
    %v1267 = vadd.f32 0.0, %v1266
    %v1268 = vpop.f32.mrb[0].mxu0
    %1269 = vmatprep.mubr.f32.mxu0 0.0
    %1270 = vmatmul.mubr.f32.gmra.mrb[0].mxu0 %v1198
    %v1271 = vpop.f32.mrb[0].mxu0
    %v1272 = vadd.f32 0.0, %v1271
    %v1273 = vpop.f32.mrb[0].mxu0
    %1274 = vdwg.mxu0
    %1276 = vrot.lane.b32.xlu0 %v1267, 112
    %v1277 = vpop.permute.xlu0 %1276
    %v1278 = vsel %vm383, %v1267, 0
    %v1280 = vsel %vm383, %v1277, 0
    %1282 = vmatprep.subr.mxu0 0.0
    %1283 = vmatpush1.xpose.msra.mxu0 %v1280
    %1284 = vmatprep.subr.mxu0 0.0
    %1285 = vmatpush1.xpose.msra.mxu0 0.0
    %1286 = vmatprep.subr.mxu0 0.0
    %1287 = vmatpush1.xpose.msra.mxu0 0.0
    %1288 = vmatprep.subr.mxu0 0.0
    %1289 = vmatpush1.xpose.msra.mxu0 0.0
    %1290 = vmatprep.subr.mxu0 0.0
    %1291 = vmatpush1.xpose.msra.mxu0 0.0
    %1292 = vmatprep.subr.mxu0 0.0
    %1293 = vmatpush1.xpose.msra.mxu0 0.0
    %1294 = vmatprep.subr.mxu0 0.0
    %1295 = vmatpush1.xpose.msra.mxu0 0.0
    %1296 = vmatprep.subr.mxu0 0.0
    %1297 = vmatpush1.xpose.msra.mxu0 0.0
    %1298 = vmatprep.subr.mxu0 0.0
    %1299 = vmatpush1.xpose.msra.mxu0 0.0
    %1300 = vmatprep.subr.mxu0 0.0
    %1301 = vmatpush1.xpose.msra.mxu0 0.0
    %1302 = vmatprep.subr.mxu0 0.0
    %1303 = vmatpush1.xpose.msra.mxu0 0.0
    %1304 = vmatprep.subr.mxu0 0.0
    %1305 = vmatpush1.xpose.msra.mxu0 0.0
    %1306 = vmatprep.subr.mxu0 0.0
    %1307 = vmatpush1.xpose.msra.mxu0 0.0
    %1308 = vmatprep.subr.mxu0 0.0
    %1309 = vmatpush1.xpose.msra.mxu0 0.0
    %1310 = vmatprep.subr.mxu0 0.0
    %1311 = vmatpush1.xpose.msra.mxu0 0.0
    %1312 = vmatprep.subr.mxu0 0.0
    %1313 = vmatpush1.xpose.msra.mxu0 0.0
    %1314 = vmatprep.subr.mxu0 0.0
    %1315 = vmatpush1.xpose.msra.mxu0 0.0
    %1316 = vmatprep.subr.mxu0 0.0
    %1317 = vmatpush1.xpose.msra.mxu0 0.0
    %1318 = vmatprep.subr.mxu0 0.0
    %1319 = vmatpush1.xpose.msra.mxu0 0.0
    %1320 = vmatprep.subr.mxu0 0.0
    %1321 = vmatpush1.xpose.msra.mxu0 0.0
    %1322 = vmatprep.subr.mxu0 0.0
    %1323 = vmatpush1.xpose.msra.mxu0 0.0
    %1324 = vmatprep.subr.mxu0 0.0
    %1325 = vmatpush1.xpose.msra.mxu0 0.0
    %1326 = vmatprep.subr.mxu0 0.0
    %1327 = vmatpush1.xpose.msra.mxu0 0.0
    %1328 = vmatprep.subr.mxu0 0.0
    %1329 = vmatpush1.xpose.msra.mxu0 0.0
    %1330 = vmatprep.subr.mxu0 0.0
    %1331 = vmatpush1.xpose.msra.mxu0 0.0
    %1332 = vmatprep.subr.mxu0 0.0
    %1333 = vmatpush1.xpose.msra.mxu0 0.0
    %1334 = vmatprep.subr.mxu0 0.0
    %1335 = vmatpush1.xpose.msra.mxu0 0.0
    %1336 = vmatprep.subr.mxu0 0.0
    %1337 = vmatpush1.xpose.msra.mxu0 0.0
    %1338 = vmatprep.subr.mxu0 0.0
    %1339 = vmatpush1.xpose.msra.mxu0 0.0
    %1340 = vmatprep.subr.mxu0 0.0
    %1341 = vmatpush1.xpose.msra.mxu0 0.0
    %1342 = vmatprep.subr.mxu0 0.0
    %1343 = vmatpush1.xpose.msra.mxu0 0.0
    %1344 = vmatprep.subr.mxu0 0.0
    %1345 = vmatpush1.xpose.msra.mxu0 0.0
    %1346 = vmatprep.mubr.f32.mxu0 0.0
    %1347 = vmatmul.mubr.f32.gmra.mrb[0].mxu0 %v1278
    %v1348 = vpop.f32.mrb[0].mxu0
    %v1349 = vadd.f32 0.0, %v1348
    %v1350 = vpop.f32.mrb[0].mxu0
    %1351 = vdwg.mxu0
    %1353 = vrot.lane.b32.xlu0 %v1272, 112
    %v1354 = vpop.permute.xlu0 %1353
    %v1355 = vsel %vm383, %v1272, 0
    %v1357 = vsel %vm383, %v1354, 0
    %1359 = vmatprep.subr.mxu0 0.0
    %1360 = vmatpush1.xpose.msra.mxu0 %v1357
    %1361 = vmatprep.subr.mxu0 0.0
    %1362 = vmatpush1.xpose.msra.mxu0 0.0
    %1363 = vmatprep.subr.mxu0 0.0
    %1364 = vmatpush1.xpose.msra.mxu0 0.0
    %1365 = vmatprep.subr.mxu0 0.0
    %1366 = vmatpush1.xpose.msra.mxu0 0.0
    %1367 = vmatprep.subr.mxu0 0.0
    %1368 = vmatpush1.xpose.msra.mxu0 0.0
    %1369 = vmatprep.subr.mxu0 0.0
    %1370 = vmatpush1.xpose.msra.mxu0 0.0
    %1371 = vmatprep.subr.mxu0 0.0
    %1372 = vmatpush1.xpose.msra.mxu0 0.0
    %1373 = vmatprep.subr.mxu0 0.0
    %1374 = vmatpush1.xpose.msra.mxu0 0.0
    %1375 = vmatprep.subr.mxu0 0.0
    %1376 = vmatpush1.xpose.msra.mxu0 0.0
    %1377 = vmatprep.subr.mxu0 0.0
    %1378 = vmatpush1.xpose.msra.mxu0 0.0
    %1379 = vmatprep.subr.mxu0 0.0
    %1380 = vmatpush1.xpose.msra.mxu0 0.0
    %1381 = vmatprep.subr.mxu0 0.0
    %1382 = vmatpush1.xpose.msra.mxu0 0.0
    %1383 = vmatprep.subr.mxu0 0.0
    %1384 = vmatpush1.xpose.msra.mxu0 0.0
    %1385 = vmatprep.subr.mxu0 0.0
    %1386 = vmatpush1.xpose.msra.mxu0 0.0
    %1387 = vmatprep.subr.mxu0 0.0
    %1388 = vmatpush1.xpose.msra.mxu0 0.0
    %1389 = vmatprep.subr.mxu0 0.0
    %1390 = vmatpush1.xpose.msra.mxu0 0.0
    %1391 = vmatprep.subr.mxu0 0.0
    %1392 = vmatpush1.xpose.msra.mxu0 0.0
    %1393 = vmatprep.subr.mxu0 0.0
    %1394 = vmatpush1.xpose.msra.mxu0 0.0
    %1395 = vmatprep.subr.mxu0 0.0
    %1396 = vmatpush1.xpose.msra.mxu0 0.0
    %1397 = vmatprep.subr.mxu0 0.0
    %1398 = vmatpush1.xpose.msra.mxu0 0.0
    %1399 = vmatprep.subr.mxu0 0.0
    %1400 = vmatpush1.xpose.msra.mxu0 0.0
    %1401 = vmatprep.subr.mxu0 0.0
    %1402 = vmatpush1.xpose.msra.mxu0 0.0
    %1403 = vmatprep.subr.mxu0 0.0
    %1404 = vmatpush1.xpose.msra.mxu0 0.0
    %1405 = vmatprep.subr.mxu0 0.0
    %1406 = vmatpush1.xpose.msra.mxu0 0.0
    %1407 = vmatprep.subr.mxu0 0.0
    %1408 = vmatpush1.xpose.msra.mxu0 0.0
    %1409 = vmatprep.subr.mxu0 0.0
    %1410 = vmatpush1.xpose.msra.mxu0 0.0
    %1411 = vmatprep.subr.mxu0 0.0
    %1412 = vmatpush1.xpose.msra.mxu0 0.0
    %1413 = vmatprep.subr.mxu0 0.0
    %1414 = vmatpush1.xpose.msra.mxu0 0.0
    %1415 = vmatprep.subr.mxu0 0.0
    %1416 = vmatpush1.xpose.msra.mxu0 0.0
    %1417 = vmatprep.subr.mxu0 0.0
    %1418 = vmatpush1.xpose.msra.mxu0 0.0
    %1419 = vmatprep.subr.mxu0 0.0
    %1420 = vmatpush1.xpose.msra.mxu0 0.0
    %1421 = vmatprep.subr.mxu0 0.0
    %1422 = vmatpush1.xpose.msra.mxu0 0.0
    %1423 = vmatprep.mubr.f32.mxu0 0.0
    %1424 = vmatmul.mubr.f32.gmra.mrb[0].mxu0 %v1355
    %v1425 = vpop.f32.mrb[0].mxu0
    %v1426 = vadd.f32 0.0, %v1425
    %v1427 = vpop.f32.mrb[0].mxu0
    %1428 = vdwg.mxu0
    %v1429 = vmul.f32 %v1349, 0.25
    %v1430 = vmul.f32 %v1426, 0.25
    %v1431 = vsel %vm537, %v1429, -inf
    %1432 = vmax.xlane.f32.xlu0 %v1431
    %v1433 = vpop.xlane.xlu0 %1432
    %v1434 = vsel %vm537, %v1430, -inf
    %1435 = vmax.xlane.f32.xlu0 %v1434
    %v1436 = vpop.xlane.xlu0 %1435
    %v1437 = vsub.f32 %v1429, %v1433
    %v1438 = vsub.f32 %v1430, %v1436
    %v1439 = vmul.f32 %v1437, 1.442695
    %v1440 = vpow.pop %v1439
    %v1441 = vmul.f32 %v1438, 1.442695
    %v1442 = vpow.pop %v1441
    %v1443 = vsel %vm537, %v1440, 0.0
    %1444 = vadd.xlane.f32.xlu0 %v1443
    %v1445 = vpop.xlane.xlu0 %1444
    %v1446 = vsel %vm537, %v1442, 0.0
    %1447 = vadd.xlane.f32.xlu0 %v1446
    %v1448 = vpop.xlane.xlu0 %1447
    %v1449 = vrcp.pop %v1445
    %v1450 = vrcp.pop %v1448
    %v1451 = vmul.f32 %v1440, %v1449
    %v1452 = vmul.f32 %v1442, %v1450
    %1453 = vrot.lane.b32.xlu0 %v1267, 96
    %v1454 = vpop.permute.xlu0 %1453
    %v1457 = vsel %vm537, %v1451, 0
    %1459 = vmatprep.subr.mxu0 0.0
    %1460 = vmatpush1.msra.mxu0 %v1454
    %1461 = vmatprep.subr.mxu0 0.0
    %1462 = vmatpush1.msra.mxu0 0.0
    %1463 = vmatprep.subr.mxu0 0.0
    %1464 = vmatpush1.msra.mxu0 0.0
    %1465 = vmatprep.subr.mxu0 0.0
    %1466 = vmatpush1.msra.mxu0 0.0
    %1467 = vmatprep.subr.mxu0 0.0
    %1468 = vmatpush1.msra.mxu0 0.0
    %1469 = vmatprep.subr.mxu0 0.0
    %1470 = vmatpush1.msra.mxu0 0.0
    %1471 = vmatprep.subr.mxu0 0.0
    %1472 = vmatpush1.msra.mxu0 0.0
    %1473 = vmatprep.subr.mxu0 0.0
    %1474 = vmatpush1.msra.mxu0 0.0
    %1475 = vmatprep.subr.mxu0 0.0
    %1476 = vmatpush1.msra.mxu0 0.0
    %1477 = vmatprep.subr.mxu0 0.0
    %1478 = vmatpush1.msra.mxu0 0.0
    %1479 = vmatprep.subr.mxu0 0.0
    %1480 = vmatpush1.msra.mxu0 0.0
    %1481 = vmatprep.subr.mxu0 0.0
    %1482 = vmatpush1.msra.mxu0 0.0
    %1483 = vmatprep.subr.mxu0 0.0
    %1484 = vmatpush1.msra.mxu0 0.0
    %1485 = vmatprep.subr.mxu0 0.0
    %1486 = vmatpush1.msra.mxu0 0.0
    %1487 = vmatprep.subr.mxu0 0.0
    %1488 = vmatpush1.msra.mxu0 0.0
    %1489 = vmatprep.subr.mxu0 0.0
    %1490 = vmatpush1.msra.mxu0 0.0
    %1491 = vmatprep.subr.mxu0 0.0
    %1492 = vmatpush1.msra.mxu0 0.0
    %1493 = vmatprep.subr.mxu0 0.0
    %1494 = vmatpush1.msra.mxu0 0.0
    %1495 = vmatprep.subr.mxu0 0.0
    %1496 = vmatpush1.msra.mxu0 0.0
    %1497 = vmatprep.subr.mxu0 0.0
    %1498 = vmatpush1.msra.mxu0 0.0
    %1499 = vmatprep.subr.mxu0 0.0
    %1500 = vmatpush1.msra.mxu0 0.0
    %1501 = vmatprep.subr.mxu0 0.0
    %1502 = vmatpush1.msra.mxu0 0.0
    %1503 = vmatprep.subr.mxu0 0.0
    %1504 = vmatpush1.msra.mxu0 0.0
    %1505 = vmatprep.subr.mxu0 0.0
    %1506 = vmatpush1.msra.mxu0 0.0
    %1507 = vmatprep.subr.mxu0 0.0
    %1508 = vmatpush1.msra.mxu0 0.0
    %1509 = vmatprep.subr.mxu0 0.0
    %1510 = vmatpush1.msra.mxu0 0.0
    %1511 = vmatprep.subr.mxu0 0.0
    %1512 = vmatpush1.msra.mxu0 0.0
    %1513 = vmatprep.subr.mxu0 0.0
    %1514 = vmatpush1.msra.mxu0 0.0
    %1515 = vmatprep.subr.mxu0 0.0
    %1516 = vmatpush1.msra.mxu0 0.0
    %1517 = vmatprep.subr.mxu0 0.0
    %1518 = vmatpush1.msra.mxu0 0.0
    %1519 = vmatprep.subr.mxu0 0.0
    %1520 = vmatpush1.msra.mxu0 0.0
    %1521 = vmatprep.subr.mxu0 0.0
    %1522 = vmatpush1.msra.mxu0 0.0
    %1523 = vmatprep.mubr.f32.mxu0 0.0
    %1524 = vmatmul.mubr.f32.gmra.mrb[0].mxu0 %v1457
    %v1525 = vpop.f32.mrb[0].mxu0
    %v1526 = vadd.f32 0.0, %v1525
    %v1527 = vpop.f32.mrb[0].mxu0
    %1528 = vdwg.mxu0
    %1529 = vrot.lane.b32.xlu0 %v1272, 96
    %v1530 = vpop.permute.xlu0 %1529
    %v1533 = vsel %vm537, %v1452, 0
    %1535 = vmatprep.subr.mxu0 0.0
    %1536 = vmatpush1.msra.mxu0 %v1530
    %1537 = vmatprep.subr.mxu0 0.0
    %1538 = vmatpush1.msra.mxu0 0.0
    %1539 = vmatprep.subr.mxu0 0.0
    %1540 = vmatpush1.msra.mxu0 0.0
    %1541 = vmatprep.subr.mxu0 0.0
    %1542 = vmatpush1.msra.mxu0 0.0
    %1543 = vmatprep.subr.mxu0 0.0
    %1544 = vmatpush1.msra.mxu0 0.0
    %1545 = vmatprep.subr.mxu0 0.0
    %1546 = vmatpush1.msra.mxu0 0.0
    %1547 = vmatprep.subr.mxu0 0.0
    %1548 = vmatpush1.msra.mxu0 0.0
    %1549 = vmatprep.subr.mxu0 0.0
    %1550 = vmatpush1.msra.mxu0 0.0
    %1551 = vmatprep.subr.mxu0 0.0
    %1552 = vmatpush1.msra.mxu0 0.0
    %1553 = vmatprep.subr.mxu0 0.0
    %1554 = vmatpush1.msra.mxu0 0.0
    %1555 = vmatprep.subr.mxu0 0.0
    %1556 = vmatpush1.msra.mxu0 0.0
    %1557 = vmatprep.subr.mxu0 0.0
    %1558 = vmatpush1.msra.mxu0 0.0
    %1559 = vmatprep.subr.mxu0 0.0
    %1560 = vmatpush1.msra.mxu0 0.0
    %1561 = vmatprep.subr.mxu0 0.0
    %1562 = vmatpush1.msra.mxu0 0.0
    %1563 = vmatprep.subr.mxu0 0.0
    %1564 = vmatpush1.msra.mxu0 0.0
    %1565 = vmatprep.subr.mxu0 0.0
    %1566 = vmatpush1.msra.mxu0 0.0
    %1567 = vmatprep.subr.mxu0 0.0
    %1568 = vmatpush1.msra.mxu0 0.0
    %1569 = vmatprep.subr.mxu0 0.0
    %1570 = vmatpush1.msra.mxu0 0.0
    %1571 = vmatprep.subr.mxu0 0.0
    %1572 = vmatpush1.msra.mxu0 0.0
    %1573 = vmatprep.subr.mxu0 0.0
    %1574 = vmatpush1.msra.mxu0 0.0
    %1575 = vmatprep.subr.mxu0 0.0
    %1576 = vmatpush1.msra.mxu0 0.0
    %1577 = vmatprep.subr.mxu0 0.0
    %1578 = vmatpush1.msra.mxu0 0.0
    %1579 = vmatprep.subr.mxu0 0.0
    %1580 = vmatpush1.msra.mxu0 0.0
    %1581 = vmatprep.subr.mxu0 0.0
    %1582 = vmatpush1.msra.mxu0 0.0
    %1583 = vmatprep.subr.mxu0 0.0
    %1584 = vmatpush1.msra.mxu0 0.0
    %1585 = vmatprep.subr.mxu0 0.0
    %1586 = vmatpush1.msra.mxu0 0.0
    %1587 = vmatprep.subr.mxu0 0.0
    %1588 = vmatpush1.msra.mxu0 0.0
    %1589 = vmatprep.subr.mxu0 0.0
    %1590 = vmatpush1.msra.mxu0 0.0
    %1591 = vmatprep.subr.mxu0 0.0
    %1592 = vmatpush1.msra.mxu0 0.0
    %1593 = vmatprep.subr.mxu0 0.0
    %1594 = vmatpush1.msra.mxu0 0.0
    %1595 = vmatprep.subr.mxu0 0.0
    %1596 = vmatpush1.msra.mxu0 0.0
    %1597 = vmatprep.subr.mxu0 0.0
    %1598 = vmatpush1.msra.mxu0 0.0
    %1599 = vmatprep.mubr.f32.mxu0 0.0
    %1600 = vmatmul.mubr.f32.gmra.mrb[0].mxu0 %v1533
    %v1601 = vpop.f32.mrb[0].mxu0
    %v1602 = vadd.f32 0.0, %v1601
    %v1603 = vpop.f32.mrb[0].mxu0
    %1604 = vdwg.mxu0
    %v1606 = vsel %vm298, %v1526, 0
    %v1609 = vsel %vm298, %v1602, 0
    %1611 = vmatprep.subr.mxu0 0.0
    %1612 = vmatpush1.msra.mxu0 %v1166
    %1613 = vmatprep.subr.mxu0 0.0
    %1614 = vmatpush1.msra.mxu0 %v1167
    %1615 = vmatprep.subr.mxu0 0.0
    %1616 = vmatpush1.msra.mxu0 %v1168
    %1617 = vmatprep.subr.mxu0 0.0
    %1618 = vmatpush1.msra.mxu0 %v1169
    %1619 = vmatprep.subr.mxu0 0.0
    %1620 = vmatpush1.msra.mxu0 0.0
    %1621 = vmatprep.subr.mxu0 0.0
    %1622 = vmatpush1.msra.mxu0 0.0
    %1623 = vmatprep.subr.mxu0 0.0
    %1624 = vmatpush1.msra.mxu0 0.0
    %1625 = vmatprep.subr.mxu0 0.0
    %1626 = vmatpush1.msra.mxu0 0.0
    %1627 = vmatprep.subr.mxu0 0.0
    %1628 = vmatpush1.msra.mxu0 0.0
    %1629 = vmatprep.subr.mxu0 0.0
    %1630 = vmatpush1.msra.mxu0 0.0
    %1631 = vmatprep.subr.mxu0 0.0
    %1632 = vmatpush1.msra.mxu0 0.0
    %1633 = vmatprep.subr.mxu0 0.0
    %1634 = vmatpush1.msra.mxu0 0.0
    %1635 = vmatprep.subr.mxu0 0.0
    %1636 = vmatpush1.msra.mxu0 0.0
    %1637 = vmatprep.subr.mxu0 0.0
    %1638 = vmatpush1.msra.mxu0 0.0
    %1639 = vmatprep.subr.mxu0 0.0
    %1640 = vmatpush1.msra.mxu0 0.0
    %1641 = vmatprep.subr.mxu0 0.0
    %1642 = vmatpush1.msra.mxu0 0.0
    %1643 = vmatprep.subr.mxu0 0.0
    %1644 = vmatpush1.msra.mxu0 0.0
    %1645 = vmatprep.subr.mxu0 0.0
    %1646 = vmatpush1.msra.mxu0 0.0
    %1647 = vmatprep.subr.mxu0 0.0
    %1648 = vmatpush1.msra.mxu0 0.0
    %1649 = vmatprep.subr.mxu0 0.0
    %1650 = vmatpush1.msra.mxu0 0.0
    %1651 = vmatprep.subr.mxu0 0.0
    %1652 = vmatpush1.msra.mxu0 0.0
    %1653 = vmatprep.subr.mxu0 0.0
    %1654 = vmatpush1.msra.mxu0 0.0
    %1655 = vmatprep.subr.mxu0 0.0
    %1656 = vmatpush1.msra.mxu0 0.0
    %1657 = vmatprep.subr.mxu0 0.0
    %1658 = vmatpush1.msra.mxu0 0.0
    %1659 = vmatprep.subr.mxu0 0.0
    %1660 = vmatpush1.msra.mxu0 0.0
    %1661 = vmatprep.subr.mxu0 0.0
    %1662 = vmatpush1.msra.mxu0 0.0
    %1663 = vmatprep.subr.mxu0 0.0
    %1664 = vmatpush1.msra.mxu0 0.0
    %1665 = vmatprep.subr.mxu0 0.0
    %1666 = vmatpush1.msra.mxu0 0.0
    %1667 = vmatprep.subr.mxu0 0.0
    %1668 = vmatpush1.msra.mxu0 0.0
    %1669 = vmatprep.subr.mxu0 0.0
    %1670 = vmatpush1.msra.mxu0 0.0
    %1671 = vmatprep.subr.mxu0 0.0
    %1672 = vmatpush1.msra.mxu0 0.0
    %1673 = vmatprep.subr.mxu0 0.0
    %1674 = vmatpush1.msra.mxu0 0.0
    %1675 = vmatprep.mubr.f32.mxu0 0.0
    %1676 = vmatmul.mubr.f32.gmra.mrb[0].mxu0 %v1606
    %v1677 = vpop.f32.mrb[0].mxu0
    %v1678 = vadd.f32 0.0, %v1677
    %v1679 = vpop.f32.mrb[0].mxu0
    %1680 = vmatprep.mubr.f32.mxu0 0.0
    %1681 = vmatmul.mubr.f32.gmra.mrb[0].mxu0 %v1609
    %v1682 = vpop.f32.mrb[0].mxu0
    %v1683 = vadd.f32 0.0, %v1682
    %v1684 = vpop.f32.mrb[0].mxu0
    %1685 = vdwg.mxu0
    %v1686 = vadd.f32 %v1154, %v1678
    %v1687 = vadd.f32 %v1159, %v1683
    %v1688 = vsel %vm298, %v1686, 0.0
    %1689 = vadd.xlane.f32.xlu0 %v1688
    %v1690 = vpop.xlane.xlu0 %1689
    %v1691 = vsel %vm298, %v1687, 0.0
    %1692 = vadd.xlane.f32.xlu0 %v1691
    %v1693 = vpop.xlane.xlu0 %1692
    %v1694 = vmul.f32 %v1690, %v801
    %v1695 = vmul.f32 %v1693, %v801
    %v1696 = vsub.f32 %v1686, %v1694
    %v1697 = vsub.f32 %v1687, %v1695
    %v1698 = vmul.f32 %v1696, %v1696
    %v1699 = vmul.f32 %v1697, %v1697
    %v1700 = vsel %vm298, %v1698, 0.0
    %1701 = vadd.xlane.f32.xlu0 %v1700
    %v1702 = vpop.xlane.xlu0 %1701
    %v1703 = vsel %vm298, %v1699, 0.0
    %1704 = vadd.xlane.f32.xlu0 %v1703
    %v1705 = vpop.xlane.xlu0 %1704
    %v1706 = vmul.f32 %v1702, %v801
    %v1707 = vmul.f32 %v1705, %v801
    %v1708 = vadd.f32 %v1706, 1e-05
    %v1709 = vadd.f32 %v1707, 1e-05
    %v1710 = vrsqrt.pop %v1708
    %v1711 = vrsqrt.pop %v1709
    %v1712 = vmul.f32 %v1696, %v1710
    %v1713 = vmul.f32 %v1697, %v1711
    %v1715 = vlaneseq
    %v1716 = vshrl.u32 %v1715, 7
    %v1717 = vsub.s32 0, %v1716
    %v1718 = vrot.slane %v1188, %v1717
    %v1720 = vmul.f32 %v1712, %v1718
    %v1721 = vmul.f32 %v1713, %v1718
    %v1723 = vlaneseq
    %v1724 = vshrl.u32 %v1723, 7
    %v1725 = vsub.s32 0, %v1724
    %v1726 = vrot.slane %v1189, %v1725
    %v1728 = vadd.f32 %v1720, %v1726
    %v1729 = vadd.f32 %v1721, %v1726
    %v1731 = vsel %vm298, %v1728, 0
    %v1734 = vsel %vm298, %v1729, 0
    %1736 = vmatprep.subr.mxu0 0.0
    %1737 = vmatpush1.msra.mxu0 %v1170
    %1738 = vmatprep.subr.mxu0 0.0
    %1739 = vmatpush1.msra.mxu0 %v1171
    %1740 = vmatprep.subr.mxu0 0.0
    %1741 = vmatpush1.msra.mxu0 %v1172
    %1742 = vmatprep.subr.mxu0 0.0
    %1743 = vmatpush1.msra.mxu0 %v1173
    %1744 = vmatprep.subr.mxu0 0.0
    %1745 = vmatpush1.msra.mxu0 0.0
    %1746 = vmatprep.subr.mxu0 0.0
    %1747 = vmatpush1.msra.mxu0 0.0
    %1748 = vmatprep.subr.mxu0 0.0
    %1749 = vmatpush1.msra.mxu0 0.0
    %1750 = vmatprep.subr.mxu0 0.0
    %1751 = vmatpush1.msra.mxu0 0.0
    %1752 = vmatprep.subr.mxu0 0.0
    %1753 = vmatpush1.msra.mxu0 0.0
    %1754 = vmatprep.subr.mxu0 0.0
    %1755 = vmatpush1.msra.mxu0 0.0
    %1756 = vmatprep.subr.mxu0 0.0
    %1757 = vmatpush1.msra.mxu0 0.0
    %1758 = vmatprep.subr.mxu0 0.0
    %1759 = vmatpush1.msra.mxu0 0.0
    %1760 = vmatprep.subr.mxu0 0.0
    %1761 = vmatpush1.msra.mxu0 0.0
    %1762 = vmatprep.subr.mxu0 0.0
    %1763 = vmatpush1.msra.mxu0 0.0
    %1764 = vmatprep.subr.mxu0 0.0
    %1765 = vmatpush1.msra.mxu0 0.0
    %1766 = vmatprep.subr.mxu0 0.0
    %1767 = vmatpush1.msra.mxu0 0.0
    %1768 = vmatprep.subr.mxu0 0.0
    %1769 = vmatpush1.msra.mxu0 0.0
    %1770 = vmatprep.subr.mxu0 0.0
    %1771 = vmatpush1.msra.mxu0 0.0
    %1772 = vmatprep.subr.mxu0 0.0
    %1773 = vmatpush1.msra.mxu0 0.0
    %1774 = vmatprep.subr.mxu0 0.0
    %1775 = vmatpush1.msra.mxu0 0.0
    %1776 = vmatprep.subr.mxu0 0.0
    %1777 = vmatpush1.msra.mxu0 0.0
    %1778 = vmatprep.subr.mxu0 0.0
    %1779 = vmatpush1.msra.mxu0 0.0
    %1780 = vmatprep.subr.mxu0 0.0
    %1781 = vmatpush1.msra.mxu0 0.0
    %1782 = vmatprep.subr.mxu0 0.0
    %1783 = vmatpush1.msra.mxu0 0.0
    %1784 = vmatprep.subr.mxu0 0.0
    %1785 = vmatpush1.msra.mxu0 0.0
    %1786 = vmatprep.subr.mxu0 0.0
    %1787 = vmatpush1.msra.mxu0 0.0
    %1788 = vmatprep.subr.mxu0 0.0
    %1789 = vmatpush1.msra.mxu0 0.0
    %1790 = vmatprep.subr.mxu0 0.0
    %1791 = vmatpush1.msra.mxu0 0.0
    %1792 = vmatprep.subr.mxu0 0.0
    %1793 = vmatpush1.msra.mxu0 0.0
    %1794 = vmatprep.subr.mxu0 0.0
    %1795 = vmatpush1.msra.mxu0 0.0
    %1796 = vmatprep.subr.mxu0 0.0
    %1797 = vmatpush1.msra.mxu0 0.0
    %1798 = vmatprep.subr.mxu0 0.0
    %1799 = vmatpush1.msra.mxu0 0.0
    %1800 = vmatprep.mubr.f32.mxu0 0.0
    %1801 = vmatmul.mubr.f32.gmra.mrb[0].mxu0 %v1731
    %v1802 = vpop.f32.mrb[0].mxu0
    %v1803 = vadd.f32 0.0, %v1802
    %v1804 = vpop.f32.mrb[0].mxu0
    %1805 = vmatprep.mubr.f32.mxu0 0.0
    %1806 = vmatmul.mubr.f32.gmra.mrb[0].mxu0 %v1734
    %v1807 = vpop.f32.mrb[0].mxu0
    %v1808 = vadd.f32 0.0, %v1807
    %v1809 = vpop.f32.mrb[0].mxu0
    %1810 = vdwg.mxu0
    %1815 = vrot.lane.b32.xlu0 %v1170, 112
    %v1816 = vpop.permute.xlu0 %1815
    %1817 = vrot.lane.b32.xlu0 %v1171, 112
    %v1818 = vpop.permute.xlu0 %1817
    %1819 = vrot.lane.b32.xlu0 %v1172, 112
    %v1820 = vpop.permute.xlu0 %1819
    %1821 = vrot.lane.b32.xlu0 %v1173, 112
    %v1822 = vpop.permute.xlu0 %1821
    %v1828 = vsel %vm298, %v1066, 0
    %v1831 = vsel %vm298, %v1067, 0
    %1833 = vmatprep.subr.mxu0 0.0
    %1834 = vmatpush1.msra.mxu0 %v1816
    %1835 = vmatprep.subr.mxu0 0.0
    %1836 = vmatpush1.msra.mxu0 %v1818
    %1837 = vmatprep.subr.mxu0 0.0
    %1838 = vmatpush1.msra.mxu0 %v1820
    %1839 = vmatprep.subr.mxu0 0.0
    %1840 = vmatpush1.msra.mxu0 %v1822
    %1841 = vmatprep.subr.mxu0 0.0
    %1842 = vmatpush1.msra.mxu0 0.0
    %1843 = vmatprep.subr.mxu0 0.0
    %1844 = vmatpush1.msra.mxu0 0.0
    %1845 = vmatprep.subr.mxu0 0.0
    %1846 = vmatpush1.msra.mxu0 0.0
    %1847 = vmatprep.subr.mxu0 0.0
    %1848 = vmatpush1.msra.mxu0 0.0
    %1849 = vmatprep.subr.mxu0 0.0
    %1850 = vmatpush1.msra.mxu0 0.0
    %1851 = vmatprep.subr.mxu0 0.0
    %1852 = vmatpush1.msra.mxu0 0.0
    %1853 = vmatprep.subr.mxu0 0.0
    %1854 = vmatpush1.msra.mxu0 0.0
    %1855 = vmatprep.subr.mxu0 0.0
    %1856 = vmatpush1.msra.mxu0 0.0
    %1857 = vmatprep.subr.mxu0 0.0
    %1858 = vmatpush1.msra.mxu0 0.0
    %1859 = vmatprep.subr.mxu0 0.0
    %1860 = vmatpush1.msra.mxu0 0.0
    %1861 = vmatprep.subr.mxu0 0.0
    %1862 = vmatpush1.msra.mxu0 0.0
    %1863 = vmatprep.subr.mxu0 0.0
    %1864 = vmatpush1.msra.mxu0 0.0
    %1865 = vmatprep.subr.mxu0 0.0
    %1866 = vmatpush1.msra.mxu0 0.0
    %1867 = vmatprep.subr.mxu0 0.0
    %1868 = vmatpush1.msra.mxu0 0.0
    %1869 = vmatprep.subr.mxu0 0.0
    %1870 = vmatpush1.msra.mxu0 0.0
    %1871 = vmatprep.subr.mxu0 0.0
    %1872 = vmatpush1.msra.mxu0 0.0
    %1873 = vmatprep.subr.mxu0 0.0
    %1874 = vmatpush1.msra.mxu0 0.0
    %1875 = vmatprep.subr.mxu0 0.0
    %1876 = vmatpush1.msra.mxu0 0.0
    %1877 = vmatprep.subr.mxu0 0.0
    %1878 = vmatpush1.msra.mxu0 0.0
    %1879 = vmatprep.subr.mxu0 0.0
    %1880 = vmatpush1.msra.mxu0 0.0
    %1881 = vmatprep.subr.mxu0 0.0
    %1882 = vmatpush1.msra.mxu0 0.0
    %1883 = vmatprep.subr.mxu0 0.0
    %1884 = vmatpush1.msra.mxu0 0.0
    %1885 = vmatprep.subr.mxu0 0.0
    %1886 = vmatpush1.msra.mxu0 0.0
    %1887 = vmatprep.subr.mxu0 0.0
    %1888 = vmatpush1.msra.mxu0 0.0
    %1889 = vmatprep.subr.mxu0 0.0
    %1890 = vmatpush1.msra.mxu0 0.0
    %1891 = vmatprep.subr.mxu0 0.0
    %1892 = vmatpush1.msra.mxu0 0.0
    %1893 = vmatprep.subr.mxu0 0.0
    %1894 = vmatpush1.msra.mxu0 0.0
    %1895 = vmatprep.subr.mxu0 0.0
    %1896 = vmatpush1.msra.mxu0 0.0
    %1897 = vmatprep.mubr.f32.mxu0 0.0
    %1898 = vmatmul.mubr.f32.gmra.mrb[0].mxu0 %v1828
    %v1899 = vpop.f32.mrb[0].mxu0
    %v1900 = vadd.f32 0.0, %v1899
    %v1901 = vpop.f32.mrb[0].mxu0
    %1902 = vmatprep.mubr.f32.mxu0 0.0
    %1903 = vmatmul.mubr.f32.gmra.mrb[0].mxu0 %v1831
    %v1904 = vpop.f32.mrb[0].mxu0
    %v1905 = vadd.f32 0.0, %v1904
    %v1906 = vpop.f32.mrb[0].mxu0
    %1907 = vdwg.mxu0
    %v1909 = vsel %vm383, %v1803, 0
    %v1912 = vsel %vm383, %v1900, 0
    %1914 = vmatprep.subr.mxu0 0.0
    %1915 = vmatpush1.xpose.msra.mxu0 %v1912
    %1916 = vmatprep.subr.mxu0 0.0
    %1917 = vmatpush1.xpose.msra.mxu0 0.0
    %1918 = vmatprep.subr.mxu0 0.0
    %1919 = vmatpush1.xpose.msra.mxu0 0.0
    %1920 = vmatprep.subr.mxu0 0.0
    %1921 = vmatpush1.xpose.msra.mxu0 0.0
    %1922 = vmatprep.subr.mxu0 0.0
    %1923 = vmatpush1.xpose.msra.mxu0 0.0
    %1924 = vmatprep.subr.mxu0 0.0
    %1925 = vmatpush1.xpose.msra.mxu0 0.0
    %1926 = vmatprep.subr.mxu0 0.0
    %1927 = vmatpush1.xpose.msra.mxu0 0.0
    %1928 = vmatprep.subr.mxu0 0.0
    %1929 = vmatpush1.xpose.msra.mxu0 0.0
    %1930 = vmatprep.subr.mxu0 0.0
    %1931 = vmatpush1.xpose.msra.mxu0 0.0
    %1932 = vmatprep.subr.mxu0 0.0
    %1933 = vmatpush1.xpose.msra.mxu0 0.0
    %1934 = vmatprep.subr.mxu0 0.0
    %1935 = vmatpush1.xpose.msra.mxu0 0.0
    %1936 = vmatprep.subr.mxu0 0.0
    %1937 = vmatpush1.xpose.msra.mxu0 0.0
    %1938 = vmatprep.subr.mxu0 0.0
    %1939 = vmatpush1.xpose.msra.mxu0 0.0
    %1940 = vmatprep.subr.mxu0 0.0
    %1941 = vmatpush1.xpose.msra.mxu0 0.0
    %1942 = vmatprep.subr.mxu0 0.0
    %1943 = vmatpush1.xpose.msra.mxu0 0.0
    %1944 = vmatprep.subr.mxu0 0.0
    %1945 = vmatpush1.xpose.msra.mxu0 0.0
    %1946 = vmatprep.subr.mxu0 0.0
    %1947 = vmatpush1.xpose.msra.mxu0 0.0
    %1948 = vmatprep.subr.mxu0 0.0
    %1949 = vmatpush1.xpose.msra.mxu0 0.0
    %1950 = vmatprep.subr.mxu0 0.0
    %1951 = vmatpush1.xpose.msra.mxu0 0.0
    %1952 = vmatprep.subr.mxu0 0.0
    %1953 = vmatpush1.xpose.msra.mxu0 0.0
    %1954 = vmatprep.subr.mxu0 0.0
    %1955 = vmatpush1.xpose.msra.mxu0 0.0
    %1956 = vmatprep.subr.mxu0 0.0
    %1957 = vmatpush1.xpose.msra.mxu0 0.0
    %1958 = vmatprep.subr.mxu0 0.0
    %1959 = vmatpush1.xpose.msra.mxu0 0.0
    %1960 = vmatprep.subr.mxu0 0.0
    %1961 = vmatpush1.xpose.msra.mxu0 0.0
    %1962 = vmatprep.subr.mxu0 0.0
    %1963 = vmatpush1.xpose.msra.mxu0 0.0
    %1964 = vmatprep.subr.mxu0 0.0
    %1965 = vmatpush1.xpose.msra.mxu0 0.0
    %1966 = vmatprep.subr.mxu0 0.0
    %1967 = vmatpush1.xpose.msra.mxu0 0.0
    %1968 = vmatprep.subr.mxu0 0.0
    %1969 = vmatpush1.xpose.msra.mxu0 0.0
    %1970 = vmatprep.subr.mxu0 0.0
    %1971 = vmatpush1.xpose.msra.mxu0 0.0
    %1972 = vmatprep.subr.mxu0 0.0
    %1973 = vmatpush1.xpose.msra.mxu0 0.0
    %1974 = vmatprep.subr.mxu0 0.0
    %1975 = vmatpush1.xpose.msra.mxu0 0.0
    %1976 = vmatprep.subr.mxu0 0.0
    %1977 = vmatpush1.xpose.msra.mxu0 0.0
    %1978 = vmatprep.mubr.f32.mxu0 0.0
    %1979 = vmatmul.mubr.f32.gmra.mrb[0].mxu0 %v1909
    %v1980 = vpop.f32.mrb[0].mxu0
    %v1981 = vadd.f32 0.0, %v1980
    %v1982 = vpop.f32.mrb[0].mxu0
    %1983 = vdwg.mxu0
    %v1985 = vsel %vm383, %v1808, 0
    %v1988 = vsel %vm383, %v1905, 0
    %1990 = vmatprep.subr.mxu0 0.0
    %1991 = vmatpush1.xpose.msra.mxu0 %v1988
    %1992 = vmatprep.subr.mxu0 0.0
    %1993 = vmatpush1.xpose.msra.mxu0 0.0
    %1994 = vmatprep.subr.mxu0 0.0
    %1995 = vmatpush1.xpose.msra.mxu0 0.0
    %1996 = vmatprep.subr.mxu0 0.0
    %1997 = vmatpush1.xpose.msra.mxu0 0.0
    %1998 = vmatprep.subr.mxu0 0.0
    %1999 = vmatpush1.xpose.msra.mxu0 0.0
    %2000 = vmatprep.subr.mxu0 0.0
    %2001 = vmatpush1.xpose.msra.mxu0 0.0
    %2002 = vmatprep.subr.mxu0 0.0
    %2003 = vmatpush1.xpose.msra.mxu0 0.0
    %2004 = vmatprep.subr.mxu0 0.0
    %2005 = vmatpush1.xpose.msra.mxu0 0.0
    %2006 = vmatprep.subr.mxu0 0.0
    %2007 = vmatpush1.xpose.msra.mxu0 0.0
    %2008 = vmatprep.subr.mxu0 0.0
    %2009 = vmatpush1.xpose.msra.mxu0 0.0
    %2010 = vmatprep.subr.mxu0 0.0
    %2011 = vmatpush1.xpose.msra.mxu0 0.0
    %2012 = vmatprep.subr.mxu0 0.0
    %2013 = vmatpush1.xpose.msra.mxu0 0.0
    %2014 = vmatprep.subr.mxu0 0.0
    %2015 = vmatpush1.xpose.msra.mxu0 0.0
    %2016 = vmatprep.subr.mxu0 0.0
    %2017 = vmatpush1.xpose.msra.mxu0 0.0
    %2018 = vmatprep.subr.mxu0 0.0
    %2019 = vmatpush1.xpose.msra.mxu0 0.0
    %2020 = vmatprep.subr.mxu0 0.0
    %2021 = vmatpush1.xpose.msra.mxu0 0.0
    %2022 = vmatprep.subr.mxu0 0.0
    %2023 = vmatpush1.xpose.msra.mxu0 0.0
    %2024 = vmatprep.subr.mxu0 0.0
    %2025 = vmatpush1.xpose.msra.mxu0 0.0
    %2026 = vmatprep.subr.mxu0 0.0
    %2027 = vmatpush1.xpose.msra.mxu0 0.0
    %2028 = vmatprep.subr.mxu0 0.0
    %2029 = vmatpush1.xpose.msra.mxu0 0.0
    %2030 = vmatprep.subr.mxu0 0.0
    %2031 = vmatpush1.xpose.msra.mxu0 0.0
    %2032 = vmatprep.subr.mxu0 0.0
    %2033 = vmatpush1.xpose.msra.mxu0 0.0
    %2034 = vmatprep.subr.mxu0 0.0
    %2035 = vmatpush1.xpose.msra.mxu0 0.0
    %2036 = vmatprep.subr.mxu0 0.0
    %2037 = vmatpush1.xpose.msra.mxu0 0.0
    %2038 = vmatprep.subr.mxu0 0.0
    %2039 = vmatpush1.xpose.msra.mxu0 0.0
    %2040 = vmatprep.subr.mxu0 0.0
    %2041 = vmatpush1.xpose.msra.mxu0 0.0
    %2042 = vmatprep.subr.mxu0 0.0
    %2043 = vmatpush1.xpose.msra.mxu0 0.0
    %2044 = vmatprep.subr.mxu0 0.0
    %2045 = vmatpush1.xpose.msra.mxu0 0.0
    %2046 = vmatprep.subr.mxu0 0.0
    %2047 = vmatpush1.xpose.msra.mxu0 0.0
    %2048 = vmatprep.subr.mxu0 0.0
    %2049 = vmatpush1.xpose.msra.mxu0 0.0
    %2050 = vmatprep.subr.mxu0 0.0
    %2051 = vmatpush1.xpose.msra.mxu0 0.0
    %2052 = vmatprep.subr.mxu0 0.0
    %2053 = vmatpush1.xpose.msra.mxu0 0.0
    %2054 = vmatprep.mubr.f32.mxu0 0.0
    %2055 = vmatmul.mubr.f32.gmra.mrb[0].mxu0 %v1985
    %v2056 = vpop.f32.mrb[0].mxu0
    %v2057 = vadd.f32 0.0, %v2056
    %v2058 = vpop.f32.mrb[0].mxu0
    %2059 = vdwg.mxu0
    %v2060 = vmul.f32 %v1981, 0.25
    %v2061 = vmul.f32 %v2057, 0.25
    %v2062 = vsel %vm537, %v2060, -inf
    %2063 = vmax.xlane.f32.xlu0 %v2062
    %v2064 = vpop.xlane.xlu0 %2063
    %v2065 = vsel %vm537, %v2061, -inf
    %2066 = vmax.xlane.f32.xlu0 %v2065
    %v2067 = vpop.xlane.xlu0 %2066
    %v2068 = vsub.f32 %v2060, %v2064
    %v2069 = vsub.f32 %v2061, %v2067
    %v2070 = vmul.f32 %v2068, 1.442695
    %v2071 = vpow.pop %v2070
    %v2072 = vmul.f32 %v2069, 1.442695
    %v2073 = vpow.pop %v2072
    %v2074 = vsel %vm537, %v2071, 0.0
    %2075 = vadd.xlane.f32.xlu0 %v2074
    %v2076 = vpop.xlane.xlu0 %2075
    %v2077 = vsel %vm537, %v2073, 0.0
    %2078 = vadd.xlane.f32.xlu0 %v2077
    %v2079 = vpop.xlane.xlu0 %2078
    %v2080 = vrcp.pop %v2076
    %v2081 = vrcp.pop %v2079
    %v2082 = vmul.f32 %v2071, %v2080
    %v2083 = vmul.f32 %v2073, %v2081
    %2084 = vrot.lane.b32.xlu0 %v1900, 112
    %v2085 = vpop.permute.xlu0 %2084
    %v2088 = vsel %vm537, %v2082, 0
    %2090 = vmatprep.subr.mxu0 0.0
    %2091 = vmatpush1.msra.mxu0 %v2085
    %2092 = vmatprep.subr.mxu0 0.0
    %2093 = vmatpush1.msra.mxu0 0.0
    %2094 = vmatprep.subr.mxu0 0.0
    %2095 = vmatpush1.msra.mxu0 0.0
    %2096 = vmatprep.subr.mxu0 0.0
    %2097 = vmatpush1.msra.mxu0 0.0
    %2098 = vmatprep.subr.mxu0 0.0
    %2099 = vmatpush1.msra.mxu0 0.0
    %2100 = vmatprep.subr.mxu0 0.0
    %2101 = vmatpush1.msra.mxu0 0.0
    %2102 = vmatprep.subr.mxu0 0.0
    %2103 = vmatpush1.msra.mxu0 0.0
    %2104 = vmatprep.subr.mxu0 0.0
    %2105 = vmatpush1.msra.mxu0 0.0
    %2106 = vmatprep.subr.mxu0 0.0
    %2107 = vmatpush1.msra.mxu0 0.0
    %2108 = vmatprep.subr.mxu0 0.0
    %2109 = vmatpush1.msra.mxu0 0.0
    %2110 = vmatprep.subr.mxu0 0.0
    %2111 = vmatpush1.msra.mxu0 0.0
    %2112 = vmatprep.subr.mxu0 0.0
    %2113 = vmatpush1.msra.mxu0 0.0
    %2114 = vmatprep.subr.mxu0 0.0
    %2115 = vmatpush1.msra.mxu0 0.0
    %2116 = vmatprep.subr.mxu0 0.0
    %2117 = vmatpush1.msra.mxu0 0.0
    %2118 = vmatprep.subr.mxu0 0.0
    %2119 = vmatpush1.msra.mxu0 0.0
    %2120 = vmatprep.subr.mxu0 0.0
    %2121 = vmatpush1.msra.mxu0 0.0
    %2122 = vmatprep.subr.mxu0 0.0
    %2123 = vmatpush1.msra.mxu0 0.0
    %2124 = vmatprep.subr.mxu0 0.0
    %2125 = vmatpush1.msra.mxu0 0.0
    %2126 = vmatprep.subr.mxu0 0.0
    %2127 = vmatpush1.msra.mxu0 0.0
    %2128 = vmatprep.subr.mxu0 0.0
    %2129 = vmatpush1.msra.mxu0 0.0
    %2130 = vmatprep.subr.mxu0 0.0
    %2131 = vmatpush1.msra.mxu0 0.0
    %2132 = vmatprep.subr.mxu0 0.0
    %2133 = vmatpush1.msra.mxu0 0.0
    %2134 = vmatprep.subr.mxu0 0.0
    %2135 = vmatpush1.msra.mxu0 0.0
    %2136 = vmatprep.subr.mxu0 0.0
    %2137 = vmatpush1.msra.mxu0 0.0
    %2138 = vmatprep.subr.mxu0 0.0
    %2139 = vmatpush1.msra.mxu0 0.0
    %2140 = vmatprep.subr.mxu0 0.0
    %2141 = vmatpush1.msra.mxu0 0.0
    %2142 = vmatprep.subr.mxu0 0.0
    %2143 = vmatpush1.msra.mxu0 0.0
    %2144 = vmatprep.subr.mxu0 0.0
    %2145 = vmatpush1.msra.mxu0 0.0
    %2146 = vmatprep.subr.mxu0 0.0
    %2147 = vmatpush1.msra.mxu0 0.0
    %2148 = vmatprep.subr.mxu0 0.0
    %2149 = vmatpush1.msra.mxu0 0.0
    %2150 = vmatprep.subr.mxu0 0.0
    %2151 = vmatpush1.msra.mxu0 0.0
    %2152 = vmatprep.subr.mxu0 0.0
    %2153 = vmatpush1.msra.mxu0 0.0
    %2154 = vmatprep.mubr.f32.mxu0 0.0
    %2155 = vmatmul.mubr.f32.gmra.mrb[0].mxu0 %v2088
    %v2156 = vpop.f32.mrb[0].mxu0
    %v2157 = vadd.f32 0.0, %v2156
    %v2158 = vpop.f32.mrb[0].mxu0
    %2159 = vdwg.mxu0
    %2160 = vrot.lane.b32.xlu0 %v1905, 112
    %v2161 = vpop.permute.xlu0 %2160
    %v2164 = vsel %vm537, %v2083, 0
    %2166 = vmatprep.subr.mxu0 0.0
    %2167 = vmatpush1.msra.mxu0 %v2161
    %2168 = vmatprep.subr.mxu0 0.0
    %2169 = vmatpush1.msra.mxu0 0.0
    %2170 = vmatprep.subr.mxu0 0.0
    %2171 = vmatpush1.msra.mxu0 0.0
    %2172 = vmatprep.subr.mxu0 0.0
    %2173 = vmatpush1.msra.mxu0 0.0
    %2174 = vmatprep.subr.mxu0 0.0
    %2175 = vmatpush1.msra.mxu0 0.0
    %2176 = vmatprep.subr.mxu0 0.0
    %2177 = vmatpush1.msra.mxu0 0.0
    %2178 = vmatprep.subr.mxu0 0.0
    %2179 = vmatpush1.msra.mxu0 0.0
    %2180 = vmatprep.subr.mxu0 0.0
    %2181 = vmatpush1.msra.mxu0 0.0
    %2182 = vmatprep.subr.mxu0 0.0
    %2183 = vmatpush1.msra.mxu0 0.0
    %2184 = vmatprep.subr.mxu0 0.0
    %2185 = vmatpush1.msra.mxu0 0.0
    %2186 = vmatprep.subr.mxu0 0.0
    %2187 = vmatpush1.msra.mxu0 0.0
    %2188 = vmatprep.subr.mxu0 0.0
    %2189 = vmatpush1.msra.mxu0 0.0
    %2190 = vmatprep.subr.mxu0 0.0
    %2191 = vmatpush1.msra.mxu0 0.0
    %2192 = vmatprep.subr.mxu0 0.0
    %2193 = vmatpush1.msra.mxu0 0.0
    %2194 = vmatprep.subr.mxu0 0.0
    %2195 = vmatpush1.msra.mxu0 0.0
    %2196 = vmatprep.subr.mxu0 0.0
    %2197 = vmatpush1.msra.mxu0 0.0
    %2198 = vmatprep.subr.mxu0 0.0
    %2199 = vmatpush1.msra.mxu0 0.0
    %2200 = vmatprep.subr.mxu0 0.0
    %2201 = vmatpush1.msra.mxu0 0.0
    %2202 = vmatprep.subr.mxu0 0.0
    %2203 = vmatpush1.msra.mxu0 0.0
    %2204 = vmatprep.subr.mxu0 0.0
    %2205 = vmatpush1.msra.mxu0 0.0
    %2206 = vmatprep.subr.mxu0 0.0
    %2207 = vmatpush1.msra.mxu0 0.0
    %2208 = vmatprep.subr.mxu0 0.0
    %2209 = vmatpush1.msra.mxu0 0.0
    %2210 = vmatprep.subr.mxu0 0.0
    %2211 = vmatpush1.msra.mxu0 0.0
    %2212 = vmatprep.subr.mxu0 0.0
    %2213 = vmatpush1.msra.mxu0 0.0
    %2214 = vmatprep.subr.mxu0 0.0
    %2215 = vmatpush1.msra.mxu0 0.0
    %2216 = vmatprep.subr.mxu0 0.0
    %2217 = vmatpush1.msra.mxu0 0.0
    %2218 = vmatprep.subr.mxu0 0.0
    %2219 = vmatpush1.msra.mxu0 0.0
    %2220 = vmatprep.subr.mxu0 0.0
    %2221 = vmatpush1.msra.mxu0 0.0
    %2222 = vmatprep.subr.mxu0 0.0
    %2223 = vmatpush1.msra.mxu0 0.0
    %2224 = vmatprep.subr.mxu0 0.0
    %2225 = vmatpush1.msra.mxu0 0.0
    %2226 = vmatprep.subr.mxu0 0.0
    %2227 = vmatpush1.msra.mxu0 0.0
    %2228 = vmatprep.subr.mxu0 0.0
    %2229 = vmatpush1.msra.mxu0 0.0
    %2230 = vmatprep.mubr.f32.mxu0 0.0
    %2231 = vmatmul.mubr.f32.gmra.mrb[0].mxu0 %v2164
    %v2232 = vpop.f32.mrb[0].mxu0
    %v2233 = vadd.f32 0.0, %v2232
    %v2234 = vpop.f32.mrb[0].mxu0
    %2235 = vdwg.mxu0
    %v2237 = vsel %vm298, %v2157, 0
    %v2240 = vsel %vm298, %v2233, 0
    %2242 = vmatprep.subr.mxu0 0.0
    %2243 = vmatpush1.msra.mxu0 %v1174
    %2244 = vmatprep.subr.mxu0 0.0
    %2245 = vmatpush1.msra.mxu0 %v1175
    %2246 = vmatprep.subr.mxu0 0.0
    %2247 = vmatpush1.msra.mxu0 %v1176
    %2248 = vmatprep.subr.mxu0 0.0
    %2249 = vmatpush1.msra.mxu0 %v1177
    %2250 = vmatprep.subr.mxu0 0.0
    %2251 = vmatpush1.msra.mxu0 0.0
    %2252 = vmatprep.subr.mxu0 0.0
    %2253 = vmatpush1.msra.mxu0 0.0
    %2254 = vmatprep.subr.mxu0 0.0
    %2255 = vmatpush1.msra.mxu0 0.0
    %2256 = vmatprep.subr.mxu0 0.0
    %2257 = vmatpush1.msra.mxu0 0.0
    %2258 = vmatprep.subr.mxu0 0.0
    %2259 = vmatpush1.msra.mxu0 0.0
    %2260 = vmatprep.subr.mxu0 0.0
    %2261 = vmatpush1.msra.mxu0 0.0
    %2262 = vmatprep.subr.mxu0 0.0
    %2263 = vmatpush1.msra.mxu0 0.0
    %2264 = vmatprep.subr.mxu0 0.0
    %2265 = vmatpush1.msra.mxu0 0.0
    %2266 = vmatprep.subr.mxu0 0.0
    %2267 = vmatpush1.msra.mxu0 0.0
    %2268 = vmatprep.subr.mxu0 0.0
    %2269 = vmatpush1.msra.mxu0 0.0
    %2270 = vmatprep.subr.mxu0 0.0
    %2271 = vmatpush1.msra.mxu0 0.0
    %2272 = vmatprep.subr.mxu0 0.0
    %2273 = vmatpush1.msra.mxu0 0.0
    %2274 = vmatprep.subr.mxu0 0.0
    %2275 = vmatpush1.msra.mxu0 0.0
    %2276 = vmatprep.subr.mxu0 0.0
    %2277 = vmatpush1.msra.mxu0 0.0
    %2278 = vmatprep.subr.mxu0 0.0
    %2279 = vmatpush1.msra.mxu0 0.0
    %2280 = vmatprep.subr.mxu0 0.0
    %2281 = vmatpush1.msra.mxu0 0.0
    %2282 = vmatprep.subr.mxu0 0.0
    %2283 = vmatpush1.msra.mxu0 0.0
    %2284 = vmatprep.subr.mxu0 0.0
    %2285 = vmatpush1.msra.mxu0 0.0
    %2286 = vmatprep.subr.mxu0 0.0
    %2287 = vmatpush1.msra.mxu0 0.0
    %2288 = vmatprep.subr.mxu0 0.0
    %2289 = vmatpush1.msra.mxu0 0.0
    %2290 = vmatprep.subr.mxu0 0.0
    %2291 = vmatpush1.msra.mxu0 0.0
    %2292 = vmatprep.subr.mxu0 0.0
    %2293 = vmatpush1.msra.mxu0 0.0
    %2294 = vmatprep.subr.mxu0 0.0
    %2295 = vmatpush1.msra.mxu0 0.0
    %2296 = vmatprep.subr.mxu0 0.0
    %2297 = vmatpush1.msra.mxu0 0.0
    %2298 = vmatprep.subr.mxu0 0.0
    %2299 = vmatpush1.msra.mxu0 0.0
    %2300 = vmatprep.subr.mxu0 0.0
    %2301 = vmatpush1.msra.mxu0 0.0
    %2302 = vmatprep.subr.mxu0 0.0
    %2303 = vmatpush1.msra.mxu0 0.0
    %2304 = vmatprep.subr.mxu0 0.0
    %2305 = vmatpush1.msra.mxu0 0.0
    %2306 = vmatprep.mubr.f32.mxu0 0.0
    %2307 = vmatmul.mubr.f32.gmra.mrb[0].mxu0 %v2237
    %v2308 = vpop.f32.mrb[0].mxu0
    %v2309 = vadd.f32 0.0, %v2308
    %v2310 = vpop.f32.mrb[0].mxu0
    %2311 = vmatprep.mubr.f32.mxu0 0.0
    %2312 = vmatmul.mubr.f32.gmra.mrb[0].mxu0 %v2240
    %v2313 = vpop.f32.mrb[0].mxu0
    %v2314 = vadd.f32 0.0, %v2313
    %v2315 = vpop.f32.mrb[0].mxu0
    %2316 = vdwg.mxu0
    %v2317 = vadd.f32 %v1728, %v2309
    %v2318 = vadd.f32 %v1729, %v2314
    %v2319 = vsel %vm298, %v2317, 0.0
    %2320 = vadd.xlane.f32.xlu0 %v2319
    %v2321 = vpop.xlane.xlu0 %2320
    %v2322 = vsel %vm298, %v2318, 0.0
    %2323 = vadd.xlane.f32.xlu0 %v2322
    %v2324 = vpop.xlane.xlu0 %2323
    %v2325 = vmul.f32 %v2321, %v801
    %v2326 = vmul.f32 %v2324, %v801
    %v2327 = vsub.f32 %v2317, %v2325
    %v2328 = vsub.f32 %v2318, %v2326
    %v2329 = vmul.f32 %v2327, %v2327
    %v2330 = vmul.f32 %v2328, %v2328
    %v2331 = vsel %vm298, %v2329, 0.0
    %2332 = vadd.xlane.f32.xlu0 %v2331
    %v2333 = vpop.xlane.xlu0 %2332
    %v2334 = vsel %vm298, %v2330, 0.0
    %2335 = vadd.xlane.f32.xlu0 %v2334
    %v2336 = vpop.xlane.xlu0 %2335
    %v2337 = vmul.f32 %v2333, %v801
    %v2338 = vmul.f32 %v2336, %v801
    %v2339 = vadd.f32 %v2337, 1e-05
    %v2340 = vadd.f32 %v2338, 1e-05
    %v2341 = vrsqrt.pop %v2339
    %v2342 = vrsqrt.pop %v2340
    %v2343 = vmul.f32 %v2327, %v2341
    %v2344 = vmul.f32 %v2328, %v2342
    %v2346 = vlaneseq
    %v2347 = vshrl.u32 %v2346, 7
    %v2348 = vsub.s32 0, %v2347
    %v2349 = vrot.slane %v1190, %v2348
    %v2351 = vmul.f32 %v2343, %v2349
    %v2352 = vmul.f32 %v2344, %v2349
    %v2354 = vlaneseq
    %v2355 = vshrl.u32 %v2354, 7
    %v2356 = vsub.s32 0, %v2355
    %v2357 = vrot.slane %v1191, %v2356
    %v2359 = vadd.f32 %v2351, %v2357
    %v2360 = vadd.f32 %v2352, %v2357
    %v2362 = vlaneseq
    %v2363 = vshrl.u32 %v2362, 7
    %v2364 = vsub.s32 0, %v2363
    %v2365 = vrot.slane %v1187, %v2364
    %v2368 = vsel %vm298, %v2359, 0
    %v2371 = vsel %vm298, %v2360, 0
    %2373 = vmatprep.subr.mxu0 0.0
    %2374 = vmatpush1.msra.mxu0 %v1183
    %2375 = vmatprep.subr.mxu0 0.0
    %2376 = vmatpush1.msra.mxu0 %v1184
    %2377 = vmatprep.subr.mxu0 0.0
    %2378 = vmatpush1.msra.mxu0 %v1185
    %2379 = vmatprep.subr.mxu0 0.0
    %2380 = vmatpush1.msra.mxu0 %v1186
    %2381 = vmatprep.subr.mxu0 0.0
    %2382 = vmatpush1.msra.mxu0 0.0
    %2383 = vmatprep.subr.mxu0 0.0
    %2384 = vmatpush1.msra.mxu0 0.0
    %2385 = vmatprep.subr.mxu0 0.0
    %2386 = vmatpush1.msra.mxu0 0.0
    %2387 = vmatprep.subr.mxu0 0.0
    %2388 = vmatpush1.msra.mxu0 0.0
    %2389 = vmatprep.subr.mxu0 0.0
    %2390 = vmatpush1.msra.mxu0 0.0
    %2391 = vmatprep.subr.mxu0 0.0
    %2392 = vmatpush1.msra.mxu0 0.0
    %2393 = vmatprep.subr.mxu0 0.0
    %2394 = vmatpush1.msra.mxu0 0.0
    %2395 = vmatprep.subr.mxu0 0.0
    %2396 = vmatpush1.msra.mxu0 0.0
    %2397 = vmatprep.subr.mxu0 0.0
    %2398 = vmatpush1.msra.mxu0 0.0
    %2399 = vmatprep.subr.mxu0 0.0
    %2400 = vmatpush1.msra.mxu0 0.0
    %2401 = vmatprep.subr.mxu0 0.0
    %2402 = vmatpush1.msra.mxu0 0.0
    %2403 = vmatprep.subr.mxu0 0.0
    %2404 = vmatpush1.msra.mxu0 0.0
    %2405 = vmatprep.subr.mxu0 0.0
    %2406 = vmatpush1.msra.mxu0 0.0
    %2407 = vmatprep.subr.mxu0 0.0
    %2408 = vmatpush1.msra.mxu0 0.0
    %2409 = vmatprep.subr.mxu0 0.0
    %2410 = vmatpush1.msra.mxu0 0.0
    %2411 = vmatprep.subr.mxu0 0.0
    %2412 = vmatpush1.msra.mxu0 0.0
    %2413 = vmatprep.subr.mxu0 0.0
    %2414 = vmatpush1.msra.mxu0 0.0
    %2415 = vmatprep.subr.mxu0 0.0
    %2416 = vmatpush1.msra.mxu0 0.0
    %2417 = vmatprep.subr.mxu0 0.0
    %2418 = vmatpush1.msra.mxu0 0.0
    %2419 = vmatprep.subr.mxu0 0.0
    %2420 = vmatpush1.msra.mxu0 0.0
    %2421 = vmatprep.subr.mxu0 0.0
    %2422 = vmatpush1.msra.mxu0 0.0
    %2423 = vmatprep.subr.mxu0 0.0
    %2424 = vmatpush1.msra.mxu0 0.0
    %2425 = vmatprep.subr.mxu0 0.0
    %2426 = vmatpush1.msra.mxu0 0.0
    %2427 = vmatprep.subr.mxu0 0.0
    %2428 = vmatpush1.msra.mxu0 0.0
    %2429 = vmatprep.subr.mxu0 0.0
    %2430 = vmatpush1.msra.mxu0 0.0
    %2431 = vmatprep.subr.mxu0 0.0
    %2432 = vmatpush1.msra.mxu0 0.0
    %2433 = vmatprep.subr.mxu0 0.0
    %2434 = vmatpush1.msra.mxu0 0.0
    %2435 = vmatprep.subr.mxu0 0.0
    %2436 = vmatpush1.msra.mxu0 0.0
    %2437 = vmatprep.mubr.f32.mxu0 0.0
    %2438 = vmatmul.mubr.f32.gmra.mrb[0].mxu0 %v2368
    %v2439 = vpop.f32.mrb[0].mxu0
    %v2440 = vadd.f32 %v2365, %v2439
    %v2441 = vpop.f32.mrb[0].mxu0
    %2442 = vmatprep.mubr.f32.mxu0 0.0
    %2443 = vmatmul.mubr.f32.gmra.mrb[0].mxu0 %v2371
    %v2444 = vpop.f32.mrb[0].mxu0
    %v2445 = vadd.f32 %v2365, %v2444
    %v2446 = vpop.f32.mrb[0].mxu0
    %2447 = vdwg.mxu0
    %vm2448 = vcmp.gt.f32.partialorder %v2440, 0.0
    %vm2449 = vcmp.gt.f32.partialorder %v2445, 0.0
    %v2450 = vmin.f32 %v2440, 0.0
    %v2451 = vmin.f32 %v2445, 0.0
    %v2452 = vmul.f32 %v2450, 1.442695
    %v2453 = vpow.pop %v2452
    %v2454 = vmul.f32 %v2451, 1.442695
    %v2455 = vpow.pop %v2454
    %v2456 = vsub.f32 %v2453, 1.0
    %v2457 = vsub.f32 %v2455, 1.0
    %v2458 = vsel %vm2448, %v2440, %v2456
    %v2459 = vsel %vm2449, %v2445, %v2457
    %v2461 = vlaneseq
    %v2462 = vshrl.u32 %v2461, 7
    %v2463 = vsub.s32 0, %v2462
    %v2464 = vrot.slane %v1182, %v2463
    %v2467 = vsel %vm298, %v2458, 0
    %v2470 = vsel %vm298, %v2459, 0
    %2472 = vmatprep.subr.mxu0 0.0
    %2473 = vmatpush1.msra.mxu0 %v1178
    %2474 = vmatprep.subr.mxu0 0.0
    %2475 = vmatpush1.msra.mxu0 %v1179
    %2476 = vmatprep.subr.mxu0 0.0
    %2477 = vmatpush1.msra.mxu0 %v1180
    %2478 = vmatprep.subr.mxu0 0.0
    %2479 = vmatpush1.msra.mxu0 %v1181
    %2480 = vmatprep.subr.mxu0 0.0
    %2481 = vmatpush1.msra.mxu0 0.0
    %2482 = vmatprep.subr.mxu0 0.0
    %2483 = vmatpush1.msra.mxu0 0.0
    %2484 = vmatprep.subr.mxu0 0.0
    %2485 = vmatpush1.msra.mxu0 0.0
    %2486 = vmatprep.subr.mxu0 0.0
    %2487 = vmatpush1.msra.mxu0 0.0
    %2488 = vmatprep.subr.mxu0 0.0
    %2489 = vmatpush1.msra.mxu0 0.0
    %2490 = vmatprep.subr.mxu0 0.0
    %2491 = vmatpush1.msra.mxu0 0.0
    %2492 = vmatprep.subr.mxu0 0.0
    %2493 = vmatpush1.msra.mxu0 0.0
    %2494 = vmatprep.subr.mxu0 0.0
    %2495 = vmatpush1.msra.mxu0 0.0
    %2496 = vmatprep.subr.mxu0 0.0
    %2497 = vmatpush1.msra.mxu0 0.0
    %2498 = vmatprep.subr.mxu0 0.0
    %2499 = vmatpush1.msra.mxu0 0.0
    %2500 = vmatprep.subr.mxu0 0.0
    %2501 = vmatpush1.msra.mxu0 0.0
    %2502 = vmatprep.subr.mxu0 0.0
    %2503 = vmatpush1.msra.mxu0 0.0
    %2504 = vmatprep.subr.mxu0 0.0
    %2505 = vmatpush1.msra.mxu0 0.0
    %2506 = vmatprep.subr.mxu0 0.0
    %2507 = vmatpush1.msra.mxu0 0.0
    %2508 = vmatprep.subr.mxu0 0.0
    %2509 = vmatpush1.msra.mxu0 0.0
    %2510 = vmatprep.subr.mxu0 0.0
    %2511 = vmatpush1.msra.mxu0 0.0
    %2512 = vmatprep.subr.mxu0 0.0
    %2513 = vmatpush1.msra.mxu0 0.0
    %2514 = vmatprep.subr.mxu0 0.0
    %2515 = vmatpush1.msra.mxu0 0.0
    %2516 = vmatprep.subr.mxu0 0.0
    %2517 = vmatpush1.msra.mxu0 0.0
    %2518 = vmatprep.subr.mxu0 0.0
    %2519 = vmatpush1.msra.mxu0 0.0
    %2520 = vmatprep.subr.mxu0 0.0
    %2521 = vmatpush1.msra.mxu0 0.0
    %2522 = vmatprep.subr.mxu0 0.0
    %2523 = vmatpush1.msra.mxu0 0.0
    %2524 = vmatprep.subr.mxu0 0.0
    %2525 = vmatpush1.msra.mxu0 0.0
    %2526 = vmatprep.subr.mxu0 0.0
    %2527 = vmatpush1.msra.mxu0 0.0
    %2528 = vmatprep.subr.mxu0 0.0
    %2529 = vmatpush1.msra.mxu0 0.0
    %2530 = vmatprep.subr.mxu0 0.0
    %2531 = vmatpush1.msra.mxu0 0.0
    %2532 = vmatprep.subr.mxu0 0.0
    %2533 = vmatpush1.msra.mxu0 0.0
    %2534 = vmatprep.subr.mxu0 0.0
    %2535 = vmatpush1.msra.mxu0 0.0
    %2536 = vmatprep.mubr.f32.mxu0 0.0
    %2537 = vmatmul.mubr.f32.gmra.mrb[0].mxu0 %v2467
    %v2538 = vpop.f32.mrb[0].mxu0
    %v2539 = vadd.f32 %v2464, %v2538
    %v2540 = vpop.f32.mrb[0].mxu0
    %2541 = vmatprep.mubr.f32.mxu0 0.0
    %2542 = vmatmul.mubr.f32.gmra.mrb[0].mxu0 %v2470
    %v2543 = vpop.f32.mrb[0].mxu0
    %v2544 = vadd.f32 %v2464, %v2543
    %v2545 = vpop.f32.mrb[0].mxu0
    %2546 = vdwg.mxu0
    %v2547 = vadd.f32 %v2359, %v2539
    %v2548 = vadd.f32 %v2360, %v2544
    %v2549 = vsel %vm298, %v2547, 0.0
    %2550 = vadd.xlane.f32.xlu0 %v2549
    %v2551 = vpop.xlane.xlu0 %2550
    %v2552 = vsel %vm298, %v2548, 0.0
    %2553 = vadd.xlane.f32.xlu0 %v2552
    %v2554 = vpop.xlane.xlu0 %2553
    %v2555 = vmul.f32 %v2551, %v801
    %v2556 = vmul.f32 %v2554, %v801
    %v2557 = vsub.f32 %v2547, %v2555
    %v2558 = vsub.f32 %v2548, %v2556
    %v2559 = vmul.f32 %v2557, %v2557
    %v2560 = vmul.f32 %v2558, %v2558
    %v2561 = vsel %vm298, %v2559, 0.0
    %2562 = vadd.xlane.f32.xlu0 %v2561
    %v2563 = vpop.xlane.xlu0 %2562
    %v2564 = vsel %vm298, %v2560, 0.0
    %2565 = vadd.xlane.f32.xlu0 %v2564
    %v2566 = vpop.xlane.xlu0 %2565
    %v2567 = vmul.f32 %v2563, %v801
    %v2568 = vmul.f32 %v2566, %v801
    %v2569 = vadd.f32 %v2567, 1e-05
    %v2570 = vadd.f32 %v2568, 1e-05
    %v2571 = vrsqrt.pop %v2569
    %v2572 = vrsqrt.pop %v2570
    %v2573 = vmul.f32 %v2557, %v2571
    %v2574 = vmul.f32 %v2558, %v2572
    %v2576 = vlaneseq
    %v2577 = vshrl.u32 %v2576, 7
    %v2578 = vsub.s32 0, %v2577
    %v2579 = vrot.slane %v1192, %v2578
    %v2581 = vmul.f32 %v2573, %v2579
    %v2582 = vmul.f32 %v2574, %v2579
    %v2584 = vlaneseq
    %v2585 = vshrl.u32 %v2584, 7
    %v2586 = vsub.s32 0, %v2585
    %v2587 = vrot.slane %v1193, %v2586
    %v2589 = vadd.f32 %v2581, %v2587
    %v2590 = vadd.f32 %v2582, %v2587
    %v2591 = vld [vmem:[%s15] sm:$0xff]
    %v2592 = vld [vmem:[%s15 + $0x8] sm:$0xff]
    %v2593 = vld [vmem:[%s15 + $0x10] sm:$0xff]
    %v2594 = vld [vmem:[%s15 + $0x18] sm:$0xff]
    %v2595 = vld [vmem:[%s15 + $0x20] sm:$0xff]
    %v2596 = vld [vmem:[%s15 + $0x28] sm:$0xff]
    %v2597 = vld [vmem:[%s15 + $0x30] sm:$0xff]
    %v2598 = vld [vmem:[%s15 + $0x38] sm:$0xff]
    %v2599 = vld [vmem:[%s15 + $0x40] sm:$0xff]
    %v2600 = vld [vmem:[%s15 + $0x48] sm:$0xff]
    %v2601 = vld [vmem:[%s15 + $0x50] sm:$0xff]
    %v2602 = vld [vmem:[%s15 + $0x58] sm:$0xff]
    %v2603 = vld [vmem:[%s15 + $0x60] sm:$0xff]
    %v2604 = vld [vmem:[%s15 + $0x68] sm:$0xff]
    %v2605 = vld [vmem:[%s15 + $0x70] sm:$0xff]
    %v2606 = vld [vmem:[%s15 + $0x78] sm:$0xff]
    %v2607 = vld [vmem:[%s15 + $0x80] sm:$0xff]
    %v2608 = vld [vmem:[%s15 + $0x88] sm:$0xff]
    %v2609 = vld [vmem:[%s15 + $0x90] sm:$0xff]
    %v2610 = vld [vmem:[%s15 + $0x98] sm:$0xff]
    %v2611 = vld [vmem:[%s15 + $0xa0] sm:$0xff]
    %v2612 = vld [vmem:[%s15 + $0xa8] sm:$0xff]
    %v2613 = vld [vmem:[%s15 + $0xb0] sm:$0xff]
    %v2614 = vld [vmem:[%s15 + $0xb8] sm:$0xff]
    %v2615 = vld [vmem:[%s15 + $0xc0] sm:$0xff]
    %v2616 = vld [vmem:[%s15 + $0xc8] sm:$0xff]
    %v2617 = vld [vmem:[%s15 + $0xd0] sm:$0xff]
    %v2618 = vld [vmem:[%s15 + $0xd8] sm:$0xff]
    %v2619 = vld [vmem:[%s15 + $0xe0] sm:$0xff]
    %v2620 = vld [vmem:[%s15 + $0xe8] sm:$0xff]
    %v2621 = vld [vmem:[%s15 + $0xf0] sm:$0xff]
    %v2622 = vld [vmem:[%s15 + $0xf8] sm:$0xff]
    %v2623 = vld [vmem:[%s17] sm:$0x1]
    %v2625 = vsel %vm298, %v2589, 0
    %2627 = vmatprep.subr.mxu0 0.0
    %2628 = vmatpush1.msra.mxu0 %v2591
    %2629 = vmatprep.subr.mxu0 0.0
    %2630 = vmatpush1.msra.mxu0 %v2592
    %2631 = vmatprep.subr.mxu0 0.0
    %2632 = vmatpush1.msra.mxu0 %v2593
    %2633 = vmatprep.subr.mxu0 0.0
    %2634 = vmatpush1.msra.mxu0 %v2594
    %2635 = vmatprep.subr.mxu0 0.0
    %2636 = vmatpush1.msra.mxu0 0.0
    %2637 = vmatprep.subr.mxu0 0.0
    %2638 = vmatpush1.msra.mxu0 0.0
    %2639 = vmatprep.subr.mxu0 0.0
    %2640 = vmatpush1.msra.mxu0 0.0
    %2641 = vmatprep.subr.mxu0 0.0
    %2642 = vmatpush1.msra.mxu0 0.0
    %2643 = vmatprep.subr.mxu0 0.0
    %2644 = vmatpush1.msra.mxu0 0.0
    %2645 = vmatprep.subr.mxu0 0.0
    %2646 = vmatpush1.msra.mxu0 0.0
    %2647 = vmatprep.subr.mxu0 0.0
    %2648 = vmatpush1.msra.mxu0 0.0
    %2649 = vmatprep.subr.mxu0 0.0
    %2650 = vmatpush1.msra.mxu0 0.0
    %2651 = vmatprep.subr.mxu0 0.0
    %2652 = vmatpush1.msra.mxu0 0.0
    %2653 = vmatprep.subr.mxu0 0.0
    %2654 = vmatpush1.msra.mxu0 0.0
    %2655 = vmatprep.subr.mxu0 0.0
    %2656 = vmatpush1.msra.mxu0 0.0
    %2657 = vmatprep.subr.mxu0 0.0
    %2658 = vmatpush1.msra.mxu0 0.0
    %2659 = vmatprep.subr.mxu0 0.0
    %2660 = vmatpush1.msra.mxu0 0.0
    %2661 = vmatprep.subr.mxu0 0.0
    %2662 = vmatpush1.msra.mxu0 0.0
    %2663 = vmatprep.subr.mxu0 0.0
    %2664 = vmatpush1.msra.mxu0 0.0
    %2665 = vmatprep.subr.mxu0 0.0
    %2666 = vmatpush1.msra.mxu0 0.0
    %2667 = vmatprep.subr.mxu0 0.0
    %2668 = vmatpush1.msra.mxu0 0.0
    %2669 = vmatprep.subr.mxu0 0.0
    %2670 = vmatpush1.msra.mxu0 0.0
    %2671 = vmatprep.subr.mxu0 0.0
    %2672 = vmatpush1.msra.mxu0 0.0
    %2673 = vmatprep.subr.mxu0 0.0
    %2674 = vmatpush1.msra.mxu0 0.0
    %2675 = vmatprep.subr.mxu0 0.0
    %2676 = vmatpush1.msra.mxu0 0.0
    %2677 = vmatprep.subr.mxu0 0.0
    %2678 = vmatpush1.msra.mxu0 0.0
    %2679 = vmatprep.subr.mxu0 0.0
    %2680 = vmatpush1.msra.mxu0 0.0
    %2681 = vmatprep.subr.mxu0 0.0
    %2682 = vmatpush1.msra.mxu0 0.0
    %2683 = vmatprep.subr.mxu0 0.0
    %2684 = vmatpush1.msra.mxu0 0.0
    %2685 = vmatprep.subr.mxu0 0.0
    %2686 = vmatpush1.msra.mxu0 0.0
    %2687 = vmatprep.subr.mxu0 0.0
    %2688 = vmatpush1.msra.mxu0 0.0
    %2689 = vmatprep.subr.mxu0 0.0
    %2690 = vmatpush1.msra.mxu0 0.0
    %2691 = vmatprep.mubr.f32.mxu0 0.0
    %2692 = vmatmul.mubr.f32.gmra.mrb[0].mxu0 %v2625
    %v2693 = vpop.f32.mrb[0].mxu0
    %v2694 = vadd.f32 0.0, %v2693
    %v2695 = vpop.f32.mrb[0].mxu0
    %2696 = vdwg.mxu0
    %v2697 = vadd.f32 %v2623, %v2694
    %v2698 = vrot.slane %v2589, 1
    %v2699 = vsel %vm298, %v2698, 0
    %2701 = vmatprep.subr.mxu0 0.0
    %2702 = vmatpush1.msra.mxu0 %v2595
    %2703 = vmatprep.subr.mxu0 0.0
    %2704 = vmatpush1.msra.mxu0 %v2596
    %2705 = vmatprep.subr.mxu0 0.0
    %2706 = vmatpush1.msra.mxu0 %v2597
    %2707 = vmatprep.subr.mxu0 0.0
    %2708 = vmatpush1.msra.mxu0 %v2598
    %2709 = vmatprep.subr.mxu0 0.0
    %2710 = vmatpush1.msra.mxu0 0.0
    %2711 = vmatprep.subr.mxu0 0.0
    %2712 = vmatpush1.msra.mxu0 0.0
    %2713 = vmatprep.subr.mxu0 0.0
    %2714 = vmatpush1.msra.mxu0 0.0
    %2715 = vmatprep.subr.mxu0 0.0
    %2716 = vmatpush1.msra.mxu0 0.0
    %2717 = vmatprep.subr.mxu0 0.0
    %2718 = vmatpush1.msra.mxu0 0.0
    %2719 = vmatprep.subr.mxu0 0.0
    %2720 = vmatpush1.msra.mxu0 0.0
    %2721 = vmatprep.subr.mxu0 0.0
    %2722 = vmatpush1.msra.mxu0 0.0
    %2723 = vmatprep.subr.mxu0 0.0
    %2724 = vmatpush1.msra.mxu0 0.0
    %2725 = vmatprep.subr.mxu0 0.0
    %2726 = vmatpush1.msra.mxu0 0.0
    %2727 = vmatprep.subr.mxu0 0.0
    %2728 = vmatpush1.msra.mxu0 0.0
    %2729 = vmatprep.subr.mxu0 0.0
    %2730 = vmatpush1.msra.mxu0 0.0
    %2731 = vmatprep.subr.mxu0 0.0
    %2732 = vmatpush1.msra.mxu0 0.0
    %2733 = vmatprep.subr.mxu0 0.0
    %2734 = vmatpush1.msra.mxu0 0.0
    %2735 = vmatprep.subr.mxu0 0.0
    %2736 = vmatpush1.msra.mxu0 0.0
    %2737 = vmatprep.subr.mxu0 0.0
    %2738 = vmatpush1.msra.mxu0 0.0
    %2739 = vmatprep.subr.mxu0 0.0
    %2740 = vmatpush1.msra.mxu0 0.0
    %2741 = vmatprep.subr.mxu0 0.0
    %2742 = vmatpush1.msra.mxu0 0.0
    %2743 = vmatprep.subr.mxu0 0.0
    %2744 = vmatpush1.msra.mxu0 0.0
    %2745 = vmatprep.subr.mxu0 0.0
    %2746 = vmatpush1.msra.mxu0 0.0
    %2747 = vmatprep.subr.mxu0 0.0
    %2748 = vmatpush1.msra.mxu0 0.0
    %2749 = vmatprep.subr.mxu0 0.0
    %2750 = vmatpush1.msra.mxu0 0.0
    %2751 = vmatprep.subr.mxu0 0.0
    %2752 = vmatpush1.msra.mxu0 0.0
    %2753 = vmatprep.subr.mxu0 0.0
    %2754 = vmatpush1.msra.mxu0 0.0
    %2755 = vmatprep.subr.mxu0 0.0
    %2756 = vmatpush1.msra.mxu0 0.0
    %2757 = vmatprep.subr.mxu0 0.0
    %2758 = vmatpush1.msra.mxu0 0.0
    %2759 = vmatprep.subr.mxu0 0.0
    %2760 = vmatpush1.msra.mxu0 0.0
    %2761 = vmatprep.subr.mxu0 0.0
    %2762 = vmatpush1.msra.mxu0 0.0
    %2763 = vmatprep.subr.mxu0 0.0
    %2764 = vmatpush1.msra.mxu0 0.0
    %2765 = vmatprep.mubr.f32.mxu0 0.0
    %2766 = vmatmul.mubr.f32.gmra.mrb[0].mxu0 %v2699
    %v2767 = vpop.f32.mrb[0].mxu0
    %v2768 = vadd.f32 0.0, %v2767
    %v2769 = vpop.f32.mrb[0].mxu0
    %2770 = vdwg.mxu0
    %v2771 = vadd.f32 %v2697, %v2768
    %v2772 = vrot.slane %v2589, 2
    %v2773 = vsel %vm298, %v2772, 0
    %2775 = vmatprep.subr.mxu0 0.0
    %2776 = vmatpush1.msra.mxu0 %v2599
    %2777 = vmatprep.subr.mxu0 0.0
    %2778 = vmatpush1.msra.mxu0 %v2600
    %2779 = vmatprep.subr.mxu0 0.0
    %2780 = vmatpush1.msra.mxu0 %v2601
    %2781 = vmatprep.subr.mxu0 0.0
    %2782 = vmatpush1.msra.mxu0 %v2602
    %2783 = vmatprep.subr.mxu0 0.0
    %2784 = vmatpush1.msra.mxu0 0.0
    %2785 = vmatprep.subr.mxu0 0.0
    %2786 = vmatpush1.msra.mxu0 0.0
    %2787 = vmatprep.subr.mxu0 0.0
    %2788 = vmatpush1.msra.mxu0 0.0
    %2789 = vmatprep.subr.mxu0 0.0
    %2790 = vmatpush1.msra.mxu0 0.0
    %2791 = vmatprep.subr.mxu0 0.0
    %2792 = vmatpush1.msra.mxu0 0.0
    %2793 = vmatprep.subr.mxu0 0.0
    %2794 = vmatpush1.msra.mxu0 0.0
    %2795 = vmatprep.subr.mxu0 0.0
    %2796 = vmatpush1.msra.mxu0 0.0
    %2797 = vmatprep.subr.mxu0 0.0
    %2798 = vmatpush1.msra.mxu0 0.0
    %2799 = vmatprep.subr.mxu0 0.0
    %2800 = vmatpush1.msra.mxu0 0.0
    %2801 = vmatprep.subr.mxu0 0.0
    %2802 = vmatpush1.msra.mxu0 0.0
    %2803 = vmatprep.subr.mxu0 0.0
    %2804 = vmatpush1.msra.mxu0 0.0
    %2805 = vmatprep.subr.mxu0 0.0
    %2806 = vmatpush1.msra.mxu0 0.0
    %2807 = vmatprep.subr.mxu0 0.0
    %2808 = vmatpush1.msra.mxu0 0.0
    %2809 = vmatprep.subr.mxu0 0.0
    %2810 = vmatpush1.msra.mxu0 0.0
    %2811 = vmatprep.subr.mxu0 0.0
    %2812 = vmatpush1.msra.mxu0 0.0
    %2813 = vmatprep.subr.mxu0 0.0
    %2814 = vmatpush1.msra.mxu0 0.0
    %2815 = vmatprep.subr.mxu0 0.0
    %2816 = vmatpush1.msra.mxu0 0.0
    %2817 = vmatprep.subr.mxu0 0.0
    %2818 = vmatpush1.msra.mxu0 0.0
    %2819 = vmatprep.subr.mxu0 0.0
    %2820 = vmatpush1.msra.mxu0 0.0
    %2821 = vmatprep.subr.mxu0 0.0
    %2822 = vmatpush1.msra.mxu0 0.0
    %2823 = vmatprep.subr.mxu0 0.0
    %2824 = vmatpush1.msra.mxu0 0.0
    %2825 = vmatprep.subr.mxu0 0.0
    %2826 = vmatpush1.msra.mxu0 0.0
    %2827 = vmatprep.subr.mxu0 0.0
    %2828 = vmatpush1.msra.mxu0 0.0
    %2829 = vmatprep.subr.mxu0 0.0
    %2830 = vmatpush1.msra.mxu0 0.0
    %2831 = vmatprep.subr.mxu0 0.0
    %2832 = vmatpush1.msra.mxu0 0.0
    %2833 = vmatprep.subr.mxu0 0.0
    %2834 = vmatpush1.msra.mxu0 0.0
    %2835 = vmatprep.subr.mxu0 0.0
    %2836 = vmatpush1.msra.mxu0 0.0
    %2837 = vmatprep.subr.mxu0 0.0
    %2838 = vmatpush1.msra.mxu0 0.0
    %2839 = vmatprep.mubr.f32.mxu0 0.0
    %2840 = vmatmul.mubr.f32.gmra.mrb[0].mxu0 %v2773
    %v2841 = vpop.f32.mrb[0].mxu0
    %v2842 = vadd.f32 0.0, %v2841
    %v2843 = vpop.f32.mrb[0].mxu0
    %2844 = vdwg.mxu0
    %v2845 = vadd.f32 %v2771, %v2842
    %v2846 = vrot.slane %v2589, 3
    %v2847 = vsel %vm298, %v2846, 0
    %2849 = vmatprep.subr.mxu0 0.0
    %2850 = vmatpush1.msra.mxu0 %v2603
    %2851 = vmatprep.subr.mxu0 0.0
    %2852 = vmatpush1.msra.mxu0 %v2604
    %2853 = vmatprep.subr.mxu0 0.0
    %2854 = vmatpush1.msra.mxu0 %v2605
    %2855 = vmatprep.subr.mxu0 0.0
    %2856 = vmatpush1.msra.mxu0 %v2606
    %2857 = vmatprep.subr.mxu0 0.0
    %2858 = vmatpush1.msra.mxu0 0.0
    %2859 = vmatprep.subr.mxu0 0.0
    %2860 = vmatpush1.msra.mxu0 0.0
    %2861 = vmatprep.subr.mxu0 0.0
    %2862 = vmatpush1.msra.mxu0 0.0
    %2863 = vmatprep.subr.mxu0 0.0
    %2864 = vmatpush1.msra.mxu0 0.0
    %2865 = vmatprep.subr.mxu0 0.0
    %2866 = vmatpush1.msra.mxu0 0.0
    %2867 = vmatprep.subr.mxu0 0.0
    %2868 = vmatpush1.msra.mxu0 0.0
    %2869 = vmatprep.subr.mxu0 0.0
    %2870 = vmatpush1.msra.mxu0 0.0
    %2871 = vmatprep.subr.mxu0 0.0
    %2872 = vmatpush1.msra.mxu0 0.0
    %2873 = vmatprep.subr.mxu0 0.0
    %2874 = vmatpush1.msra.mxu0 0.0
    %2875 = vmatprep.subr.mxu0 0.0
    %2876 = vmatpush1.msra.mxu0 0.0
    %2877 = vmatprep.subr.mxu0 0.0
    %2878 = vmatpush1.msra.mxu0 0.0
    %2879 = vmatprep.subr.mxu0 0.0
    %2880 = vmatpush1.msra.mxu0 0.0
    %2881 = vmatprep.subr.mxu0 0.0
    %2882 = vmatpush1.msra.mxu0 0.0
    %2883 = vmatprep.subr.mxu0 0.0
    %2884 = vmatpush1.msra.mxu0 0.0
    %2885 = vmatprep.subr.mxu0 0.0
    %2886 = vmatpush1.msra.mxu0 0.0
    %2887 = vmatprep.subr.mxu0 0.0
    %2888 = vmatpush1.msra.mxu0 0.0
    %2889 = vmatprep.subr.mxu0 0.0
    %2890 = vmatpush1.msra.mxu0 0.0
    %2891 = vmatprep.subr.mxu0 0.0
    %2892 = vmatpush1.msra.mxu0 0.0
    %2893 = vmatprep.subr.mxu0 0.0
    %2894 = vmatpush1.msra.mxu0 0.0
    %2895 = vmatprep.subr.mxu0 0.0
    %2896 = vmatpush1.msra.mxu0 0.0
    %2897 = vmatprep.subr.mxu0 0.0
    %2898 = vmatpush1.msra.mxu0 0.0
    %2899 = vmatprep.subr.mxu0 0.0
    %2900 = vmatpush1.msra.mxu0 0.0
    %2901 = vmatprep.subr.mxu0 0.0
    %2902 = vmatpush1.msra.mxu0 0.0
    %2903 = vmatprep.subr.mxu0 0.0
    %2904 = vmatpush1.msra.mxu0 0.0
    %2905 = vmatprep.subr.mxu0 0.0
    %2906 = vmatpush1.msra.mxu0 0.0
    %2907 = vmatprep.subr.mxu0 0.0
    %2908 = vmatpush1.msra.mxu0 0.0
    %2909 = vmatprep.subr.mxu0 0.0
    %2910 = vmatpush1.msra.mxu0 0.0
    %2911 = vmatprep.subr.mxu0 0.0
    %2912 = vmatpush1.msra.mxu0 0.0
    %2913 = vmatprep.mubr.f32.mxu0 0.0
    %2914 = vmatmul.mubr.f32.gmra.mrb[0].mxu0 %v2847
    %v2915 = vpop.f32.mrb[0].mxu0
    %v2916 = vadd.f32 0.0, %v2915
    %v2917 = vpop.f32.mrb[0].mxu0
    %2918 = vdwg.mxu0
    %v2919 = vadd.f32 %v2845, %v2916
    %v2920 = vrot.slane %v2589, 4
    %v2921 = vsel %vm298, %v2920, 0
    %2923 = vmatprep.subr.mxu0 0.0
    %2924 = vmatpush1.msra.mxu0 %v2607
    %2925 = vmatprep.subr.mxu0 0.0
    %2926 = vmatpush1.msra.mxu0 %v2608
    %2927 = vmatprep.subr.mxu0 0.0
    %2928 = vmatpush1.msra.mxu0 %v2609
    %2929 = vmatprep.subr.mxu0 0.0
    %2930 = vmatpush1.msra.mxu0 %v2610
    %2931 = vmatprep.subr.mxu0 0.0
    %2932 = vmatpush1.msra.mxu0 0.0
    %2933 = vmatprep.subr.mxu0 0.0
    %2934 = vmatpush1.msra.mxu0 0.0
    %2935 = vmatprep.subr.mxu0 0.0
    %2936 = vmatpush1.msra.mxu0 0.0
    %2937 = vmatprep.subr.mxu0 0.0
    %2938 = vmatpush1.msra.mxu0 0.0
    %2939 = vmatprep.subr.mxu0 0.0
    %2940 = vmatpush1.msra.mxu0 0.0
    %2941 = vmatprep.subr.mxu0 0.0
    %2942 = vmatpush1.msra.mxu0 0.0
    %2943 = vmatprep.subr.mxu0 0.0
    %2944 = vmatpush1.msra.mxu0 0.0
    %2945 = vmatprep.subr.mxu0 0.0
    %2946 = vmatpush1.msra.mxu0 0.0
    %2947 = vmatprep.subr.mxu0 0.0
    %2948 = vmatpush1.msra.mxu0 0.0
    %2949 = vmatprep.subr.mxu0 0.0
    %2950 = vmatpush1.msra.mxu0 0.0
    %2951 = vmatprep.subr.mxu0 0.0
    %2952 = vmatpush1.msra.mxu0 0.0
    %2953 = vmatprep.subr.mxu0 0.0
    %2954 = vmatpush1.msra.mxu0 0.0
    %2955 = vmatprep.subr.mxu0 0.0
    %2956 = vmatpush1.msra.mxu0 0.0
    %2957 = vmatprep.subr.mxu0 0.0
    %2958 = vmatpush1.msra.mxu0 0.0
    %2959 = vmatprep.subr.mxu0 0.0
    %2960 = vmatpush1.msra.mxu0 0.0
    %2961 = vmatprep.subr.mxu0 0.0
    %2962 = vmatpush1.msra.mxu0 0.0
    %2963 = vmatprep.subr.mxu0 0.0
    %2964 = vmatpush1.msra.mxu0 0.0
    %2965 = vmatprep.subr.mxu0 0.0
    %2966 = vmatpush1.msra.mxu0 0.0
    %2967 = vmatprep.subr.mxu0 0.0
    %2968 = vmatpush1.msra.mxu0 0.0
    %2969 = vmatprep.subr.mxu0 0.0
    %2970 = vmatpush1.msra.mxu0 0.0
    %2971 = vmatprep.subr.mxu0 0.0
    %2972 = vmatpush1.msra.mxu0 0.0
    %2973 = vmatprep.subr.mxu0 0.0
    %2974 = vmatpush1.msra.mxu0 0.0
    %2975 = vmatprep.subr.mxu0 0.0
    %2976 = vmatpush1.msra.mxu0 0.0
    %2977 = vmatprep.subr.mxu0 0.0
    %2978 = vmatpush1.msra.mxu0 0.0
    %2979 = vmatprep.subr.mxu0 0.0
    %2980 = vmatpush1.msra.mxu0 0.0
    %2981 = vmatprep.subr.mxu0 0.0
    %2982 = vmatpush1.msra.mxu0 0.0
    %2983 = vmatprep.subr.mxu0 0.0
    %2984 = vmatpush1.msra.mxu0 0.0
    %2985 = vmatprep.subr.mxu0 0.0
    %2986 = vmatpush1.msra.mxu0 0.0
    %2987 = vmatprep.mubr.f32.mxu0 0.0
    %2988 = vmatmul.mubr.f32.gmra.mrb[0].mxu0 %v2921
    %v2989 = vpop.f32.mrb[0].mxu0
    %v2990 = vadd.f32 0.0, %v2989
    %v2991 = vpop.f32.mrb[0].mxu0
    %2992 = vdwg.mxu0
    %v2993 = vadd.f32 %v2919, %v2990
    %v2994 = vrot.slane %v2589, 5
    %v2995 = vsel %vm298, %v2994, 0
    %2997 = vmatprep.subr.mxu0 0.0
    %2998 = vmatpush1.msra.mxu0 %v2611
    %2999 = vmatprep.subr.mxu0 0.0
    %3000 = vmatpush1.msra.mxu0 %v2612
    %3001 = vmatprep.subr.mxu0 0.0
    %3002 = vmatpush1.msra.mxu0 %v2613
    %3003 = vmatprep.subr.mxu0 0.0
    %3004 = vmatpush1.msra.mxu0 %v2614
    %3005 = vmatprep.subr.mxu0 0.0
    %3006 = vmatpush1.msra.mxu0 0.0
    %3007 = vmatprep.subr.mxu0 0.0
    %3008 = vmatpush1.msra.mxu0 0.0
    %3009 = vmatprep.subr.mxu0 0.0
    %3010 = vmatpush1.msra.mxu0 0.0
    %3011 = vmatprep.subr.mxu0 0.0
    %3012 = vmatpush1.msra.mxu0 0.0
    %3013 = vmatprep.subr.mxu0 0.0
    %3014 = vmatpush1.msra.mxu0 0.0
    %3015 = vmatprep.subr.mxu0 0.0
    %3016 = vmatpush1.msra.mxu0 0.0
    %3017 = vmatprep.subr.mxu0 0.0
    %3018 = vmatpush1.msra.mxu0 0.0
    %3019 = vmatprep.subr.mxu0 0.0
    %3020 = vmatpush1.msra.mxu0 0.0
    %3021 = vmatprep.subr.mxu0 0.0
    %3022 = vmatpush1.msra.mxu0 0.0
    %3023 = vmatprep.subr.mxu0 0.0
    %3024 = vmatpush1.msra.mxu0 0.0
    %3025 = vmatprep.subr.mxu0 0.0
    %3026 = vmatpush1.msra.mxu0 0.0
    %3027 = vmatprep.subr.mxu0 0.0
    %3028 = vmatpush1.msra.mxu0 0.0
    %3029 = vmatprep.subr.mxu0 0.0
    %3030 = vmatpush1.msra.mxu0 0.0
    %3031 = vmatprep.subr.mxu0 0.0
    %3032 = vmatpush1.msra.mxu0 0.0
    %3033 = vmatprep.subr.mxu0 0.0
    %3034 = vmatpush1.msra.mxu0 0.0
    %3035 = vmatprep.subr.mxu0 0.0
    %3036 = vmatpush1.msra.mxu0 0.0
    %3037 = vmatprep.subr.mxu0 0.0
    %3038 = vmatpush1.msra.mxu0 0.0
    %3039 = vmatprep.subr.mxu0 0.0
    %3040 = vmatpush1.msra.mxu0 0.0
    %3041 = vmatprep.subr.mxu0 0.0
    %3042 = vmatpush1.msra.mxu0 0.0
    %3043 = vmatprep.subr.mxu0 0.0
    %3044 = vmatpush1.msra.mxu0 0.0
    %3045 = vmatprep.subr.mxu0 0.0
    %3046 = vmatpush1.msra.mxu0 0.0
    %3047 = vmatprep.subr.mxu0 0.0
    %3048 = vmatpush1.msra.mxu0 0.0
    %3049 = vmatprep.subr.mxu0 0.0
    %3050 = vmatpush1.msra.mxu0 0.0
    %3051 = vmatprep.subr.mxu0 0.0
    %3052 = vmatpush1.msra.mxu0 0.0
    %3053 = vmatprep.subr.mxu0 0.0
    %3054 = vmatpush1.msra.mxu0 0.0
    %3055 = vmatprep.subr.mxu0 0.0
    %3056 = vmatpush1.msra.mxu0 0.0
    %3057 = vmatprep.subr.mxu0 0.0
    %3058 = vmatpush1.msra.mxu0 0.0
    %3059 = vmatprep.subr.mxu0 0.0
    %3060 = vmatpush1.msra.mxu0 0.0
    %3061 = vmatprep.mubr.f32.mxu0 0.0
    %3062 = vmatmul.mubr.f32.gmra.mrb[0].mxu0 %v2995
    %v3063 = vpop.f32.mrb[0].mxu0
    %v3064 = vadd.f32 0.0, %v3063
    %v3065 = vpop.f32.mrb[0].mxu0
    %3066 = vdwg.mxu0
    %v3067 = vadd.f32 %v2993, %v3064
    %v3068 = vrot.slane %v2589, 6
    %v3069 = vsel %vm298, %v3068, 0
    %3071 = vmatprep.subr.mxu0 0.0
    %3072 = vmatpush1.msra.mxu0 %v2615
    %3073 = vmatprep.subr.mxu0 0.0
    %3074 = vmatpush1.msra.mxu0 %v2616
    %3075 = vmatprep.subr.mxu0 0.0
    %3076 = vmatpush1.msra.mxu0 %v2617
    %3077 = vmatprep.subr.mxu0 0.0
    %3078 = vmatpush1.msra.mxu0 %v2618
    %3079 = vmatprep.subr.mxu0 0.0
    %3080 = vmatpush1.msra.mxu0 0.0
    %3081 = vmatprep.subr.mxu0 0.0
    %3082 = vmatpush1.msra.mxu0 0.0
    %3083 = vmatprep.subr.mxu0 0.0
    %3084 = vmatpush1.msra.mxu0 0.0
    %3085 = vmatprep.subr.mxu0 0.0
    %3086 = vmatpush1.msra.mxu0 0.0
    %3087 = vmatprep.subr.mxu0 0.0
    %3088 = vmatpush1.msra.mxu0 0.0
    %3089 = vmatprep.subr.mxu0 0.0
    %3090 = vmatpush1.msra.mxu0 0.0
    %3091 = vmatprep.subr.mxu0 0.0
    %3092 = vmatpush1.msra.mxu0 0.0
    %3093 = vmatprep.subr.mxu0 0.0
    %3094 = vmatpush1.msra.mxu0 0.0
    %3095 = vmatprep.subr.mxu0 0.0
    %3096 = vmatpush1.msra.mxu0 0.0
    %3097 = vmatprep.subr.mxu0 0.0
    %3098 = vmatpush1.msra.mxu0 0.0
    %3099 = vmatprep.subr.mxu0 0.0
    %3100 = vmatpush1.msra.mxu0 0.0
    %3101 = vmatprep.subr.mxu0 0.0
    %3102 = vmatpush1.msra.mxu0 0.0
    %3103 = vmatprep.subr.mxu0 0.0
    %3104 = vmatpush1.msra.mxu0 0.0
    %3105 = vmatprep.subr.mxu0 0.0
    %3106 = vmatpush1.msra.mxu0 0.0
    %3107 = vmatprep.subr.mxu0 0.0
    %3108 = vmatpush1.msra.mxu0 0.0
    %3109 = vmatprep.subr.mxu0 0.0
    %3110 = vmatpush1.msra.mxu0 0.0
    %3111 = vmatprep.subr.mxu0 0.0
    %3112 = vmatpush1.msra.mxu0 0.0
    %3113 = vmatprep.subr.mxu0 0.0
    %3114 = vmatpush1.msra.mxu0 0.0
    %3115 = vmatprep.subr.mxu0 0.0
    %3116 = vmatpush1.msra.mxu0 0.0
    %3117 = vmatprep.subr.mxu0 0.0
    %3118 = vmatpush1.msra.mxu0 0.0
    %3119 = vmatprep.subr.mxu0 0.0
    %3120 = vmatpush1.msra.mxu0 0.0
    %3121 = vmatprep.subr.mxu0 0.0
    %3122 = vmatpush1.msra.mxu0 0.0
    %3123 = vmatprep.subr.mxu0 0.0
    %3124 = vmatpush1.msra.mxu0 0.0
    %3125 = vmatprep.subr.mxu0 0.0
    %3126 = vmatpush1.msra.mxu0 0.0
    %3127 = vmatprep.subr.mxu0 0.0
    %3128 = vmatpush1.msra.mxu0 0.0
    %3129 = vmatprep.subr.mxu0 0.0
    %3130 = vmatpush1.msra.mxu0 0.0
    %3131 = vmatprep.subr.mxu0 0.0
    %3132 = vmatpush1.msra.mxu0 0.0
    %3133 = vmatprep.subr.mxu0 0.0
    %3134 = vmatpush1.msra.mxu0 0.0
    %3135 = vmatprep.mubr.f32.mxu0 0.0
    %3136 = vmatmul.mubr.f32.gmra.mrb[0].mxu0 %v3069
    %v3137 = vpop.f32.mrb[0].mxu0
    %v3138 = vadd.f32 0.0, %v3137
    %v3139 = vpop.f32.mrb[0].mxu0
    %3140 = vdwg.mxu0
    %v3141 = vadd.f32 %v3067, %v3138
    %v3142 = vrot.slane %v2589, 7
    %v3143 = vsel %vm298, %v3142, 0
    %3145 = vmatprep.subr.mxu0 0.0
    %3146 = vmatpush1.msra.mxu0 %v2619
    %3147 = vmatprep.subr.mxu0 0.0
    %3148 = vmatpush1.msra.mxu0 %v2620
    %3149 = vmatprep.subr.mxu0 0.0
    %3150 = vmatpush1.msra.mxu0 %v2621
    %3151 = vmatprep.subr.mxu0 0.0
    %3152 = vmatpush1.msra.mxu0 %v2622
    %3153 = vmatprep.subr.mxu0 0.0
    %3154 = vmatpush1.msra.mxu0 0.0
    %3155 = vmatprep.subr.mxu0 0.0
    %3156 = vmatpush1.msra.mxu0 0.0
    %3157 = vmatprep.subr.mxu0 0.0
    %3158 = vmatpush1.msra.mxu0 0.0
    %3159 = vmatprep.subr.mxu0 0.0
    %3160 = vmatpush1.msra.mxu0 0.0
    %3161 = vmatprep.subr.mxu0 0.0
    %3162 = vmatpush1.msra.mxu0 0.0
    %3163 = vmatprep.subr.mxu0 0.0
    %3164 = vmatpush1.msra.mxu0 0.0
    %3165 = vmatprep.subr.mxu0 0.0
    %3166 = vmatpush1.msra.mxu0 0.0
    %3167 = vmatprep.subr.mxu0 0.0
    %3168 = vmatpush1.msra.mxu0 0.0
    %3169 = vmatprep.subr.mxu0 0.0
    %3170 = vmatpush1.msra.mxu0 0.0
    %3171 = vmatprep.subr.mxu0 0.0
    %3172 = vmatpush1.msra.mxu0 0.0
    %3173 = vmatprep.subr.mxu0 0.0
    %3174 = vmatpush1.msra.mxu0 0.0
    %3175 = vmatprep.subr.mxu0 0.0
    %3176 = vmatpush1.msra.mxu0 0.0
    %3177 = vmatprep.subr.mxu0 0.0
    %3178 = vmatpush1.msra.mxu0 0.0
    %3179 = vmatprep.subr.mxu0 0.0
    %3180 = vmatpush1.msra.mxu0 0.0
    %3181 = vmatprep.subr.mxu0 0.0
    %3182 = vmatpush1.msra.mxu0 0.0
    %3183 = vmatprep.subr.mxu0 0.0
    %3184 = vmatpush1.msra.mxu0 0.0
    %3185 = vmatprep.subr.mxu0 0.0
    %3186 = vmatpush1.msra.mxu0 0.0
    %3187 = vmatprep.subr.mxu0 0.0
    %3188 = vmatpush1.msra.mxu0 0.0
    %3189 = vmatprep.subr.mxu0 0.0
    %3190 = vmatpush1.msra.mxu0 0.0
    %3191 = vmatprep.subr.mxu0 0.0
    %3192 = vmatpush1.msra.mxu0 0.0
    %3193 = vmatprep.subr.mxu0 0.0
    %3194 = vmatpush1.msra.mxu0 0.0
    %3195 = vmatprep.subr.mxu0 0.0
    %3196 = vmatpush1.msra.mxu0 0.0
    %3197 = vmatprep.subr.mxu0 0.0
    %3198 = vmatpush1.msra.mxu0 0.0
    %3199 = vmatprep.subr.mxu0 0.0
    %3200 = vmatpush1.msra.mxu0 0.0
    %3201 = vmatprep.subr.mxu0 0.0
    %3202 = vmatpush1.msra.mxu0 0.0
    %3203 = vmatprep.subr.mxu0 0.0
    %3204 = vmatpush1.msra.mxu0 0.0
    %3205 = vmatprep.subr.mxu0 0.0
    %3206 = vmatpush1.msra.mxu0 0.0
    %3207 = vmatprep.subr.mxu0 0.0
    %3208 = vmatpush1.msra.mxu0 0.0
    %3209 = vmatprep.mubr.f32.mxu0 0.0
    %3210 = vmatmul.mubr.f32.gmra.mrb[0].mxu0 %v3143
    %v3211 = vpop.f32.mrb[0].mxu0
    %v3212 = vadd.f32 0.0, %v3211
    %v3213 = vpop.f32.mrb[0].mxu0
    %3214 = vdwg.mxu0
    %v3215 = vadd.f32 %v3141, %v3212
    %v3217 = vsel %vm298, %v2590, 0
    %3219 = vmatprep.subr.mxu0 0.0
    %3220 = vmatpush1.msra.mxu0 %v2591
    %3221 = vmatprep.subr.mxu0 0.0
    %3222 = vmatpush1.msra.mxu0 %v2592
    %3223 = vmatprep.subr.mxu0 0.0
    %3224 = vmatpush1.msra.mxu0 %v2593
    %3225 = vmatprep.subr.mxu0 0.0
    %3226 = vmatpush1.msra.mxu0 %v2594
    %3227 = vmatprep.subr.mxu0 0.0
    %3228 = vmatpush1.msra.mxu0 0.0
    %3229 = vmatprep.subr.mxu0 0.0
    %3230 = vmatpush1.msra.mxu0 0.0
    %3231 = vmatprep.subr.mxu0 0.0
    %3232 = vmatpush1.msra.mxu0 0.0
    %3233 = vmatprep.subr.mxu0 0.0
    %3234 = vmatpush1.msra.mxu0 0.0
    %3235 = vmatprep.subr.mxu0 0.0
    %3236 = vmatpush1.msra.mxu0 0.0
    %3237 = vmatprep.subr.mxu0 0.0
    %3238 = vmatpush1.msra.mxu0 0.0
    %3239 = vmatprep.subr.mxu0 0.0
    %3240 = vmatpush1.msra.mxu0 0.0
    %3241 = vmatprep.subr.mxu0 0.0
    %3242 = vmatpush1.msra.mxu0 0.0
    %3243 = vmatprep.subr.mxu0 0.0
    %3244 = vmatpush1.msra.mxu0 0.0
    %3245 = vmatprep.subr.mxu0 0.0
    %3246 = vmatpush1.msra.mxu0 0.0
    %3247 = vmatprep.subr.mxu0 0.0
    %3248 = vmatpush1.msra.mxu0 0.0
    %3249 = vmatprep.subr.mxu0 0.0
    %3250 = vmatpush1.msra.mxu0 0.0
    %3251 = vmatprep.subr.mxu0 0.0
    %3252 = vmatpush1.msra.mxu0 0.0
    %3253 = vmatprep.subr.mxu0 0.0
    %3254 = vmatpush1.msra.mxu0 0.0
    %3255 = vmatprep.subr.mxu0 0.0
    %3256 = vmatpush1.msra.mxu0 0.0
    %3257 = vmatprep.subr.mxu0 0.0
    %3258 = vmatpush1.msra.mxu0 0.0
    %3259 = vmatprep.subr.mxu0 0.0
    %3260 = vmatpush1.msra.mxu0 0.0
    %3261 = vmatprep.subr.mxu0 0.0
    %3262 = vmatpush1.msra.mxu0 0.0
    %3263 = vmatprep.subr.mxu0 0.0
    %3264 = vmatpush1.msra.mxu0 0.0
    %3265 = vmatprep.subr.mxu0 0.0
    %3266 = vmatpush1.msra.mxu0 0.0
    %3267 = vmatprep.subr.mxu0 0.0
    %3268 = vmatpush1.msra.mxu0 0.0
    %3269 = vmatprep.subr.mxu0 0.0
    %3270 = vmatpush1.msra.mxu0 0.0
    %3271 = vmatprep.subr.mxu0 0.0
    %3272 = vmatpush1.msra.mxu0 0.0
    %3273 = vmatprep.subr.mxu0 0.0
    %3274 = vmatpush1.msra.mxu0 0.0
    %3275 = vmatprep.subr.mxu0 0.0
    %3276 = vmatpush1.msra.mxu0 0.0
    %3277 = vmatprep.subr.mxu0 0.0
    %3278 = vmatpush1.msra.mxu0 0.0
    %3279 = vmatprep.subr.mxu0 0.0
    %3280 = vmatpush1.msra.mxu0 0.0
    %3281 = vmatprep.subr.mxu0 0.0
    %3282 = vmatpush1.msra.mxu0 0.0
    %3283 = vmatprep.mubr.f32.mxu0 0.0
    %3284 = vmatmul.mubr.f32.gmra.mrb[0].mxu0 %v3217
    %v3285 = vpop.f32.mrb[0].mxu0
    %v3286 = vadd.f32 0.0, %v3285
    %v3287 = vpop.f32.mrb[0].mxu0
    %3288 = vdwg.mxu0
    %v3289 = vadd.f32 %v2623, %v3286
    %v3290 = vrot.slane %v2590, 1
    %v3291 = vsel %vm298, %v3290, 0
    %3293 = vmatprep.subr.mxu0 0.0
    %3294 = vmatpush1.msra.mxu0 %v2595
    %3295 = vmatprep.subr.mxu0 0.0
    %3296 = vmatpush1.msra.mxu0 %v2596
    %3297 = vmatprep.subr.mxu0 0.0
    %3298 = vmatpush1.msra.mxu0 %v2597
    %3299 = vmatprep.subr.mxu0 0.0
    %3300 = vmatpush1.msra.mxu0 %v2598
    %3301 = vmatprep.subr.mxu0 0.0
    %3302 = vmatpush1.msra.mxu0 0.0
    %3303 = vmatprep.subr.mxu0 0.0
    %3304 = vmatpush1.msra.mxu0 0.0
    %3305 = vmatprep.subr.mxu0 0.0
    %3306 = vmatpush1.msra.mxu0 0.0
    %3307 = vmatprep.subr.mxu0 0.0
    %3308 = vmatpush1.msra.mxu0 0.0
    %3309 = vmatprep.subr.mxu0 0.0
    %3310 = vmatpush1.msra.mxu0 0.0
    %3311 = vmatprep.subr.mxu0 0.0
    %3312 = vmatpush1.msra.mxu0 0.0
    %3313 = vmatprep.subr.mxu0 0.0
    %3314 = vmatpush1.msra.mxu0 0.0
    %3315 = vmatprep.subr.mxu0 0.0
    %3316 = vmatpush1.msra.mxu0 0.0
    %3317 = vmatprep.subr.mxu0 0.0
    %3318 = vmatpush1.msra.mxu0 0.0
    %3319 = vmatprep.subr.mxu0 0.0
    %3320 = vmatpush1.msra.mxu0 0.0
    %3321 = vmatprep.subr.mxu0 0.0
    %3322 = vmatpush1.msra.mxu0 0.0
    %3323 = vmatprep.subr.mxu0 0.0
    %3324 = vmatpush1.msra.mxu0 0.0
    %3325 = vmatprep.subr.mxu0 0.0
    %3326 = vmatpush1.msra.mxu0 0.0
    %3327 = vmatprep.subr.mxu0 0.0
    %3328 = vmatpush1.msra.mxu0 0.0
    %3329 = vmatprep.subr.mxu0 0.0
    %3330 = vmatpush1.msra.mxu0 0.0
    %3331 = vmatprep.subr.mxu0 0.0
    %3332 = vmatpush1.msra.mxu0 0.0
    %3333 = vmatprep.subr.mxu0 0.0
    %3334 = vmatpush1.msra.mxu0 0.0
    %3335 = vmatprep.subr.mxu0 0.0
    %3336 = vmatpush1.msra.mxu0 0.0
    %3337 = vmatprep.subr.mxu0 0.0
    %3338 = vmatpush1.msra.mxu0 0.0
    %3339 = vmatprep.subr.mxu0 0.0
    %3340 = vmatpush1.msra.mxu0 0.0
    %3341 = vmatprep.subr.mxu0 0.0
    %3342 = vmatpush1.msra.mxu0 0.0
    %3343 = vmatprep.subr.mxu0 0.0
    %3344 = vmatpush1.msra.mxu0 0.0
    %3345 = vmatprep.subr.mxu0 0.0
    %3346 = vmatpush1.msra.mxu0 0.0
    %3347 = vmatprep.subr.mxu0 0.0
    %3348 = vmatpush1.msra.mxu0 0.0
    %3349 = vmatprep.subr.mxu0 0.0
    %3350 = vmatpush1.msra.mxu0 0.0
    %3351 = vmatprep.subr.mxu0 0.0
    %3352 = vmatpush1.msra.mxu0 0.0
    %3353 = vmatprep.subr.mxu0 0.0
    %3354 = vmatpush1.msra.mxu0 0.0
    %3355 = vmatprep.subr.mxu0 0.0
    %3356 = vmatpush1.msra.mxu0 0.0
    %3357 = vmatprep.mubr.f32.mxu0 0.0
    %3358 = vmatmul.mubr.f32.gmra.mrb[0].mxu0 %v3291
    %v3359 = vpop.f32.mrb[0].mxu0
    %v3360 = vadd.f32 0.0, %v3359
    %v3361 = vpop.f32.mrb[0].mxu0
    %3362 = vdwg.mxu0
    %v3363 = vadd.f32 %v3289, %v3360
    %v3364 = vrot.slane %v2590, 2
    %v3365 = vsel %vm298, %v3364, 0
    %3367 = vmatprep.subr.mxu0 0.0
    %3368 = vmatpush1.msra.mxu0 %v2599
    %3369 = vmatprep.subr.mxu0 0.0
    %3370 = vmatpush1.msra.mxu0 %v2600
    %3371 = vmatprep.subr.mxu0 0.0
    %3372 = vmatpush1.msra.mxu0 %v2601
    %3373 = vmatprep.subr.mxu0 0.0
    %3374 = vmatpush1.msra.mxu0 %v2602
    %3375 = vmatprep.subr.mxu0 0.0
    %3376 = vmatpush1.msra.mxu0 0.0
    %3377 = vmatprep.subr.mxu0 0.0
    %3378 = vmatpush1.msra.mxu0 0.0
    %3379 = vmatprep.subr.mxu0 0.0
    %3380 = vmatpush1.msra.mxu0 0.0
    %3381 = vmatprep.subr.mxu0 0.0
    %3382 = vmatpush1.msra.mxu0 0.0
    %3383 = vmatprep.subr.mxu0 0.0
    %3384 = vmatpush1.msra.mxu0 0.0
    %3385 = vmatprep.subr.mxu0 0.0
    %3386 = vmatpush1.msra.mxu0 0.0
    %3387 = vmatprep.subr.mxu0 0.0
    %3388 = vmatpush1.msra.mxu0 0.0
    %3389 = vmatprep.subr.mxu0 0.0
    %3390 = vmatpush1.msra.mxu0 0.0
    %3391 = vmatprep.subr.mxu0 0.0
    %3392 = vmatpush1.msra.mxu0 0.0
    %3393 = vmatprep.subr.mxu0 0.0
    %3394 = vmatpush1.msra.mxu0 0.0
    %3395 = vmatprep.subr.mxu0 0.0
    %3396 = vmatpush1.msra.mxu0 0.0
    %3397 = vmatprep.subr.mxu0 0.0
    %3398 = vmatpush1.msra.mxu0 0.0
    %3399 = vmatprep.subr.mxu0 0.0
    %3400 = vmatpush1.msra.mxu0 0.0
    %3401 = vmatprep.subr.mxu0 0.0
    %3402 = vmatpush1.msra.mxu0 0.0
    %3403 = vmatprep.subr.mxu0 0.0
    %3404 = vmatpush1.msra.mxu0 0.0
    %3405 = vmatprep.subr.mxu0 0.0
    %3406 = vmatpush1.msra.mxu0 0.0
    %3407 = vmatprep.subr.mxu0 0.0
    %3408 = vmatpush1.msra.mxu0 0.0
    %3409 = vmatprep.subr.mxu0 0.0
    %3410 = vmatpush1.msra.mxu0 0.0
    %3411 = vmatprep.subr.mxu0 0.0
    %3412 = vmatpush1.msra.mxu0 0.0
    %3413 = vmatprep.subr.mxu0 0.0
    %3414 = vmatpush1.msra.mxu0 0.0
    %3415 = vmatprep.subr.mxu0 0.0
    %3416 = vmatpush1.msra.mxu0 0.0
    %3417 = vmatprep.subr.mxu0 0.0
    %3418 = vmatpush1.msra.mxu0 0.0
    %3419 = vmatprep.subr.mxu0 0.0
    %3420 = vmatpush1.msra.mxu0 0.0
    %3421 = vmatprep.subr.mxu0 0.0
    %3422 = vmatpush1.msra.mxu0 0.0
    %3423 = vmatprep.subr.mxu0 0.0
    %3424 = vmatpush1.msra.mxu0 0.0
    %3425 = vmatprep.subr.mxu0 0.0
    %3426 = vmatpush1.msra.mxu0 0.0
    %3427 = vmatprep.subr.mxu0 0.0
    %3428 = vmatpush1.msra.mxu0 0.0
    %3429 = vmatprep.subr.mxu0 0.0
    %3430 = vmatpush1.msra.mxu0 0.0
    %3431 = vmatprep.mubr.f32.mxu0 0.0
    %3432 = vmatmul.mubr.f32.gmra.mrb[0].mxu0 %v3365
    %v3433 = vpop.f32.mrb[0].mxu0
    %v3434 = vadd.f32 0.0, %v3433
    %v3435 = vpop.f32.mrb[0].mxu0
    %3436 = vdwg.mxu0
    %v3437 = vadd.f32 %v3363, %v3434
    %v3438 = vrot.slane %v2590, 3
    %v3439 = vsel %vm298, %v3438, 0
    %3441 = vmatprep.subr.mxu0 0.0
    %3442 = vmatpush1.msra.mxu0 %v2603
    %3443 = vmatprep.subr.mxu0 0.0
    %3444 = vmatpush1.msra.mxu0 %v2604
    %3445 = vmatprep.subr.mxu0 0.0
    %3446 = vmatpush1.msra.mxu0 %v2605
    %3447 = vmatprep.subr.mxu0 0.0
    %3448 = vmatpush1.msra.mxu0 %v2606
    %3449 = vmatprep.subr.mxu0 0.0
    %3450 = vmatpush1.msra.mxu0 0.0
    %3451 = vmatprep.subr.mxu0 0.0
    %3452 = vmatpush1.msra.mxu0 0.0
    %3453 = vmatprep.subr.mxu0 0.0
    %3454 = vmatpush1.msra.mxu0 0.0
    %3455 = vmatprep.subr.mxu0 0.0
    %3456 = vmatpush1.msra.mxu0 0.0
    %3457 = vmatprep.subr.mxu0 0.0
    %3458 = vmatpush1.msra.mxu0 0.0
    %3459 = vmatprep.subr.mxu0 0.0
    %3460 = vmatpush1.msra.mxu0 0.0
    %3461 = vmatprep.subr.mxu0 0.0
    %3462 = vmatpush1.msra.mxu0 0.0
    %3463 = vmatprep.subr.mxu0 0.0
    %3464 = vmatpush1.msra.mxu0 0.0
    %3465 = vmatprep.subr.mxu0 0.0
    %3466 = vmatpush1.msra.mxu0 0.0
    %3467 = vmatprep.subr.mxu0 0.0
    %3468 = vmatpush1.msra.mxu0 0.0
    %3469 = vmatprep.subr.mxu0 0.0
    %3470 = vmatpush1.msra.mxu0 0.0
    %3471 = vmatprep.subr.mxu0 0.0
    %3472 = vmatpush1.msra.mxu0 0.0
    %3473 = vmatprep.subr.mxu0 0.0
    %3474 = vmatpush1.msra.mxu0 0.0
    %3475 = vmatprep.subr.mxu0 0.0
    %3476 = vmatpush1.msra.mxu0 0.0
    %3477 = vmatprep.subr.mxu0 0.0
    %3478 = vmatpush1.msra.mxu0 0.0
    %3479 = vmatprep.subr.mxu0 0.0
    %3480 = vmatpush1.msra.mxu0 0.0
    %3481 = vmatprep.subr.mxu0 0.0
    %3482 = vmatpush1.msra.mxu0 0.0
    %3483 = vmatprep.subr.mxu0 0.0
    %3484 = vmatpush1.msra.mxu0 0.0
    %3485 = vmatprep.subr.mxu0 0.0
    %3486 = vmatpush1.msra.mxu0 0.0
    %3487 = vmatprep.subr.mxu0 0.0
    %3488 = vmatpush1.msra.mxu0 0.0
    %3489 = vmatprep.subr.mxu0 0.0
    %3490 = vmatpush1.msra.mxu0 0.0
    %3491 = vmatprep.subr.mxu0 0.0
    %3492 = vmatpush1.msra.mxu0 0.0
    %3493 = vmatprep.subr.mxu0 0.0
    %3494 = vmatpush1.msra.mxu0 0.0
    %3495 = vmatprep.subr.mxu0 0.0
    %3496 = vmatpush1.msra.mxu0 0.0
    %3497 = vmatprep.subr.mxu0 0.0
    %3498 = vmatpush1.msra.mxu0 0.0
    %3499 = vmatprep.subr.mxu0 0.0
    %3500 = vmatpush1.msra.mxu0 0.0
    %3501 = vmatprep.subr.mxu0 0.0
    %3502 = vmatpush1.msra.mxu0 0.0
    %3503 = vmatprep.subr.mxu0 0.0
    %3504 = vmatpush1.msra.mxu0 0.0
    %3505 = vmatprep.mubr.f32.mxu0 0.0
    %3506 = vmatmul.mubr.f32.gmra.mrb[0].mxu0 %v3439
    %v3507 = vpop.f32.mrb[0].mxu0
    %v3508 = vadd.f32 0.0, %v3507
    %v3509 = vpop.f32.mrb[0].mxu0
    %3510 = vdwg.mxu0
    %v3511 = vadd.f32 %v3437, %v3508
    %v3512 = vrot.slane %v2590, 4
    %v3513 = vsel %vm298, %v3512, 0
    %3515 = vmatprep.subr.mxu0 0.0
    %3516 = vmatpush1.msra.mxu0 %v2607
    %3517 = vmatprep.subr.mxu0 0.0
    %3518 = vmatpush1.msra.mxu0 %v2608
    %3519 = vmatprep.subr.mxu0 0.0
    %3520 = vmatpush1.msra.mxu0 %v2609
    %3521 = vmatprep.subr.mxu0 0.0
    %3522 = vmatpush1.msra.mxu0 %v2610
    %3523 = vmatprep.subr.mxu0 0.0
    %3524 = vmatpush1.msra.mxu0 0.0
    %3525 = vmatprep.subr.mxu0 0.0
    %3526 = vmatpush1.msra.mxu0 0.0
    %3527 = vmatprep.subr.mxu0 0.0
    %3528 = vmatpush1.msra.mxu0 0.0
    %3529 = vmatprep.subr.mxu0 0.0
    %3530 = vmatpush1.msra.mxu0 0.0
    %3531 = vmatprep.subr.mxu0 0.0
    %3532 = vmatpush1.msra.mxu0 0.0
    %3533 = vmatprep.subr.mxu0 0.0
    %3534 = vmatpush1.msra.mxu0 0.0
    %3535 = vmatprep.subr.mxu0 0.0
    %3536 = vmatpush1.msra.mxu0 0.0
    %3537 = vmatprep.subr.mxu0 0.0
    %3538 = vmatpush1.msra.mxu0 0.0
    %3539 = vmatprep.subr.mxu0 0.0
    %3540 = vmatpush1.msra.mxu0 0.0
    %3541 = vmatprep.subr.mxu0 0.0
    %3542 = vmatpush1.msra.mxu0 0.0
    %3543 = vmatprep.subr.mxu0 0.0
    %3544 = vmatpush1.msra.mxu0 0.0
    %3545 = vmatprep.subr.mxu0 0.0
    %3546 = vmatpush1.msra.mxu0 0.0
    %3547 = vmatprep.subr.mxu0 0.0
    %3548 = vmatpush1.msra.mxu0 0.0
    %3549 = vmatprep.subr.mxu0 0.0
    %3550 = vmatpush1.msra.mxu0 0.0
    %3551 = vmatprep.subr.mxu0 0.0
    %3552 = vmatpush1.msra.mxu0 0.0
    %3553 = vmatprep.subr.mxu0 0.0
    %3554 = vmatpush1.msra.mxu0 0.0
    %3555 = vmatprep.subr.mxu0 0.0
    %3556 = vmatpush1.msra.mxu0 0.0
    %3557 = vmatprep.subr.mxu0 0.0
    %3558 = vmatpush1.msra.mxu0 0.0
    %3559 = vmatprep.subr.mxu0 0.0
    %3560 = vmatpush1.msra.mxu0 0.0
    %3561 = vmatprep.subr.mxu0 0.0
    %3562 = vmatpush1.msra.mxu0 0.0
    %3563 = vmatprep.subr.mxu0 0.0
    %3564 = vmatpush1.msra.mxu0 0.0
    %3565 = vmatprep.subr.mxu0 0.0
    %3566 = vmatpush1.msra.mxu0 0.0
    %3567 = vmatprep.subr.mxu0 0.0
    %3568 = vmatpush1.msra.mxu0 0.0
    %3569 = vmatprep.subr.mxu0 0.0
    %3570 = vmatpush1.msra.mxu0 0.0
    %3571 = vmatprep.subr.mxu0 0.0
    %3572 = vmatpush1.msra.mxu0 0.0
    %3573 = vmatprep.subr.mxu0 0.0
    %3574 = vmatpush1.msra.mxu0 0.0
    %3575 = vmatprep.subr.mxu0 0.0
    %3576 = vmatpush1.msra.mxu0 0.0
    %3577 = vmatprep.subr.mxu0 0.0
    %3578 = vmatpush1.msra.mxu0 0.0
    %3579 = vmatprep.mubr.f32.mxu0 0.0
    %3580 = vmatmul.mubr.f32.gmra.mrb[0].mxu0 %v3513
    %v3581 = vpop.f32.mrb[0].mxu0
    %v3582 = vadd.f32 0.0, %v3581
    %v3583 = vpop.f32.mrb[0].mxu0
    %3584 = vdwg.mxu0
    %v3585 = vadd.f32 %v3511, %v3582
    %v3586 = vrot.slane %v2590, 5
    %v3587 = vsel %vm298, %v3586, 0
    %3589 = vmatprep.subr.mxu0 0.0
    %3590 = vmatpush1.msra.mxu0 %v2611
    %3591 = vmatprep.subr.mxu0 0.0
    %3592 = vmatpush1.msra.mxu0 %v2612
    %3593 = vmatprep.subr.mxu0 0.0
    %3594 = vmatpush1.msra.mxu0 %v2613
    %3595 = vmatprep.subr.mxu0 0.0
    %3596 = vmatpush1.msra.mxu0 %v2614
    %3597 = vmatprep.subr.mxu0 0.0
    %3598 = vmatpush1.msra.mxu0 0.0
    %3599 = vmatprep.subr.mxu0 0.0
    %3600 = vmatpush1.msra.mxu0 0.0
    %3601 = vmatprep.subr.mxu0 0.0
    %3602 = vmatpush1.msra.mxu0 0.0
    %3603 = vmatprep.subr.mxu0 0.0
    %3604 = vmatpush1.msra.mxu0 0.0
    %3605 = vmatprep.subr.mxu0 0.0
    %3606 = vmatpush1.msra.mxu0 0.0
    %3607 = vmatprep.subr.mxu0 0.0
    %3608 = vmatpush1.msra.mxu0 0.0
    %3609 = vmatprep.subr.mxu0 0.0
    %3610 = vmatpush1.msra.mxu0 0.0
    %3611 = vmatprep.subr.mxu0 0.0
    %3612 = vmatpush1.msra.mxu0 0.0
    %3613 = vmatprep.subr.mxu0 0.0
    %3614 = vmatpush1.msra.mxu0 0.0
    %3615 = vmatprep.subr.mxu0 0.0
    %3616 = vmatpush1.msra.mxu0 0.0
    %3617 = vmatprep.subr.mxu0 0.0
    %3618 = vmatpush1.msra.mxu0 0.0
    %3619 = vmatprep.subr.mxu0 0.0
    %3620 = vmatpush1.msra.mxu0 0.0
    %3621 = vmatprep.subr.mxu0 0.0
    %3622 = vmatpush1.msra.mxu0 0.0
    %3623 = vmatprep.subr.mxu0 0.0
    %3624 = vmatpush1.msra.mxu0 0.0
    %3625 = vmatprep.subr.mxu0 0.0
    %3626 = vmatpush1.msra.mxu0 0.0
    %3627 = vmatprep.subr.mxu0 0.0
    %3628 = vmatpush1.msra.mxu0 0.0
    %3629 = vmatprep.subr.mxu0 0.0
    %3630 = vmatpush1.msra.mxu0 0.0
    %3631 = vmatprep.subr.mxu0 0.0
    %3632 = vmatpush1.msra.mxu0 0.0
    %3633 = vmatprep.subr.mxu0 0.0
    %3634 = vmatpush1.msra.mxu0 0.0
    %3635 = vmatprep.subr.mxu0 0.0
    %3636 = vmatpush1.msra.mxu0 0.0
    %3637 = vmatprep.subr.mxu0 0.0
    %3638 = vmatpush1.msra.mxu0 0.0
    %3639 = vmatprep.subr.mxu0 0.0
    %3640 = vmatpush1.msra.mxu0 0.0
    %3641 = vmatprep.subr.mxu0 0.0
    %3642 = vmatpush1.msra.mxu0 0.0
    %3643 = vmatprep.subr.mxu0 0.0
    %3644 = vmatpush1.msra.mxu0 0.0
    %3645 = vmatprep.subr.mxu0 0.0
    %3646 = vmatpush1.msra.mxu0 0.0
    %3647 = vmatprep.subr.mxu0 0.0
    %3648 = vmatpush1.msra.mxu0 0.0
    %3649 = vmatprep.subr.mxu0 0.0
    %3650 = vmatpush1.msra.mxu0 0.0
    %3651 = vmatprep.subr.mxu0 0.0
    %3652 = vmatpush1.msra.mxu0 0.0
    %3653 = vmatprep.mubr.f32.mxu0 0.0
    %3654 = vmatmul.mubr.f32.gmra.mrb[0].mxu0 %v3587
    %v3655 = vpop.f32.mrb[0].mxu0
    %v3656 = vadd.f32 0.0, %v3655
    %v3657 = vpop.f32.mrb[0].mxu0
    %3658 = vdwg.mxu0
    %v3659 = vadd.f32 %v3585, %v3656
    %v3660 = vrot.slane %v2590, 6
    %v3661 = vsel %vm298, %v3660, 0
    %3663 = vmatprep.subr.mxu0 0.0
    %3664 = vmatpush1.msra.mxu0 %v2615
    %3665 = vmatprep.subr.mxu0 0.0
    %3666 = vmatpush1.msra.mxu0 %v2616
    %3667 = vmatprep.subr.mxu0 0.0
    %3668 = vmatpush1.msra.mxu0 %v2617
    %3669 = vmatprep.subr.mxu0 0.0
    %3670 = vmatpush1.msra.mxu0 %v2618
    %3671 = vmatprep.subr.mxu0 0.0
    %3672 = vmatpush1.msra.mxu0 0.0
    %3673 = vmatprep.subr.mxu0 0.0
    %3674 = vmatpush1.msra.mxu0 0.0
    %3675 = vmatprep.subr.mxu0 0.0
    %3676 = vmatpush1.msra.mxu0 0.0
    %3677 = vmatprep.subr.mxu0 0.0
    %3678 = vmatpush1.msra.mxu0 0.0
    %3679 = vmatprep.subr.mxu0 0.0
    %3680 = vmatpush1.msra.mxu0 0.0
    %3681 = vmatprep.subr.mxu0 0.0
    %3682 = vmatpush1.msra.mxu0 0.0
    %3683 = vmatprep.subr.mxu0 0.0
    %3684 = vmatpush1.msra.mxu0 0.0
    %3685 = vmatprep.subr.mxu0 0.0
    %3686 = vmatpush1.msra.mxu0 0.0
    %3687 = vmatprep.subr.mxu0 0.0
    %3688 = vmatpush1.msra.mxu0 0.0
    %3689 = vmatprep.subr.mxu0 0.0
    %3690 = vmatpush1.msra.mxu0 0.0
    %3691 = vmatprep.subr.mxu0 0.0
    %3692 = vmatpush1.msra.mxu0 0.0
    %3693 = vmatprep.subr.mxu0 0.0
    %3694 = vmatpush1.msra.mxu0 0.0
    %3695 = vmatprep.subr.mxu0 0.0
    %3696 = vmatpush1.msra.mxu0 0.0
    %3697 = vmatprep.subr.mxu0 0.0
    %3698 = vmatpush1.msra.mxu0 0.0
    %3699 = vmatprep.subr.mxu0 0.0
    %3700 = vmatpush1.msra.mxu0 0.0
    %3701 = vmatprep.subr.mxu0 0.0
    %3702 = vmatpush1.msra.mxu0 0.0
    %3703 = vmatprep.subr.mxu0 0.0
    %3704 = vmatpush1.msra.mxu0 0.0
    %3705 = vmatprep.subr.mxu0 0.0
    %3706 = vmatpush1.msra.mxu0 0.0
    %3707 = vmatprep.subr.mxu0 0.0
    %3708 = vmatpush1.msra.mxu0 0.0
    %3709 = vmatprep.subr.mxu0 0.0
    %3710 = vmatpush1.msra.mxu0 0.0
    %3711 = vmatprep.subr.mxu0 0.0
    %3712 = vmatpush1.msra.mxu0 0.0
    %3713 = vmatprep.subr.mxu0 0.0
    %3714 = vmatpush1.msra.mxu0 0.0
    %3715 = vmatprep.subr.mxu0 0.0
    %3716 = vmatpush1.msra.mxu0 0.0
    %3717 = vmatprep.subr.mxu0 0.0
    %3718 = vmatpush1.msra.mxu0 0.0
    %3719 = vmatprep.subr.mxu0 0.0
    %3720 = vmatpush1.msra.mxu0 0.0
    %3721 = vmatprep.subr.mxu0 0.0
    %3722 = vmatpush1.msra.mxu0 0.0
    %3723 = vmatprep.subr.mxu0 0.0
    %3724 = vmatpush1.msra.mxu0 0.0
    %3725 = vmatprep.subr.mxu0 0.0
    %3726 = vmatpush1.msra.mxu0 0.0
    %3727 = vmatprep.mubr.f32.mxu0 0.0
    %3728 = vmatmul.mubr.f32.gmra.mrb[0].mxu0 %v3661
    %v3729 = vpop.f32.mrb[0].mxu0
    %v3730 = vadd.f32 0.0, %v3729
    %v3731 = vpop.f32.mrb[0].mxu0
    %3732 = vdwg.mxu0
    %v3733 = vadd.f32 %v3659, %v3730
    %v3734 = vrot.slane %v2590, 7
    %v3735 = vsel %vm298, %v3734, 0
    %3737 = vmatprep.subr.mxu0 0.0
    %3738 = vmatpush1.msra.mxu0 %v2619
    %3739 = vmatprep.subr.mxu0 0.0
    %3740 = vmatpush1.msra.mxu0 %v2620
    %3741 = vmatprep.subr.mxu0 0.0
    %3742 = vmatpush1.msra.mxu0 %v2621
    %3743 = vmatprep.subr.mxu0 0.0
    %3744 = vmatpush1.msra.mxu0 %v2622
    %3745 = vmatprep.subr.mxu0 0.0
    %3746 = vmatpush1.msra.mxu0 0.0
    %3747 = vmatprep.subr.mxu0 0.0
    %3748 = vmatpush1.msra.mxu0 0.0
    %3749 = vmatprep.subr.mxu0 0.0
    %3750 = vmatpush1.msra.mxu0 0.0
    %3751 = vmatprep.subr.mxu0 0.0
    %3752 = vmatpush1.msra.mxu0 0.0
    %3753 = vmatprep.subr.mxu0 0.0
    %3754 = vmatpush1.msra.mxu0 0.0
    %3755 = vmatprep.subr.mxu0 0.0
    %3756 = vmatpush1.msra.mxu0 0.0
    %3757 = vmatprep.subr.mxu0 0.0
    %3758 = vmatpush1.msra.mxu0 0.0
    %3759 = vmatprep.subr.mxu0 0.0
    %3760 = vmatpush1.msra.mxu0 0.0
    %3761 = vmatprep.subr.mxu0 0.0
    %3762 = vmatpush1.msra.mxu0 0.0
    %3763 = vmatprep.subr.mxu0 0.0
    %3764 = vmatpush1.msra.mxu0 0.0
    %3765 = vmatprep.subr.mxu0 0.0
    %3766 = vmatpush1.msra.mxu0 0.0
    %3767 = vmatprep.subr.mxu0 0.0
    %3768 = vmatpush1.msra.mxu0 0.0
    %3769 = vmatprep.subr.mxu0 0.0
    %3770 = vmatpush1.msra.mxu0 0.0
    %3771 = vmatprep.subr.mxu0 0.0
    %3772 = vmatpush1.msra.mxu0 0.0
    %3773 = vmatprep.subr.mxu0 0.0
    %3774 = vmatpush1.msra.mxu0 0.0
    %3775 = vmatprep.subr.mxu0 0.0
    %3776 = vmatpush1.msra.mxu0 0.0
    %3777 = vmatprep.subr.mxu0 0.0
    %3778 = vmatpush1.msra.mxu0 0.0
    %3779 = vmatprep.subr.mxu0 0.0
    %3780 = vmatpush1.msra.mxu0 0.0
    %3781 = vmatprep.subr.mxu0 0.0
    %3782 = vmatpush1.msra.mxu0 0.0
    %3783 = vmatprep.subr.mxu0 0.0
    %3784 = vmatpush1.msra.mxu0 0.0
    %3785 = vmatprep.subr.mxu0 0.0
    %3786 = vmatpush1.msra.mxu0 0.0
    %3787 = vmatprep.subr.mxu0 0.0
    %3788 = vmatpush1.msra.mxu0 0.0
    %3789 = vmatprep.subr.mxu0 0.0
    %3790 = vmatpush1.msra.mxu0 0.0
    %3791 = vmatprep.subr.mxu0 0.0
    %3792 = vmatpush1.msra.mxu0 0.0
    %3793 = vmatprep.subr.mxu0 0.0
    %3794 = vmatpush1.msra.mxu0 0.0
    %3795 = vmatprep.subr.mxu0 0.0
    %3796 = vmatpush1.msra.mxu0 0.0
    %3797 = vmatprep.subr.mxu0 0.0
    %3798 = vmatpush1.msra.mxu0 0.0
    %3799 = vmatprep.subr.mxu0 0.0
    %3800 = vmatpush1.msra.mxu0 0.0
    %3801 = vmatprep.mubr.f32.mxu0 0.0
    %3802 = vmatmul.mubr.f32.gmra.mrb[0].mxu0 %v3735
    %v3803 = vpop.f32.mrb[0].mxu0
    %v3804 = vadd.f32 0.0, %v3803
    %v3805 = vpop.f32.mrb[0].mxu0
    %3806 = vdwg.mxu0
    %v3807 = vadd.f32 %v3733, %v3804
    %v3809 = vlaneseq
    %v3810 = vshrl.u32 %v3809, 7
    %v3811 = vsub.s32 0, %v3810
    %v3812 = vrot.slane %v3807, %v3811
    %vm3814 = vcmask 1040384
    %v3815 = vsel %vm3814, %v3215, %v3812
    %vm3816 = vcmask 25600
    %3817 = vst.msk [vmem:[#allocation8] sm:$0x3] %vm3816, %v3815
    // Predicated region
    $region146: #{tpu_custom_call.1} parent=1 // pred_check
      _
    $region147: #{tpu_custom_call.1} parent=1 // pred_check_branch
      %3819 = sbr.rel (0) target = $region149
    $region148: #{tpu_custom_call.1} parent=1 // pred_region
      %s3821 = ssub.s32 32, 32
      %3822 = vsyncadd [#allocation4], %s3821
      %s3824 = sshll.u32 [#allocation8], 4
      %s3825 = int_to_ptr.vmem [resolvable:$true] %s3824
      %3827 = dma.vmem_to_hbm [thread:$0]  %s3825, 32, %s67, [#allocation4]
    $region149: #{tpu_custom_call.1} parent=1 // pred_fallthru
      _
    // Predicated region
    $region150: #{tpu_custom_call.1} parent=1 // pred_check
      _
    $region151: #{tpu_custom_call.1} parent=1 // pred_check_branch
      %3829 = sbr.rel (0) target = $region153
    $region152: #{tpu_custom_call.1} parent=1 // pred_region
      %3830 = dma.done [#allocation4], 32
    $region153: #{tpu_custom_call.1} parent=1 // pred_fallthru
      _
    %3831 = vsyncpa [#allocation3], 1
    %3832 = vsyncpa [#allocation6], 1
    %3833 = vsyncpa [#allocation4], 1

</llo_original>
